<compile_context>
chip_gen: v7x
topology: tpu7x:2x2x1
jax: 0.10.0
libtpu: 0.0.40
codegen_flags: <defaults>
</compile_context>

<pallas_src>
import functools

import jax
import jax.numpy as jnp
import numpy as np
from jax.experimental import pallas as pl
from jax.experimental.pallas import tpu as pltpu


def _lstm_kernel(x_ref, w_ih0_ref, w_ihd_ref, w_hh_ref, b_ref, w_fc_ref,
                 b_fc_ref, o_ref, seq_ref, gx_ref,
                 *, num_layers, seq_len, tb, hidden):
    """One batch-block: run the full multi-layer LSTM + fc.

    x_ref    : (1, L*tb, D_in)   time-major rows (row = t*tb + local_batch)
    w_ih0_ref: (D_in, 4H)        layer-0 input weights (transposed, gates fused)
    w_ihd_ref: (max(nl-1,1), H, 4H)  input weights for layers >= 1
    w_hh_ref : (nl, H, 4H)       recurrent weights
    b_ref    : (nl, 4H)          combined bias (b_ih + b_hh)
    w_fc_ref : (H, D_out), b_fc_ref: (1, D_out)
    o_ref    : (1, L*tb, D_out)
    seq_ref  : VMEM (L*tb, H)    hidden outputs of the current layer
    gx_ref   : VMEM (L*tb, 4H)   precomputed input projections
    """
    H = hidden

    for layer in range(num_layers):                       # static unroll (few layers)
        if layer == 0:
            inp = x_ref[0].astype(jnp.float32)            # (L*tb, D_in)
            w_in = w_ih0_ref[...].astype(jnp.float32)     # (D_in, 4H)
        else:
            inp = seq_ref[...]                            # (L*tb, H)  (f32)
            w_in = w_ihd_ref[layer - 1].astype(jnp.float32)
        bias = b_ref[layer, :].astype(jnp.float32)        # (4H,)

        # One lane-dense matmul for the whole sequence + single bias add.
        gx_ref[...] = (jnp.dot(inp, w_in, preferred_element_type=jnp.float32)
                       + bias[None, :])

        w_hh = w_hh_ref[layer].astype(jnp.float32)        # (H, 4H), hoisted

        h = jnp.zeros((tb, H), jnp.float32)
        c = jnp.zeros((tb, H), jnp.float32)
        # Time recurrence: fully unrolled static loop (L is small), so every
        # slice / store below is static.  For long sequences this should move
        # to a fori_loop or an "arbitrary" grid axis over time.
        for t in range(seq_len):
            g = (gx_ref[t * tb:(t + 1) * tb, :]
                 + jnp.dot(h, w_hh, preferred_element_type=jnp.float32))
            i_g = jax.nn.sigmoid(g[:, 0 * H:1 * H])
            f_g = jax.nn.sigmoid(g[:, 1 * H:2 * H])
            g_g = jnp.tanh(g[:, 2 * H:3 * H])
            o_g = jax.nn.sigmoid(g[:, 3 * H:4 * H])
            c = f_g * c + i_g * g_g
            h = o_g * jnp.tanh(c)
            seq_ref[t * tb:(t + 1) * tb, :] = h

    # Final Linear head over the whole output sequence (single matmul).
    out = jnp.dot(seq_ref[...], w_fc_ref[...].astype(jnp.float32),
                  preferred_element_type=jnp.float32)
    out = out + b_fc_ref[...].astype(jnp.float32)         # (1, D_out) broadcast
    o_ref[0] = out.astype(o_ref.dtype)


def lstm_forward(x, w_ih0, w_ihd, w_hh, b, w_fc, b_fc):
    """x: (B, L, input_size) batch-first. Returns (B, L, output_size)."""
    B, L, D_in = x.shape
    num_layers, H, H4 = w_hh.shape
    assert H4 == 4 * H
    D_out = w_fc.shape[1]

    # Split the batch into independent blocks -> >=2 parallel grid steps when
    # possible (keeps both v7x TensorCores busy); recurrence stays inside.
    num_blocks = 2 if (B >= 2 and B % 2 == 0) else 1
    tb = B // num_blocks

    # Time-major layout inside each block: row = t*tb + local_batch.
    xb = x.reshape(num_blocks, tb, L, D_in)
    xb = jnp.transpose(xb, (0, 2, 1, 3)).reshape(num_blocks, L * tb, D_in)

    b_fc2 = b_fc.reshape(1, D_out)

    kernel = functools.partial(_lstm_kernel, num_layers=num_layers,
                               seq_len=L, tb=tb, hidden=H)

    out = pl.pallas_call(
        kernel,
        out_shape=jax.ShapeDtypeStruct((num_blocks, L * tb, D_out), x.dtype),
        grid_spec=pltpu.PrefetchScalarGridSpec(
            num_scalar_prefetch=0,
            grid=(num_blocks,),
            in_specs=[
                pl.BlockSpec((1, L * tb, D_in), lambda nb: (nb, 0, 0)),
                pl.BlockSpec((D_in, 4 * H), lambda nb: (0, 0)),
                pl.BlockSpec(w_ihd.shape, lambda nb: (0, 0, 0)),
                pl.BlockSpec((num_layers, H, 4 * H), lambda nb: (0, 0, 0)),
                pl.BlockSpec((num_layers, 4 * H), lambda nb: (0, 0)),
                pl.BlockSpec((H, D_out), lambda nb: (0, 0)),
                pl.BlockSpec((1, D_out), lambda nb: (0, 0)),
            ],
            out_specs=pl.BlockSpec((1, L * tb, D_out), lambda nb: (nb, 0, 0)),
            scratch_shapes=[
                pltpu.VMEM((L * tb, H), jnp.float32),      # hidden sequence
                pltpu.VMEM((L * tb, 4 * H), jnp.float32),  # input projections
            ],
        ),
        compiler_params=pltpu.CompilerParams(
            dimension_semantics=("parallel",)),
    )(xb, w_ih0, w_ihd, w_hh, b, w_fc, b_fc2)

    out = out.reshape(num_blocks, L, tb, D_out)
    out = jnp.transpose(out, (0, 2, 1, 3)).reshape(B, L, D_out)
    return out


def lstm_reference(x, w_ih0, w_ihd, w_hh, b, w_fc, b_fc):
    """Plain-JAX reference with identical semantics (for verification)."""
    x = x.astype(jnp.float32)
    B, L, _ = x.shape
    num_layers, H, _ = w_hh.shape
    seq = x
    for layer in range(num_layers):
        w_in = w_ih0 if layer == 0 else w_ihd[layer - 1]
        gx = jnp.einsum('bld,dg->blg', seq, w_in) + b[layer][None, None, :]
        h = jnp.zeros((B, H), jnp.float32)
        c = jnp.zeros((B, H), jnp.float32)
        hs = []
        for t in range(L):
            g = gx[:, t, :] + h @ w_hh[layer]
            i_g = jax.nn.sigmoid(g[:, :H])
            f_g = jax.nn.sigmoid(g[:, H:2 * H])
            g_g = jnp.tanh(g[:, 2 * H:3 * H])
            o_g = jax.nn.sigmoid(g[:, 3 * H:])
            c = f_g * c + i_g * g_g
            h = o_g * jnp.tanh(c)
            hs.append(h)
        seq = jnp.stack(hs, axis=1)
    return jnp.einsum('blh,ho->blo', seq, w_fc) + b_fc[None, None, :]


if __name__ == "__main__":
    # Small shapes consistent with LSTM(num_layers, input_size, hidden, output)
    num_layers, input_size, hidden_size, output_size = 2, 16, 32, 8
    batch, seq_len = 2, 16

    key = jax.random.PRNGKey(0)
    keys = jax.random.split(key, 8)
    bound = 1.0 / np.sqrt(hidden_size)          # PyTorch LSTM init scale

    x = jax.random.normal(keys[0], (batch, seq_len, input_size),
                          dtype=jnp.float32)
    # Weights stored pre-transposed with gates fused along the last axis:
    #   torch weight_ih_l{k} (4H, D) -> (D, 4H); gate order i, f, g, o.
    w_ih0 = jax.random.uniform(keys[1], (input_size, 4 * hidden_size),
                               minval=-bound, maxval=bound, dtype=jnp.float32)
    w_ihd = jax.random.uniform(keys[2],
                               (max(num_layers - 1, 1), hidden_size, 4 * hidden_size),
                               minval=-bound, maxval=bound, dtype=jnp.float32)
    w_hh = jax.random.uniform(keys[3], (num_layers, hidden_size, 4 * hidden_size),
                              minval=-bound, maxval=bound, dtype=jnp.float32)
    b_ih = jax.random.uniform(keys[4], (num_layers, 4 * hidden_size),
                              minval=-bound, maxval=bound, dtype=jnp.float32)
    b_hh = jax.random.uniform(keys[5], (num_layers, 4 * hidden_size),
                              minval=-bound, maxval=bound, dtype=jnp.float32)
    b = b_ih + b_hh                             # combined bias (added once)

    fc_bound = 1.0 / np.sqrt(hidden_size)       # nn.Linear default init scale
    w_fc = jax.random.uniform(keys[6], (hidden_size, output_size),
                              minval=-fc_bound, maxval=fc_bound, dtype=jnp.float32)
    b_fc = jax.random.uniform(keys[7], (output_size,),
                              minval=-fc_bound, maxval=fc_bound, dtype=jnp.float32)

    out = lstm_forward(x, w_ih0, w_ihd, w_hh, b, w_fc, b_fc)
    out = jax.block_until_ready(out)

    ref = lstm_reference(x, w_ih0, w_ihd, w_hh, b, w_fc, b_fc)
    np.testing.assert_allclose(np.asarray(out), np.asarray(ref),
                               rtol=1e-4, atol=1e-4)
    print("KERNEL_OK")
</pallas_src>

<mosaic_0001>
module attributes {stable_mosaic.version = 11 : i64} {
  func.func @_lstm_kernel(%arg0: i32, %arg1: memref<1x16x16xf32, #tpu.memory_space<vmem>>, %arg2: memref<16x128xf32, #tpu.memory_space<vmem>>, %arg3: memref<1x32x128xf32, #tpu.memory_space<vmem>>, %arg4: memref<2x32x128xf32, #tpu.memory_space<vmem>>, %arg5: memref<2x128xf32, #tpu.memory_space<vmem>>, %arg6: memref<32x8xf32, #tpu.memory_space<vmem>>, %arg7: memref<1x8xf32, #tpu.memory_space<vmem>>, %arg8: memref<1x16x8xf32, #tpu.memory_space<vmem>>, %arg9: memref<16x32xf32, #tpu.memory_space<vmem>>, %arg10: memref<16x128xf32, #tpu.memory_space<vmem>>) attributes {dimension_semantics = [#tpu.dimension_semantics<parallel>], iteration_bounds = array<i64: 2>, scalar_prefetch = 0 : i64, scratch_operands = 2 : i64, tpu.core_type = #tpu.core_type<tc>, window_params = [{transform_indices = @transform_0, window_bounds = array<i64: 1, 16, 16>}, {pipeline_mode = #tpu.pipeline_mode<synchronous>, transform_indices = @transform_1, window_bounds = array<i64: 16, 128>}, {pipeline_mode = #tpu.pipeline_mode<synchronous>, transform_indices = @transform_2, window_bounds = array<i64: 1, 32, 128>}, {pipeline_mode = #tpu.pipeline_mode<synchronous>, transform_indices = @transform_3, window_bounds = array<i64: 2, 32, 128>}, {pipeline_mode = #tpu.pipeline_mode<synchronous>, transform_indices = @transform_4, window_bounds = array<i64: 2, 128>}, {pipeline_mode = #tpu.pipeline_mode<synchronous>, transform_indices = @transform_5, window_bounds = array<i64: 32, 8>}, {pipeline_mode = #tpu.pipeline_mode<synchronous>, transform_indices = @transform_6, window_bounds = array<i64: 1, 8>}, {transform_indices = @transform_7, window_bounds = array<i64: 1, 16, 8>}]} {
    %c0 = arith.constant 0 : index
    %c0_0 = arith.constant 0 : index
    %c0_1 = arith.constant 0 : index
    %0 = vector.load %arg1[%c0, %c0_0, %c0_1] : memref<1x16x16xf32, #tpu.memory_space<vmem>>, vector<1x16x16xf32>
    %1 = vector.shape_cast %0 : vector<1x16x16xf32> to vector<16x16xf32>
    %c0_2 = arith.constant 0 : index
    %c0_3 = arith.constant 0 : index
    %2 = vector.load %arg2[%c0_2, %c0_3] : memref<16x128xf32, #tpu.memory_space<vmem>>, vector<16x128xf32>
    %c0_4 = arith.constant 0 : index
    %c0_5 = arith.constant 0 : index
    %3 = vector.load %arg5[%c0_4, %c0_5] : memref<2x128xf32, #tpu.memory_space<vmem>>, vector<1x128xf32>
    %4 = vector.shape_cast %3 : vector<1x128xf32> to vector<128xf32>
    %cst = arith.constant dense<0.000000e+00> : vector<16x128xf32>
    %5 = tpu.matmul %1, %2, %cst {dimension_numbers = #tpu.dot_dimension_numbers<[1], [0], [0], [1], [0, 0, 1, 1], [], []>} : vector<16x16xf32>, vector<16x128xf32>, vector<16x128xf32> -> vector<16x128xf32>
    %6 = vector.shape_cast %4 : vector<128xf32> to vector<1x128xf32>
    %7 = vector.broadcast %6 : vector<1x128xf32> to vector<16x128xf32>
    %8 = arith.addf %5, %7 : vector<16x128xf32>
    %c0_6 = arith.constant 0 : index
    %c0_7 = arith.constant 0 : index
    %9 = vector.load %arg10[%c0_6, %c0_7] : memref<16x128xf32, #tpu.memory_space<vmem>>, vector<16x128xf32>
    tpu.vector_store %arg10[%c0_6, %c0_7], %8 {strides = array<i32>} : memref<16x128xf32, #tpu.memory_space<vmem>>, vector<16x128xf32>,
    %c0_8 = arith.constant 0 : index
    %c0_9 = arith.constant 0 : index
    %c0_10 = arith.constant 0 : index
    %10 = vector.load %arg4[%c0_8, %c0_9, %c0_10] : memref<2x32x128xf32, #tpu.memory_space<vmem>>, vector<1x32x128xf32>
    %11 = vector.shape_cast %10 : vector<1x32x128xf32> to vector<32x128xf32>
    %cst_11 = arith.constant 0.000000e+00 : f32
    %12 = vector.broadcast %cst_11 : f32 to vector<1x32xf32>
    %cst_12 = arith.constant 0.000000e+00 : f32
    %13 = vector.broadcast %cst_12 : f32 to vector<1x32xf32>
    %c0_13 = arith.constant 0 : index
    %c0_14 = arith.constant 0 : index
    %14 = vector.load %arg10[%c0_13, %c0_14] : memref<16x128xf32, #tpu.memory_space<vmem>>, vector<1x128xf32>
    %cst_15 = arith.constant dense<0.000000e+00> : vector<1x128xf32>
    %15 = tpu.matmul %12, %11, %cst_15 {dimension_numbers = #tpu.dot_dimension_numbers<[1], [0], [0], [1], [0, 0, 1, 1], [], []>} : vector<1x32xf32>, vector<32x128xf32>, vector<1x128xf32> -> vector<1x128xf32>
    %16 = arith.addf %14, %15 : vector<1x128xf32>
    %17 = vector.extract_strided_slice %16 {offsets = [0, 0], sizes = [1, 32], strides = [1, 1]} : vector<1x128xf32> to vector<1x32xf32>
    %18 = arith.negf %17 : vector<1x32xf32>
    %19 = math.exp %18 : vector<1x32xf32>
    %cst_16 = arith.constant 1.000000e+00 : f32
    %20 = vector.broadcast %cst_16 : f32 to vector<1x32xf32>
    %21 = arith.addf %20, %19 : vector<1x32xf32>
    %22 = arith.divf %20, %21 : vector<1x32xf32>
    %23 = vector.extract_strided_slice %16 {offsets = [0, 32], sizes = [1, 32], strides = [1, 1]} : vector<1x128xf32> to vector<1x32xf32>
    %24 = arith.negf %23 : vector<1x32xf32>
    %25 = math.exp %24 : vector<1x32xf32>
    %cst_17 = arith.constant 1.000000e+00 : f32
    %26 = vector.broadcast %cst_17 : f32 to vector<1x32xf32>
    %27 = arith.addf %26, %25 : vector<1x32xf32>
    %28 = arith.divf %26, %27 : vector<1x32xf32>
    %29 = vector.extract_strided_slice %16 {offsets = [0, 64], sizes = [1, 32], strides = [1, 1]} : vector<1x128xf32> to vector<1x32xf32>
    %30 = math.tanh %29 : vector<1x32xf32>
    %31 = vector.extract_strided_slice %16 {offsets = [0, 96], sizes = [1, 32], strides = [1, 1]} : vector<1x128xf32> to vector<1x32xf32>
    %32 = arith.negf %31 : vector<1x32xf32>
    %33 = math.exp %32 : vector<1x32xf32>
    %cst_18 = arith.constant 1.000000e+00 : f32
    %34 = vector.broadcast %cst_18 : f32 to vector<1x32xf32>
    %35 = arith.addf %34, %33 : vector<1x32xf32>
    %36 = arith.divf %34, %35 : vector<1x32xf32>
    %37 = arith.mulf %28, %13 : vector<1x32xf32>
    %38 = arith.mulf %22, %30 : vector<1x32xf32>
    %39 = arith.addf %37, %38 : vector<1x32xf32>
    %40 = math.tanh %39 : vector<1x32xf32>
    %41 = arith.mulf %36, %40 : vector<1x32xf32>
    %c0_19 = arith.constant 0 : index
    %c0_20 = arith.constant 0 : index
    %42 = vector.load %arg9[%c0_19, %c0_20] : memref<16x32xf32, #tpu.memory_space<vmem>>, vector<1x32xf32>
    tpu.vector_store %arg9[%c0_19, %c0_20], %41 {strides = array<i32>} : memref<16x32xf32, #tpu.memory_space<vmem>>, vector<1x32xf32>,
    %c1 = arith.constant 1 : index
    %c0_21 = arith.constant 0 : index
    %43 = vector.load %arg10[%c1, %c0_21] : memref<16x128xf32, #tpu.memory_space<vmem>>, vector<1x128xf32>
    %cst_22 = arith.constant dense<0.000000e+00> : vector<1x128xf32>
    %44 = tpu.matmul %41, %11, %cst_22 {dimension_numbers = #tpu.dot_dimension_numbers<[1], [0], [0], [1], [0, 0, 1, 1], [], []>} : vector<1x32xf32>, vector<32x128xf32>, vector<1x128xf32> -> vector<1x128xf32>
    %45 = arith.addf %43, %44 : vector<1x128xf32>
    %46 = vector.extract_strided_slice %45 {offsets = [0, 0], sizes = [1, 32], strides = [1, 1]} : vector<1x128xf32> to vector<1x32xf32>
    %47 = arith.negf %46 : vector<1x32xf32>
    %48 = math.exp %47 : vector<1x32xf32>
    %cst_23 = arith.constant 1.000000e+00 : f32
    %49 = vector.broadcast %cst_23 : f32 to vector<1x32xf32>
    %50 = arith.addf %49, %48 : vector<1x32xf32>
    %51 = arith.divf %49, %50 : vector<1x32xf32>
    %52 = vector.extract_strided_slice %45 {offsets = [0, 32], sizes = [1, 32], strides = [1, 1]} : vector<1x128xf32> to vector<1x32xf32>
    %53 = arith.negf %52 : vector<1x32xf32>
    %54 = math.exp %53 : vector<1x32xf32>
    %cst_24 = arith.constant 1.000000e+00 : f32
    %55 = vector.broadcast %cst_24 : f32 to vector<1x32xf32>
    %56 = arith.addf %55, %54 : vector<1x32xf32>
    %57 = arith.divf %55, %56 : vector<1x32xf32>
    %58 = vector.extract_strided_slice %45 {offsets = [0, 64], sizes = [1, 32], strides = [1, 1]} : vector<1x128xf32> to vector<1x32xf32>
    %59 = math.tanh %58 : vector<1x32xf32>
    %60 = vector.extract_strided_slice %45 {offsets = [0, 96], sizes = [1, 32], strides = [1, 1]} : vector<1x128xf32> to vector<1x32xf32>
    %61 = arith.negf %60 : vector<1x32xf32>
    %62 = math.exp %61 : vector<1x32xf32>
    %cst_25 = arith.constant 1.000000e+00 : f32
    %63 = vector.broadcast %cst_25 : f32 to vector<1x32xf32>
    %64 = arith.addf %63, %62 : vector<1x32xf32>
    %65 = arith.divf %63, %64 : vector<1x32xf32>
    %66 = arith.mulf %57, %39 : vector<1x32xf32>
    %67 = arith.mulf %51, %59 : vector<1x32xf32>
    %68 = arith.addf %66, %67 : vector<1x32xf32>
    %69 = math.tanh %68 : vector<1x32xf32>
    %70 = arith.mulf %65, %69 : vector<1x32xf32>
    %c1_26 = arith.constant 1 : index
    %c0_27 = arith.constant 0 : index
    %71 = vector.load %arg9[%c1_26, %c0_27] : memref<16x32xf32, #tpu.memory_space<vmem>>, vector<1x32xf32>
    tpu.vector_store %arg9[%c1_26, %c0_27], %70 {strides = array<i32>} : memref<16x32xf32, #tpu.memory_space<vmem>>, vector<1x32xf32>,
    %c2 = arith.constant 2 : index
    %c0_28 = arith.constant 0 : index
    %72 = vector.load %arg10[%c2, %c0_28] : memref<16x128xf32, #tpu.memory_space<vmem>>, vector<1x128xf32>
    %cst_29 = arith.constant dense<0.000000e+00> : vector<1x128xf32>
    %73 = tpu.matmul %70, %11, %cst_29 {dimension_numbers = #tpu.dot_dimension_numbers<[1], [0], [0], [1], [0, 0, 1, 1], [], []>} : vector<1x32xf32>, vector<32x128xf32>, vector<1x128xf32> -> vector<1x128xf32>
    %74 = arith.addf %72, %73 : vector<1x128xf32>
    %75 = vector.extract_strided_slice %74 {offsets = [0, 0], sizes = [1, 32], strides = [1, 1]} : vector<1x128xf32> to vector<1x32xf32>
    %76 = arith.negf %75 : vector<1x32xf32>
    %77 = math.exp %76 : vector<1x32xf32>
    %cst_30 = arith.constant 1.000000e+00 : f32
    %78 = vector.broadcast %cst_30 : f32 to vector<1x32xf32>
    %79 = arith.addf %78, %77 : vector<1x32xf32>
    %80 = arith.divf %78, %79 : vector<1x32xf32>
    %81 = vector.extract_strided_slice %74 {offsets = [0, 32], sizes = [1, 32], strides = [1, 1]} : vector<1x128xf32> to vector<1x32xf32>
    %82 = arith.negf %81 : vector<1x32xf32>
    %83 = math.exp %82 : vector<1x32xf32>
    %cst_31 = arith.constant 1.000000e+00 : f32
    %84 = vector.broadcast %cst_31 : f32 to vector<1x32xf32>
    %85 = arith.addf %84, %83 : vector<1x32xf32>
    %86 = arith.divf %84, %85 : vector<1x32xf32>
    %87 = vector.extract_strided_slice %74 {offsets = [0, 64], sizes = [1, 32], strides = [1, 1]} : vector<1x128xf32> to vector<1x32xf32>
    %88 = math.tanh %87 : vector<1x32xf32>
    %89 = vector.extract_strided_slice %74 {offsets = [0, 96], sizes = [1, 32], strides = [1, 1]} : vector<1x128xf32> to vector<1x32xf32>
    %90 = arith.negf %89 : vector<1x32xf32>
    %91 = math.exp %90 : vector<1x32xf32>
    %cst_32 = arith.constant 1.000000e+00 : f32
    %92 = vector.broadcast %cst_32 : f32 to vector<1x32xf32>
    %93 = arith.addf %92, %91 : vector<1x32xf32>
    %94 = arith.divf %92, %93 : vector<1x32xf32>
    %95 = arith.mulf %86, %68 : vector<1x32xf32>
    %96 = arith.mulf %80, %88 : vector<1x32xf32>
    %97 = arith.addf %95, %96 : vector<1x32xf32>
    %98 = math.tanh %97 : vector<1x32xf32>
    %99 = arith.mulf %94, %98 : vector<1x32xf32>
    %c2_33 = arith.constant 2 : index
    %c0_34 = arith.constant 0 : index
    %100 = vector.load %arg9[%c2_33, %c0_34] : memref<16x32xf32, #tpu.memory_space<vmem>>, vector<1x32xf32>
    tpu.vector_store %arg9[%c2_33, %c0_34], %99 {strides = array<i32>} : memref<16x32xf32, #tpu.memory_space<vmem>>, vector<1x32xf32>,
    %c3 = arith.constant 3 : index
    %c0_35 = arith.constant 0 : index
    %101 = vector.load %arg10[%c3, %c0_35] : memref<16x128xf32, #tpu.memory_space<vmem>>, vector<1x128xf32>
    %cst_36 = arith.constant dense<0.000000e+00> : vector<1x128xf32>
    %102 = tpu.matmul %99, %11, %cst_36 {dimension_numbers = #tpu.dot_dimension_numbers<[1], [0], [0], [1], [0, 0, 1, 1], [], []>} : vector<1x32xf32>, vector<32x128xf32>, vector<1x128xf32> -> vector<1x128xf32>
    %103 = arith.addf %101, %102 : vector<1x128xf32>
    %104 = vector.extract_strided_slice %103 {offsets = [0, 0], sizes = [1, 32], strides = [1, 1]} : vector<1x128xf32> to vector<1x32xf32>
    %105 = arith.negf %104 : vector<1x32xf32>
    %106 = math.exp %105 : vector<1x32xf32>
    %cst_37 = arith.constant 1.000000e+00 : f32
    %107 = vector.broadcast %cst_37 : f32 to vector<1x32xf32>
    %108 = arith.addf %107, %106 : vector<1x32xf32>
    %109 = arith.divf %107, %108 : vector<1x32xf32>
    %110 = vector.extract_strided_slice %103 {offsets = [0, 32], sizes = [1, 32], strides = [1, 1]} : vector<1x128xf32> to vector<1x32xf32>
    %111 = arith.negf %110 : vector<1x32xf32>
    %112 = math.exp %111 : vector<1x32xf32>
    %cst_38 = arith.constant 1.000000e+00 : f32
    %113 = vector.broadcast %cst_38 : f32 to vector<1x32xf32>
    %114 = arith.addf %113, %112 : vector<1x32xf32>
    %115 = arith.divf %113, %114 : vector<1x32xf32>
    %116 = vector.extract_strided_slice %103 {offsets = [0, 64], sizes = [1, 32], strides = [1, 1]} : vector<1x128xf32> to vector<1x32xf32>
    %117 = math.tanh %116 : vector<1x32xf32>
    %118 = vector.extract_strided_slice %103 {offsets = [0, 96], sizes = [1, 32], strides = [1, 1]} : vector<1x128xf32> to vector<1x32xf32>
    %119 = arith.negf %118 : vector<1x32xf32>
    %120 = math.exp %119 : vector<1x32xf32>
    %cst_39 = arith.constant 1.000000e+00 : f32
    %121 = vector.broadcast %cst_39 : f32 to vector<1x32xf32>
    %122 = arith.addf %121, %120 : vector<1x32xf32>
    %123 = arith.divf %121, %122 : vector<1x32xf32>
    %124 = arith.mulf %115, %97 : vector<1x32xf32>
    %125 = arith.mulf %109, %117 : vector<1x32xf32>
    %126 = arith.addf %124, %125 : vector<1x32xf32>
    %127 = math.tanh %126 : vector<1x32xf32>
    %128 = arith.mulf %123, %127 : vector<1x32xf32>
    %c3_40 = arith.constant 3 : index
    %c0_41 = arith.constant 0 : index
    %129 = vector.load %arg9[%c3_40, %c0_41] : memref<16x32xf32, #tpu.memory_space<vmem>>, vector<1x32xf32>
    tpu.vector_store %arg9[%c3_40, %c0_41], %128 {strides = array<i32>} : memref<16x32xf32, #tpu.memory_space<vmem>>, vector<1x32xf32>,
    %c4 = arith.constant 4 : index
    %c0_42 = arith.constant 0 : index
    %130 = vector.load %arg10[%c4, %c0_42] : memref<16x128xf32, #tpu.memory_space<vmem>>, vector<1x128xf32>
    %cst_43 = arith.constant dense<0.000000e+00> : vector<1x128xf32>
    %131 = tpu.matmul %128, %11, %cst_43 {dimension_numbers = #tpu.dot_dimension_numbers<[1], [0], [0], [1], [0, 0, 1, 1], [], []>} : vector<1x32xf32>, vector<32x128xf32>, vector<1x128xf32> -> vector<1x128xf32>
    %132 = arith.addf %130, %131 : vector<1x128xf32>
    %133 = vector.extract_strided_slice %132 {offsets = [0, 0], sizes = [1, 32], strides = [1, 1]} : vector<1x128xf32> to vector<1x32xf32>
    %134 = arith.negf %133 : vector<1x32xf32>
    %135 = math.exp %134 : vector<1x32xf32>
    %cst_44 = arith.constant 1.000000e+00 : f32
    %136 = vector.broadcast %cst_44 : f32 to vector<1x32xf32>
    %137 = arith.addf %136, %135 : vector<1x32xf32>
    %138 = arith.divf %136, %137 : vector<1x32xf32>
    %139 = vector.extract_strided_slice %132 {offsets = [0, 32], sizes = [1, 32], strides = [1, 1]} : vector<1x128xf32> to vector<1x32xf32>
    %140 = arith.negf %139 : vector<1x32xf32>
    %141 = math.exp %140 : vector<1x32xf32>
    %cst_45 = arith.constant 1.000000e+00 : f32
    %142 = vector.broadcast %cst_45 : f32 to vector<1x32xf32>
    %143 = arith.addf %142, %141 : vector<1x32xf32>
    %144 = arith.divf %142, %143 : vector<1x32xf32>
    %145 = vector.extract_strided_slice %132 {offsets = [0, 64], sizes = [1, 32], strides = [1, 1]} : vector<1x128xf32> to vector<1x32xf32>
    %146 = math.tanh %145 : vector<1x32xf32>
    %147 = vector.extract_strided_slice %132 {offsets = [0, 96], sizes = [1, 32], strides = [1, 1]} : vector<1x128xf32> to vector<1x32xf32>
    %148 = arith.negf %147 : vector<1x32xf32>
    %149 = math.exp %148 : vector<1x32xf32>
    %cst_46 = arith.constant 1.000000e+00 : f32
    %150 = vector.broadcast %cst_46 : f32 to vector<1x32xf32>
    %151 = arith.addf %150, %149 : vector<1x32xf32>
    %152 = arith.divf %150, %151 : vector<1x32xf32>
    %153 = arith.mulf %144, %126 : vector<1x32xf32>
    %154 = arith.mulf %138, %146 : vector<1x32xf32>
    %155 = arith.addf %153, %154 : vector<1x32xf32>
    %156 = math.tanh %155 : vector<1x32xf32>
    %157 = arith.mulf %152, %156 : vector<1x32xf32>
    %c4_47 = arith.constant 4 : index
    %c0_48 = arith.constant 0 : index
    %158 = vector.load %arg9[%c4_47, %c0_48] : memref<16x32xf32, #tpu.memory_space<vmem>>, vector<1x32xf32>
    tpu.vector_store %arg9[%c4_47, %c0_48], %157 {strides = array<i32>} : memref<16x32xf32, #tpu.memory_space<vmem>>, vector<1x32xf32>,
    %c5 = arith.constant 5 : index
    %c0_49 = arith.constant 0 : index
    %159 = vector.load %arg10[%c5, %c0_49] : memref<16x128xf32, #tpu.memory_space<vmem>>, vector<1x128xf32>
    %cst_50 = arith.constant dense<0.000000e+00> : vector<1x128xf32>
    %160 = tpu.matmul %157, %11, %cst_50 {dimension_numbers = #tpu.dot_dimension_numbers<[1], [0], [0], [1], [0, 0, 1, 1], [], []>} : vector<1x32xf32>, vector<32x128xf32>, vector<1x128xf32> -> vector<1x128xf32>
    %161 = arith.addf %159, %160 : vector<1x128xf32>
    %162 = vector.extract_strided_slice %161 {offsets = [0, 0], sizes = [1, 32], strides = [1, 1]} : vector<1x128xf32> to vector<1x32xf32>
    %163 = arith.negf %162 : vector<1x32xf32>
    %164 = math.exp %163 : vector<1x32xf32>
    %cst_51 = arith.constant 1.000000e+00 : f32
    %165 = vector.broadcast %cst_51 : f32 to vector<1x32xf32>
    %166 = arith.addf %165, %164 : vector<1x32xf32>
    %167 = arith.divf %165, %166 : vector<1x32xf32>
    %168 = vector.extract_strided_slice %161 {offsets = [0, 32], sizes = [1, 32], strides = [1, 1]} : vector<1x128xf32> to vector<1x32xf32>
    %169 = arith.negf %168 : vector<1x32xf32>
    %170 = math.exp %169 : vector<1x32xf32>
    %cst_52 = arith.constant 1.000000e+00 : f32
    %171 = vector.broadcast %cst_52 : f32 to vector<1x32xf32>
    %172 = arith.addf %171, %170 : vector<1x32xf32>
    %173 = arith.divf %171, %172 : vector<1x32xf32>
    %174 = vector.extract_strided_slice %161 {offsets = [0, 64], sizes = [1, 32], strides = [1, 1]} : vector<1x128xf32> to vector<1x32xf32>
    %175 = math.tanh %174 : vector<1x32xf32>
    %176 = vector.extract_strided_slice %161 {offsets = [0, 96], sizes = [1, 32], strides = [1, 1]} : vector<1x128xf32> to vector<1x32xf32>
    %177 = arith.negf %176 : vector<1x32xf32>
    %178 = math.exp %177 : vector<1x32xf32>
    %cst_53 = arith.constant 1.000000e+00 : f32
    %179 = vector.broadcast %cst_53 : f32 to vector<1x32xf32>
    %180 = arith.addf %179, %178 : vector<1x32xf32>
    %181 = arith.divf %179, %180 : vector<1x32xf32>
    %182 = arith.mulf %173, %155 : vector<1x32xf32>
    %183 = arith.mulf %167, %175 : vector<1x32xf32>
    %184 = arith.addf %182, %183 : vector<1x32xf32>
    %185 = math.tanh %184 : vector<1x32xf32>
    %186 = arith.mulf %181, %185 : vector<1x32xf32>
    %c5_54 = arith.constant 5 : index
    %c0_55 = arith.constant 0 : index
    %187 = vector.load %arg9[%c5_54, %c0_55] : memref<16x32xf32, #tpu.memory_space<vmem>>, vector<1x32xf32>
    tpu.vector_store %arg9[%c5_54, %c0_55], %186 {strides = array<i32>} : memref<16x32xf32, #tpu.memory_space<vmem>>, vector<1x32xf32>,
    %c6 = arith.constant 6 : index
    %c0_56 = arith.constant 0 : index
    %188 = vector.load %arg10[%c6, %c0_56] : memref<16x128xf32, #tpu.memory_space<vmem>>, vector<1x128xf32>
    %cst_57 = arith.constant dense<0.000000e+00> : vector<1x128xf32>
    %189 = tpu.matmul %186, %11, %cst_57 {dimension_numbers = #tpu.dot_dimension_numbers<[1], [0], [0], [1], [0, 0, 1, 1], [], []>} : vector<1x32xf32>, vector<32x128xf32>, vector<1x128xf32> -> vector<1x128xf32>
    %190 = arith.addf %188, %189 : vector<1x128xf32>
    %191 = vector.extract_strided_slice %190 {offsets = [0, 0], sizes = [1, 32], strides = [1, 1]} : vector<1x128xf32> to vector<1x32xf32>
    %192 = arith.negf %191 : vector<1x32xf32>
    %193 = math.exp %192 : vector<1x32xf32>
    %cst_58 = arith.constant 1.000000e+00 : f32
    %194 = vector.broadcast %cst_58 : f32 to vector<1x32xf32>
    %195 = arith.addf %194, %193 : vector<1x32xf32>
    %196 = arith.divf %194, %195 : vector<1x32xf32>
    %197 = vector.extract_strided_slice %190 {offsets = [0, 32], sizes = [1, 32], strides = [1, 1]} : vector<1x128xf32> to vector<1x32xf32>
    %198 = arith.negf %197 : vector<1x32xf32>
    %199 = math.exp %198 : vector<1x32xf32>
    %cst_59 = arith.constant 1.000000e+00 : f32
    %200 = vector.broadcast %cst_59 : f32 to vector<1x32xf32>
    %201 = arith.addf %200, %199 : vector<1x32xf32>
    %202 = arith.divf %200, %201 : vector<1x32xf32>
    %203 = vector.extract_strided_slice %190 {offsets = [0, 64], sizes = [1, 32], strides = [1, 1]} : vector<1x128xf32> to vector<1x32xf32>
    %204 = math.tanh %203 : vector<1x32xf32>
    %205 = vector.extract_strided_slice %190 {offsets = [0, 96], sizes = [1, 32], strides = [1, 1]} : vector<1x128xf32> to vector<1x32xf32>
    %206 = arith.negf %205 : vector<1x32xf32>
    %207 = math.exp %206 : vector<1x32xf32>
    %cst_60 = arith.constant 1.000000e+00 : f32
    %208 = vector.broadcast %cst_60 : f32 to vector<1x32xf32>
    %209 = arith.addf %208, %207 : vector<1x32xf32>
    %210 = arith.divf %208, %209 : vector<1x32xf32>
    %211 = arith.mulf %202, %184 : vector<1x32xf32>
    %212 = arith.mulf %196, %204 : vector<1x32xf32>
    %213 = arith.addf %211, %212 : vector<1x32xf32>
    %214 = math.tanh %213 : vector<1x32xf32>
    %215 = arith.mulf %210, %214 : vector<1x32xf32>
    %c6_61 = arith.constant 6 : index
    %c0_62 = arith.constant 0 : index
    %216 = vector.load %arg9[%c6_61, %c0_62] : memref<16x32xf32, #tpu.memory_space<vmem>>, vector<1x32xf32>
    tpu.vector_store %arg9[%c6_61, %c0_62], %215 {strides = array<i32>} : memref<16x32xf32, #tpu.memory_space<vmem>>, vector<1x32xf32>,
    %c7 = arith.constant 7 : index
    %c0_63 = arith.constant 0 : index
    %217 = vector.load %arg10[%c7, %c0_63] : memref<16x128xf32, #tpu.memory_space<vmem>>, vector<1x128xf32>
    %cst_64 = arith.constant dense<0.000000e+00> : vector<1x128xf32>
    %218 = tpu.matmul %215, %11, %cst_64 {dimension_numbers = #tpu.dot_dimension_numbers<[1], [0], [0], [1], [0, 0, 1, 1], [], []>} : vector<1x32xf32>, vector<32x128xf32>, vector<1x128xf32> -> vector<1x128xf32>
    %219 = arith.addf %217, %218 : vector<1x128xf32>
    %220 = vector.extract_strided_slice %219 {offsets = [0, 0], sizes = [1, 32], strides = [1, 1]} : vector<1x128xf32> to vector<1x32xf32>
    %221 = arith.negf %220 : vector<1x32xf32>
    %222 = math.exp %221 : vector<1x32xf32>
    %cst_65 = arith.constant 1.000000e+00 : f32
    %223 = vector.broadcast %cst_65 : f32 to vector<1x32xf32>
    %224 = arith.addf %223, %222 : vector<1x32xf32>
    %225 = arith.divf %223, %224 : vector<1x32xf32>
    %226 = vector.extract_strided_slice %219 {offsets = [0, 32], sizes = [1, 32], strides = [1, 1]} : vector<1x128xf32> to vector<1x32xf32>
    %227 = arith.negf %226 : vector<1x32xf32>
    %228 = math.exp %227 : vector<1x32xf32>
    %cst_66 = arith.constant 1.000000e+00 : f32
    %229 = vector.broadcast %cst_66 : f32 to vector<1x32xf32>
    %230 = arith.addf %229, %228 : vector<1x32xf32>
    %231 = arith.divf %229, %230 : vector<1x32xf32>
    %232 = vector.extract_strided_slice %219 {offsets = [0, 64], sizes = [1, 32], strides = [1, 1]} : vector<1x128xf32> to vector<1x32xf32>
    %233 = math.tanh %232 : vector<1x32xf32>
    %234 = vector.extract_strided_slice %219 {offsets = [0, 96], sizes = [1, 32], strides = [1, 1]} : vector<1x128xf32> to vector<1x32xf32>
    %235 = arith.negf %234 : vector<1x32xf32>
    %236 = math.exp %235 : vector<1x32xf32>
    %cst_67 = arith.constant 1.000000e+00 : f32
    %237 = vector.broadcast %cst_67 : f32 to vector<1x32xf32>
    %238 = arith.addf %237, %236 : vector<1x32xf32>
    %239 = arith.divf %237, %238 : vector<1x32xf32>
    %240 = arith.mulf %231, %213 : vector<1x32xf32>
    %241 = arith.mulf %225, %233 : vector<1x32xf32>
    %242 = arith.addf %240, %241 : vector<1x32xf32>
    %243 = math.tanh %242 : vector<1x32xf32>
    %244 = arith.mulf %239, %243 : vector<1x32xf32>
    %c7_68 = arith.constant 7 : index
    %c0_69 = arith.constant 0 : index
    %245 = vector.load %arg9[%c7_68, %c0_69] : memref<16x32xf32, #tpu.memory_space<vmem>>, vector<1x32xf32>
    tpu.vector_store %arg9[%c7_68, %c0_69], %244 {strides = array<i32>} : memref<16x32xf32, #tpu.memory_space<vmem>>, vector<1x32xf32>,
    %c8 = arith.constant 8 : index
    %c0_70 = arith.constant 0 : index
    %246 = vector.load %arg10[%c8, %c0_70] : memref<16x128xf32, #tpu.memory_space<vmem>>, vector<1x128xf32>
    %cst_71 = arith.constant dense<0.000000e+00> : vector<1x128xf32>
    %247 = tpu.matmul %244, %11, %cst_71 {dimension_numbers = #tpu.dot_dimension_numbers<[1], [0], [0], [1], [0, 0, 1, 1], [], []>} : vector<1x32xf32>, vector<32x128xf32>, vector<1x128xf32> -> vector<1x128xf32>
    %248 = arith.addf %246, %247 : vector<1x128xf32>
    %249 = vector.extract_strided_slice %248 {offsets = [0, 0], sizes = [1, 32], strides = [1, 1]} : vector<1x128xf32> to vector<1x32xf32>
    %250 = arith.negf %249 : vector<1x32xf32>
    %251 = math.exp %250 : vector<1x32xf32>
    %cst_72 = arith.constant 1.000000e+00 : f32
    %252 = vector.broadcast %cst_72 : f32 to vector<1x32xf32>
    %253 = arith.addf %252, %251 : vector<1x32xf32>
    %254 = arith.divf %252, %253 : vector<1x32xf32>
    %255 = vector.extract_strided_slice %248 {offsets = [0, 32], sizes = [1, 32], strides = [1, 1]} : vector<1x128xf32> to vector<1x32xf32>
    %256 = arith.negf %255 : vector<1x32xf32>
    %257 = math.exp %256 : vector<1x32xf32>
    %cst_73 = arith.constant 1.000000e+00 : f32
    %258 = vector.broadcast %cst_73 : f32 to vector<1x32xf32>
    %259 = arith.addf %258, %257 : vector<1x32xf32>
    %260 = arith.divf %258, %259 : vector<1x32xf32>
    %261 = vector.extract_strided_slice %248 {offsets = [0, 64], sizes = [1, 32], strides = [1, 1]} : vector<1x128xf32> to vector<1x32xf32>
    %262 = math.tanh %261 : vector<1x32xf32>
    %263 = vector.extract_strided_slice %248 {offsets = [0, 96], sizes = [1, 32], strides = [1, 1]} : vector<1x128xf32> to vector<1x32xf32>
    %264 = arith.negf %263 : vector<1x32xf32>
    %265 = math.exp %264 : vector<1x32xf32>
    %cst_74 = arith.constant 1.000000e+00 : f32
    %266 = vector.broadcast %cst_74 : f32 to vector<1x32xf32>
    %267 = arith.addf %266, %265 : vector<1x32xf32>
    %268 = arith.divf %266, %267 : vector<1x32xf32>
    %269 = arith.mulf %260, %242 : vector<1x32xf32>
    %270 = arith.mulf %254, %262 : vector<1x32xf32>
    %271 = arith.addf %269, %270 : vector<1x32xf32>
    %272 = math.tanh %271 : vector<1x32xf32>
    %273 = arith.mulf %268, %272 : vector<1x32xf32>
    %c8_75 = arith.constant 8 : index
    %c0_76 = arith.constant 0 : index
    %274 = vector.load %arg9[%c8_75, %c0_76] : memref<16x32xf32, #tpu.memory_space<vmem>>, vector<1x32xf32>
    tpu.vector_store %arg9[%c8_75, %c0_76], %273 {strides = array<i32>} : memref<16x32xf32, #tpu.memory_space<vmem>>, vector<1x32xf32>,
    %c9 = arith.constant 9 : index
    %c0_77 = arith.constant 0 : index
    %275 = vector.load %arg10[%c9, %c0_77] : memref<16x128xf32, #tpu.memory_space<vmem>>, vector<1x128xf32>
    %cst_78 = arith.constant dense<0.000000e+00> : vector<1x128xf32>
    %276 = tpu.matmul %273, %11, %cst_78 {dimension_numbers = #tpu.dot_dimension_numbers<[1], [0], [0], [1], [0, 0, 1, 1], [], []>} : vector<1x32xf32>, vector<32x128xf32>, vector<1x128xf32> -> vector<1x128xf32>
    %277 = arith.addf %275, %276 : vector<1x128xf32>
    %278 = vector.extract_strided_slice %277 {offsets = [0, 0], sizes = [1, 32], strides = [1, 1]} : vector<1x128xf32> to vector<1x32xf32>
    %279 = arith.negf %278 : vector<1x32xf32>
    %280 = math.exp %279 : vector<1x32xf32>
    %cst_79 = arith.constant 1.000000e+00 : f32
    %281 = vector.broadcast %cst_79 : f32 to vector<1x32xf32>
    %282 = arith.addf %281, %280 : vector<1x32xf32>
    %283 = arith.divf %281, %282 : vector<1x32xf32>
    %284 = vector.extract_strided_slice %277 {offsets = [0, 32], sizes = [1, 32], strides = [1, 1]} : vector<1x128xf32> to vector<1x32xf32>
    %285 = arith.negf %284 : vector<1x32xf32>
    %286 = math.exp %285 : vector<1x32xf32>
    %cst_80 = arith.constant 1.000000e+00 : f32
    %287 = vector.broadcast %cst_80 : f32 to vector<1x32xf32>
    %288 = arith.addf %287, %286 : vector<1x32xf32>
    %289 = arith.divf %287, %288 : vector<1x32xf32>
    %290 = vector.extract_strided_slice %277 {offsets = [0, 64], sizes = [1, 32], strides = [1, 1]} : vector<1x128xf32> to vector<1x32xf32>
    %291 = math.tanh %290 : vector<1x32xf32>
    %292 = vector.extract_strided_slice %277 {offsets = [0, 96], sizes = [1, 32], strides = [1, 1]} : vector<1x128xf32> to vector<1x32xf32>
    %293 = arith.negf %292 : vector<1x32xf32>
    %294 = math.exp %293 : vector<1x32xf32>
    %cst_81 = arith.constant 1.000000e+00 : f32
    %295 = vector.broadcast %cst_81 : f32 to vector<1x32xf32>
    %296 = arith.addf %295, %294 : vector<1x32xf32>
    %297 = arith.divf %295, %296 : vector<1x32xf32>
    %298 = arith.mulf %289, %271 : vector<1x32xf32>
    %299 = arith.mulf %283, %291 : vector<1x32xf32>
    %300 = arith.addf %298, %299 : vector<1x32xf32>
    %301 = math.tanh %300 : vector<1x32xf32>
    %302 = arith.mulf %297, %301 : vector<1x32xf32>
    %c9_82 = arith.constant 9 : index
    %c0_83 = arith.constant 0 : index
    %303 = vector.load %arg9[%c9_82, %c0_83] : memref<16x32xf32, #tpu.memory_space<vmem>>, vector<1x32xf32>
    tpu.vector_store %arg9[%c9_82, %c0_83], %302 {strides = array<i32>} : memref<16x32xf32, #tpu.memory_space<vmem>>, vector<1x32xf32>,
    %c10 = arith.constant 10 : index
    %c0_84 = arith.constant 0 : index
    %304 = vector.load %arg10[%c10, %c0_84] : memref<16x128xf32, #tpu.memory_space<vmem>>, vector<1x128xf32>
    %cst_85 = arith.constant dense<0.000000e+00> : vector<1x128xf32>
    %305 = tpu.matmul %302, %11, %cst_85 {dimension_numbers = #tpu.dot_dimension_numbers<[1], [0], [0], [1], [0, 0, 1, 1], [], []>} : vector<1x32xf32>, vector<32x128xf32>, vector<1x128xf32> -> vector<1x128xf32>
    %306 = arith.addf %304, %305 : vector<1x128xf32>
    %307 = vector.extract_strided_slice %306 {offsets = [0, 0], sizes = [1, 32], strides = [1, 1]} : vector<1x128xf32> to vector<1x32xf32>
    %308 = arith.negf %307 : vector<1x32xf32>
    %309 = math.exp %308 : vector<1x32xf32>
    %cst_86 = arith.constant 1.000000e+00 : f32
    %310 = vector.broadcast %cst_86 : f32 to vector<1x32xf32>
    %311 = arith.addf %310, %309 : vector<1x32xf32>
    %312 = arith.divf %310, %311 : vector<1x32xf32>
    %313 = vector.extract_strided_slice %306 {offsets = [0, 32], sizes = [1, 32], strides = [1, 1]} : vector<1x128xf32> to vector<1x32xf32>
    %314 = arith.negf %313 : vector<1x32xf32>
    %315 = math.exp %314 : vector<1x32xf32>
    %cst_87 = arith.constant 1.000000e+00 : f32
    %316 = vector.broadcast %cst_87 : f32 to vector<1x32xf32>
    %317 = arith.addf %316, %315 : vector<1x32xf32>
    %318 = arith.divf %316, %317 : vector<1x32xf32>
    %319 = vector.extract_strided_slice %306 {offsets = [0, 64], sizes = [1, 32], strides = [1, 1]} : vector<1x128xf32> to vector<1x32xf32>
    %320 = math.tanh %319 : vector<1x32xf32>
    %321 = vector.extract_strided_slice %306 {offsets = [0, 96], sizes = [1, 32], strides = [1, 1]} : vector<1x128xf32> to vector<1x32xf32>
    %322 = arith.negf %321 : vector<1x32xf32>
    %323 = math.exp %322 : vector<1x32xf32>
    %cst_88 = arith.constant 1.000000e+00 : f32
    %324 = vector.broadcast %cst_88 : f32 to vector<1x32xf32>
    %325 = arith.addf %324, %323 : vector<1x32xf32>
    %326 = arith.divf %324, %325 : vector<1x32xf32>
    %327 = arith.mulf %318, %300 : vector<1x32xf32>
    %328 = arith.mulf %312, %320 : vector<1x32xf32>
    %329 = arith.addf %327, %328 : vector<1x32xf32>
    %330 = math.tanh %329 : vector<1x32xf32>
    %331 = arith.mulf %326, %330 : vector<1x32xf32>
    %c10_89 = arith.constant 10 : index
    %c0_90 = arith.constant 0 : index
    %332 = vector.load %arg9[%c10_89, %c0_90] : memref<16x32xf32, #tpu.memory_space<vmem>>, vector<1x32xf32>
    tpu.vector_store %arg9[%c10_89, %c0_90], %331 {strides = array<i32>} : memref<16x32xf32, #tpu.memory_space<vmem>>, vector<1x32xf32>,
    %c11 = arith.constant 11 : index
    %c0_91 = arith.constant 0 : index
    %333 = vector.load %arg10[%c11, %c0_91] : memref<16x128xf32, #tpu.memory_space<vmem>>, vector<1x128xf32>
    %cst_92 = arith.constant dense<0.000000e+00> : vector<1x128xf32>
    %334 = tpu.matmul %331, %11, %cst_92 {dimension_numbers = #tpu.dot_dimension_numbers<[1], [0], [0], [1], [0, 0, 1, 1], [], []>} : vector<1x32xf32>, vector<32x128xf32>, vector<1x128xf32> -> vector<1x128xf32>
    %335 = arith.addf %333, %334 : vector<1x128xf32>
    %336 = vector.extract_strided_slice %335 {offsets = [0, 0], sizes = [1, 32], strides = [1, 1]} : vector<1x128xf32> to vector<1x32xf32>
    %337 = arith.negf %336 : vector<1x32xf32>
    %338 = math.exp %337 : vector<1x32xf32>
    %cst_93 = arith.constant 1.000000e+00 : f32
    %339 = vector.broadcast %cst_93 : f32 to vector<1x32xf32>
    %340 = arith.addf %339, %338 : vector<1x32xf32>
    %341 = arith.divf %339, %340 : vector<1x32xf32>
    %342 = vector.extract_strided_slice %335 {offsets = [0, 32], sizes = [1, 32], strides = [1, 1]} : vector<1x128xf32> to vector<1x32xf32>
    %343 = arith.negf %342 : vector<1x32xf32>
    %344 = math.exp %343 : vector<1x32xf32>
    %cst_94 = arith.constant 1.000000e+00 : f32
    %345 = vector.broadcast %cst_94 : f32 to vector<1x32xf32>
    %346 = arith.addf %345, %344 : vector<1x32xf32>
    %347 = arith.divf %345, %346 : vector<1x32xf32>
    %348 = vector.extract_strided_slice %335 {offsets = [0, 64], sizes = [1, 32], strides = [1, 1]} : vector<1x128xf32> to vector<1x32xf32>
    %349 = math.tanh %348 : vector<1x32xf32>
    %350 = vector.extract_strided_slice %335 {offsets = [0, 96], sizes = [1, 32], strides = [1, 1]} : vector<1x128xf32> to vector<1x32xf32>
    %351 = arith.negf %350 : vector<1x32xf32>
    %352 = math.exp %351 : vector<1x32xf32>
    %cst_95 = arith.constant 1.000000e+00 : f32
    %353 = vector.broadcast %cst_95 : f32 to vector<1x32xf32>
    %354 = arith.addf %353, %352 : vector<1x32xf32>
    %355 = arith.divf %353, %354 : vector<1x32xf32>
    %356 = arith.mulf %347, %329 : vector<1x32xf32>
    %357 = arith.mulf %341, %349 : vector<1x32xf32>
    %358 = arith.addf %356, %357 : vector<1x32xf32>
    %359 = math.tanh %358 : vector<1x32xf32>
    %360 = arith.mulf %355, %359 : vector<1x32xf32>
    %c11_96 = arith.constant 11 : index
    %c0_97 = arith.constant 0 : index
    %361 = vector.load %arg9[%c11_96, %c0_97] : memref<16x32xf32, #tpu.memory_space<vmem>>, vector<1x32xf32>
    tpu.vector_store %arg9[%c11_96, %c0_97], %360 {strides = array<i32>} : memref<16x32xf32, #tpu.memory_space<vmem>>, vector<1x32xf32>,
    %c12 = arith.constant 12 : index
    %c0_98 = arith.constant 0 : index
    %362 = vector.load %arg10[%c12, %c0_98] : memref<16x128xf32, #tpu.memory_space<vmem>>, vector<1x128xf32>
    %cst_99 = arith.constant dense<0.000000e+00> : vector<1x128xf32>
    %363 = tpu.matmul %360, %11, %cst_99 {dimension_numbers = #tpu.dot_dimension_numbers<[1], [0], [0], [1], [0, 0, 1, 1], [], []>} : vector<1x32xf32>, vector<32x128xf32>, vector<1x128xf32> -> vector<1x128xf32>
    %364 = arith.addf %362, %363 : vector<1x128xf32>
    %365 = vector.extract_strided_slice %364 {offsets = [0, 0], sizes = [1, 32], strides = [1, 1]} : vector<1x128xf32> to vector<1x32xf32>
    %366 = arith.negf %365 : vector<1x32xf32>
    %367 = math.exp %366 : vector<1x32xf32>
    %cst_100 = arith.constant 1.000000e+00 : f32
    %368 = vector.broadcast %cst_100 : f32 to vector<1x32xf32>
    %369 = arith.addf %368, %367 : vector<1x32xf32>
    %370 = arith.divf %368, %369 : vector<1x32xf32>
    %371 = vector.extract_strided_slice %364 {offsets = [0, 32], sizes = [1, 32], strides = [1, 1]} : vector<1x128xf32> to vector<1x32xf32>
    %372 = arith.negf %371 : vector<1x32xf32>
    %373 = math.exp %372 : vector<1x32xf32>
    %cst_101 = arith.constant 1.000000e+00 : f32
    %374 = vector.broadcast %cst_101 : f32 to vector<1x32xf32>
    %375 = arith.addf %374, %373 : vector<1x32xf32>
    %376 = arith.divf %374, %375 : vector<1x32xf32>
    %377 = vector.extract_strided_slice %364 {offsets = [0, 64], sizes = [1, 32], strides = [1, 1]} : vector<1x128xf32> to vector<1x32xf32>
    %378 = math.tanh %377 : vector<1x32xf32>
    %379 = vector.extract_strided_slice %364 {offsets = [0, 96], sizes = [1, 32], strides = [1, 1]} : vector<1x128xf32> to vector<1x32xf32>
    %380 = arith.negf %379 : vector<1x32xf32>
    %381 = math.exp %380 : vector<1x32xf32>
    %cst_102 = arith.constant 1.000000e+00 : f32
    %382 = vector.broadcast %cst_102 : f32 to vector<1x32xf32>
    %383 = arith.addf %382, %381 : vector<1x32xf32>
    %384 = arith.divf %382, %383 : vector<1x32xf32>
    %385 = arith.mulf %376, %358 : vector<1x32xf32>
    %386 = arith.mulf %370, %378 : vector<1x32xf32>
    %387 = arith.addf %385, %386 : vector<1x32xf32>
    %388 = math.tanh %387 : vector<1x32xf32>
    %389 = arith.mulf %384, %388 : vector<1x32xf32>
    %c12_103 = arith.constant 12 : index
    %c0_104 = arith.constant 0 : index
    %390 = vector.load %arg9[%c12_103, %c0_104] : memref<16x32xf32, #tpu.memory_space<vmem>>, vector<1x32xf32>
    tpu.vector_store %arg9[%c12_103, %c0_104], %389 {strides = array<i32>} : memref<16x32xf32, #tpu.memory_space<vmem>>, vector<1x32xf32>,
    %c13 = arith.constant 13 : index
    %c0_105 = arith.constant 0 : index
    %391 = vector.load %arg10[%c13, %c0_105] : memref<16x128xf32, #tpu.memory_space<vmem>>, vector<1x128xf32>
    %cst_106 = arith.constant dense<0.000000e+00> : vector<1x128xf32>
    %392 = tpu.matmul %389, %11, %cst_106 {dimension_numbers = #tpu.dot_dimension_numbers<[1], [0], [0], [1], [0, 0, 1, 1], [], []>} : vector<1x32xf32>, vector<32x128xf32>, vector<1x128xf32> -> vector<1x128xf32>
    %393 = arith.addf %391, %392 : vector<1x128xf32>
    %394 = vector.extract_strided_slice %393 {offsets = [0, 0], sizes = [1, 32], strides = [1, 1]} : vector<1x128xf32> to vector<1x32xf32>
    %395 = arith.negf %394 : vector<1x32xf32>
    %396 = math.exp %395 : vector<1x32xf32>
    %cst_107 = arith.constant 1.000000e+00 : f32
    %397 = vector.broadcast %cst_107 : f32 to vector<1x32xf32>
    %398 = arith.addf %397, %396 : vector<1x32xf32>
    %399 = arith.divf %397, %398 : vector<1x32xf32>
    %400 = vector.extract_strided_slice %393 {offsets = [0, 32], sizes = [1, 32], strides = [1, 1]} : vector<1x128xf32> to vector<1x32xf32>
    %401 = arith.negf %400 : vector<1x32xf32>
    %402 = math.exp %401 : vector<1x32xf32>
    %cst_108 = arith.constant 1.000000e+00 : f32
    %403 = vector.broadcast %cst_108 : f32 to vector<1x32xf32>
    %404 = arith.addf %403, %402 : vector<1x32xf32>
    %405 = arith.divf %403, %404 : vector<1x32xf32>
    %406 = vector.extract_strided_slice %393 {offsets = [0, 64], sizes = [1, 32], strides = [1, 1]} : vector<1x128xf32> to vector<1x32xf32>
    %407 = math.tanh %406 : vector<1x32xf32>
    %408 = vector.extract_strided_slice %393 {offsets = [0, 96], sizes = [1, 32], strides = [1, 1]} : vector<1x128xf32> to vector<1x32xf32>
    %409 = arith.negf %408 : vector<1x32xf32>
    %410 = math.exp %409 : vector<1x32xf32>
    %cst_109 = arith.constant 1.000000e+00 : f32
    %411 = vector.broadcast %cst_109 : f32 to vector<1x32xf32>
    %412 = arith.addf %411, %410 : vector<1x32xf32>
    %413 = arith.divf %411, %412 : vector<1x32xf32>
    %414 = arith.mulf %405, %387 : vector<1x32xf32>
    %415 = arith.mulf %399, %407 : vector<1x32xf32>
    %416 = arith.addf %414, %415 : vector<1x32xf32>
    %417 = math.tanh %416 : vector<1x32xf32>
    %418 = arith.mulf %413, %417 : vector<1x32xf32>
    %c13_110 = arith.constant 13 : index
    %c0_111 = arith.constant 0 : index
    %419 = vector.load %arg9[%c13_110, %c0_111] : memref<16x32xf32, #tpu.memory_space<vmem>>, vector<1x32xf32>
    tpu.vector_store %arg9[%c13_110, %c0_111], %418 {strides = array<i32>} : memref<16x32xf32, #tpu.memory_space<vmem>>, vector<1x32xf32>,
    %c14 = arith.constant 14 : index
    %c0_112 = arith.constant 0 : index
    %420 = vector.load %arg10[%c14, %c0_112] : memref<16x128xf32, #tpu.memory_space<vmem>>, vector<1x128xf32>
    %cst_113 = arith.constant dense<0.000000e+00> : vector<1x128xf32>
    %421 = tpu.matmul %418, %11, %cst_113 {dimension_numbers = #tpu.dot_dimension_numbers<[1], [0], [0], [1], [0, 0, 1, 1], [], []>} : vector<1x32xf32>, vector<32x128xf32>, vector<1x128xf32> -> vector<1x128xf32>
    %422 = arith.addf %420, %421 : vector<1x128xf32>
    %423 = vector.extract_strided_slice %422 {offsets = [0, 0], sizes = [1, 32], strides = [1, 1]} : vector<1x128xf32> to vector<1x32xf32>
    %424 = arith.negf %423 : vector<1x32xf32>
    %425 = math.exp %424 : vector<1x32xf32>
    %cst_114 = arith.constant 1.000000e+00 : f32
    %426 = vector.broadcast %cst_114 : f32 to vector<1x32xf32>
    %427 = arith.addf %426, %425 : vector<1x32xf32>
    %428 = arith.divf %426, %427 : vector<1x32xf32>
    %429 = vector.extract_strided_slice %422 {offsets = [0, 32], sizes = [1, 32], strides = [1, 1]} : vector<1x128xf32> to vector<1x32xf32>
    %430 = arith.negf %429 : vector<1x32xf32>
    %431 = math.exp %430 : vector<1x32xf32>
    %cst_115 = arith.constant 1.000000e+00 : f32
    %432 = vector.broadcast %cst_115 : f32 to vector<1x32xf32>
    %433 = arith.addf %432, %431 : vector<1x32xf32>
    %434 = arith.divf %432, %433 : vector<1x32xf32>
    %435 = vector.extract_strided_slice %422 {offsets = [0, 64], sizes = [1, 32], strides = [1, 1]} : vector<1x128xf32> to vector<1x32xf32>
    %436 = math.tanh %435 : vector<1x32xf32>
    %437 = vector.extract_strided_slice %422 {offsets = [0, 96], sizes = [1, 32], strides = [1, 1]} : vector<1x128xf32> to vector<1x32xf32>
    %438 = arith.negf %437 : vector<1x32xf32>
    %439 = math.exp %438 : vector<1x32xf32>
    %cst_116 = arith.constant 1.000000e+00 : f32
    %440 = vector.broadcast %cst_116 : f32 to vector<1x32xf32>
    %441 = arith.addf %440, %439 : vector<1x32xf32>
    %442 = arith.divf %440, %441 : vector<1x32xf32>
    %443 = arith.mulf %434, %416 : vector<1x32xf32>
    %444 = arith.mulf %428, %436 : vector<1x32xf32>
    %445 = arith.addf %443, %444 : vector<1x32xf32>
    %446 = math.tanh %445 : vector<1x32xf32>
    %447 = arith.mulf %442, %446 : vector<1x32xf32>
    %c14_117 = arith.constant 14 : index
    %c0_118 = arith.constant 0 : index
    %448 = vector.load %arg9[%c14_117, %c0_118] : memref<16x32xf32, #tpu.memory_space<vmem>>, vector<1x32xf32>
    tpu.vector_store %arg9[%c14_117, %c0_118], %447 {strides = array<i32>} : memref<16x32xf32, #tpu.memory_space<vmem>>, vector<1x32xf32>,
    %c15 = arith.constant 15 : index
    %c0_119 = arith.constant 0 : index
    %449 = vector.load %arg10[%c15, %c0_119] : memref<16x128xf32, #tpu.memory_space<vmem>>, vector<1x128xf32>
    %cst_120 = arith.constant dense<0.000000e+00> : vector<1x128xf32>
    %450 = tpu.matmul %447, %11, %cst_120 {dimension_numbers = #tpu.dot_dimension_numbers<[1], [0], [0], [1], [0, 0, 1, 1], [], []>} : vector<1x32xf32>, vector<32x128xf32>, vector<1x128xf32> -> vector<1x128xf32>
    %451 = arith.addf %449, %450 : vector<1x128xf32>
    %452 = vector.extract_strided_slice %451 {offsets = [0, 0], sizes = [1, 32], strides = [1, 1]} : vector<1x128xf32> to vector<1x32xf32>
    %453 = arith.negf %452 : vector<1x32xf32>
    %454 = math.exp %453 : vector<1x32xf32>
    %cst_121 = arith.constant 1.000000e+00 : f32
    %455 = vector.broadcast %cst_121 : f32 to vector<1x32xf32>
    %456 = arith.addf %455, %454 : vector<1x32xf32>
    %457 = arith.divf %455, %456 : vector<1x32xf32>
    %458 = vector.extract_strided_slice %451 {offsets = [0, 32], sizes = [1, 32], strides = [1, 1]} : vector<1x128xf32> to vector<1x32xf32>
    %459 = arith.negf %458 : vector<1x32xf32>
    %460 = math.exp %459 : vector<1x32xf32>
    %cst_122 = arith.constant 1.000000e+00 : f32
    %461 = vector.broadcast %cst_122 : f32 to vector<1x32xf32>
    %462 = arith.addf %461, %460 : vector<1x32xf32>
    %463 = arith.divf %461, %462 : vector<1x32xf32>
    %464 = vector.extract_strided_slice %451 {offsets = [0, 64], sizes = [1, 32], strides = [1, 1]} : vector<1x128xf32> to vector<1x32xf32>
    %465 = math.tanh %464 : vector<1x32xf32>
    %466 = vector.extract_strided_slice %451 {offsets = [0, 96], sizes = [1, 32], strides = [1, 1]} : vector<1x128xf32> to vector<1x32xf32>
    %467 = arith.negf %466 : vector<1x32xf32>
    %468 = math.exp %467 : vector<1x32xf32>
    %cst_123 = arith.constant 1.000000e+00 : f32
    %469 = vector.broadcast %cst_123 : f32 to vector<1x32xf32>
    %470 = arith.addf %469, %468 : vector<1x32xf32>
    %471 = arith.divf %469, %470 : vector<1x32xf32>
    %472 = arith.mulf %463, %445 : vector<1x32xf32>
    %473 = arith.mulf %457, %465 : vector<1x32xf32>
    %474 = arith.addf %472, %473 : vector<1x32xf32>
    %475 = math.tanh %474 : vector<1x32xf32>
    %476 = arith.mulf %471, %475 : vector<1x32xf32>
    %c15_124 = arith.constant 15 : index
    %c0_125 = arith.constant 0 : index
    %477 = vector.load %arg9[%c15_124, %c0_125] : memref<16x32xf32, #tpu.memory_space<vmem>>, vector<1x32xf32>
    tpu.vector_store %arg9[%c15_124, %c0_125], %476 {strides = array<i32>} : memref<16x32xf32, #tpu.memory_space<vmem>>, vector<1x32xf32>,
    %c0_126 = arith.constant 0 : index
    %c0_127 = arith.constant 0 : index
    %478 = vector.load %arg9[%c0_126, %c0_127] : memref<16x32xf32, #tpu.memory_space<vmem>>, vector<16x32xf32>
    %c0_128 = arith.constant 0 : index
    %c0_129 = arith.constant 0 : index
    %c0_130 = arith.constant 0 : index
    %479 = vector.load %arg3[%c0_128, %c0_129, %c0_130] : memref<1x32x128xf32, #tpu.memory_space<vmem>>, vector<1x32x128xf32>
    %480 = vector.shape_cast %479 : vector<1x32x128xf32> to vector<32x128xf32>
    %c1_131 = arith.constant 1 : index
    %c0_132 = arith.constant 0 : index
    %481 = vector.load %arg5[%c1_131, %c0_132] : memref<2x128xf32, #tpu.memory_space<vmem>>, vector<1x128xf32>
    %482 = vector.shape_cast %481 : vector<1x128xf32> to vector<128xf32>
    %cst_133 = arith.constant dense<0.000000e+00> : vector<16x128xf32>
    %483 = tpu.matmul %478, %480, %cst_133 {dimension_numbers = #tpu.dot_dimension_numbers<[1], [0], [0], [1], [0, 0, 1, 1], [], []>} : vector<16x32xf32>, vector<32x128xf32>, vector<16x128xf32> -> vector<16x128xf32>
    %484 = vector.shape_cast %482 : vector<128xf32> to vector<1x128xf32>
    %485 = vector.broadcast %484 : vector<1x128xf32> to vector<16x128xf32>
    %486 = arith.addf %483, %485 : vector<16x128xf32>
    %c0_134 = arith.constant 0 : index
    %c0_135 = arith.constant 0 : index
    %487 = vector.load %arg10[%c0_134, %c0_135] : memref<16x128xf32, #tpu.memory_space<vmem>>, vector<16x128xf32>
    tpu.vector_store %arg10[%c0_134, %c0_135], %486 {strides = array<i32>} : memref<16x128xf32, #tpu.memory_space<vmem>>, vector<16x128xf32>,
    %c1_136 = arith.constant 1 : index
    %c0_137 = arith.constant 0 : index
    %c0_138 = arith.constant 0 : index
    %488 = vector.load %arg4[%c1_136, %c0_137, %c0_138] : memref<2x32x128xf32, #tpu.memory_space<vmem>>, vector<1x32x128xf32>
    %489 = vector.shape_cast %488 : vector<1x32x128xf32> to vector<32x128xf32>
    %cst_139 = arith.constant 0.000000e+00 : f32
    %490 = vector.broadcast %cst_139 : f32 to vector<1x32xf32>
    %cst_140 = arith.constant 0.000000e+00 : f32
    %491 = vector.broadcast %cst_140 : f32 to vector<1x32xf32>
    %c0_141 = arith.constant 0 : index
    %c0_142 = arith.constant 0 : index
    %492 = vector.load %arg10[%c0_141, %c0_142] : memref<16x128xf32, #tpu.memory_space<vmem>>, vector<1x128xf32>
    %cst_143 = arith.constant dense<0.000000e+00> : vector<1x128xf32>
    %493 = tpu.matmul %490, %489, %cst_143 {dimension_numbers = #tpu.dot_dimension_numbers<[1], [0], [0], [1], [0, 0, 1, 1], [], []>} : vector<1x32xf32>, vector<32x128xf32>, vector<1x128xf32> -> vector<1x128xf32>
    %494 = arith.addf %492, %493 : vector<1x128xf32>
    %495 = vector.extract_strided_slice %494 {offsets = [0, 0], sizes = [1, 32], strides = [1, 1]} : vector<1x128xf32> to vector<1x32xf32>
    %496 = arith.negf %495 : vector<1x32xf32>
    %497 = math.exp %496 : vector<1x32xf32>
    %cst_144 = arith.constant 1.000000e+00 : f32
    %498 = vector.broadcast %cst_144 : f32 to vector<1x32xf32>
    %499 = arith.addf %498, %497 : vector<1x32xf32>
    %500 = arith.divf %498, %499 : vector<1x32xf32>
    %501 = vector.extract_strided_slice %494 {offsets = [0, 32], sizes = [1, 32], strides = [1, 1]} : vector<1x128xf32> to vector<1x32xf32>
    %502 = arith.negf %501 : vector<1x32xf32>
    %503 = math.exp %502 : vector<1x32xf32>
    %cst_145 = arith.constant 1.000000e+00 : f32
    %504 = vector.broadcast %cst_145 : f32 to vector<1x32xf32>
    %505 = arith.addf %504, %503 : vector<1x32xf32>
    %506 = arith.divf %504, %505 : vector<1x32xf32>
    %507 = vector.extract_strided_slice %494 {offsets = [0, 64], sizes = [1, 32], strides = [1, 1]} : vector<1x128xf32> to vector<1x32xf32>
    %508 = math.tanh %507 : vector<1x32xf32>
    %509 = vector.extract_strided_slice %494 {offsets = [0, 96], sizes = [1, 32], strides = [1, 1]} : vector<1x128xf32> to vector<1x32xf32>
    %510 = arith.negf %509 : vector<1x32xf32>
    %511 = math.exp %510 : vector<1x32xf32>
    %cst_146 = arith.constant 1.000000e+00 : f32
    %512 = vector.broadcast %cst_146 : f32 to vector<1x32xf32>
    %513 = arith.addf %512, %511 : vector<1x32xf32>
    %514 = arith.divf %512, %513 : vector<1x32xf32>
    %515 = arith.mulf %506, %491 : vector<1x32xf32>
    %516 = arith.mulf %500, %508 : vector<1x32xf32>
    %517 = arith.addf %515, %516 : vector<1x32xf32>
    %518 = math.tanh %517 : vector<1x32xf32>
    %519 = arith.mulf %514, %518 : vector<1x32xf32>
    %c0_147 = arith.constant 0 : index
    %c0_148 = arith.constant 0 : index
    %520 = vector.load %arg9[%c0_147, %c0_148] : memref<16x32xf32, #tpu.memory_space<vmem>>, vector<1x32xf32>
    tpu.vector_store %arg9[%c0_147, %c0_148], %519 {strides = array<i32>} : memref<16x32xf32, #tpu.memory_space<vmem>>, vector<1x32xf32>,
    %c1_149 = arith.constant 1 : index
    %c0_150 = arith.constant 0 : index
    %521 = vector.load %arg10[%c1_149, %c0_150] : memref<16x128xf32, #tpu.memory_space<vmem>>, vector<1x128xf32>
    %cst_151 = arith.constant dense<0.000000e+00> : vector<1x128xf32>
    %522 = tpu.matmul %519, %489, %cst_151 {dimension_numbers = #tpu.dot_dimension_numbers<[1], [0], [0], [1], [0, 0, 1, 1], [], []>} : vector<1x32xf32>, vector<32x128xf32>, vector<1x128xf32> -> vector<1x128xf32>
    %523 = arith.addf %521, %522 : vector<1x128xf32>
    %524 = vector.extract_strided_slice %523 {offsets = [0, 0], sizes = [1, 32], strides = [1, 1]} : vector<1x128xf32> to vector<1x32xf32>
    %525 = arith.negf %524 : vector<1x32xf32>
    %526 = math.exp %525 : vector<1x32xf32>
    %cst_152 = arith.constant 1.000000e+00 : f32
    %527 = vector.broadcast %cst_152 : f32 to vector<1x32xf32>
    %528 = arith.addf %527, %526 : vector<1x32xf32>
    %529 = arith.divf %527, %528 : vector<1x32xf32>
    %530 = vector.extract_strided_slice %523 {offsets = [0, 32], sizes = [1, 32], strides = [1, 1]} : vector<1x128xf32> to vector<1x32xf32>
    %531 = arith.negf %530 : vector<1x32xf32>
    %532 = math.exp %531 : vector<1x32xf32>
    %cst_153 = arith.constant 1.000000e+00 : f32
    %533 = vector.broadcast %cst_153 : f32 to vector<1x32xf32>
    %534 = arith.addf %533, %532 : vector<1x32xf32>
    %535 = arith.divf %533, %534 : vector<1x32xf32>
    %536 = vector.extract_strided_slice %523 {offsets = [0, 64], sizes = [1, 32], strides = [1, 1]} : vector<1x128xf32> to vector<1x32xf32>
    %537 = math.tanh %536 : vector<1x32xf32>
    %538 = vector.extract_strided_slice %523 {offsets = [0, 96], sizes = [1, 32], strides = [1, 1]} : vector<1x128xf32> to vector<1x32xf32>
    %539 = arith.negf %538 : vector<1x32xf32>
    %540 = math.exp %539 : vector<1x32xf32>
    %cst_154 = arith.constant 1.000000e+00 : f32
    %541 = vector.broadcast %cst_154 : f32 to vector<1x32xf32>
    %542 = arith.addf %541, %540 : vector<1x32xf32>
    %543 = arith.divf %541, %542 : vector<1x32xf32>
    %544 = arith.mulf %535, %517 : vector<1x32xf32>
    %545 = arith.mulf %529, %537 : vector<1x32xf32>
    %546 = arith.addf %544, %545 : vector<1x32xf32>
    %547 = math.tanh %546 : vector<1x32xf32>
    %548 = arith.mulf %543, %547 : vector<1x32xf32>
    %c1_155 = arith.constant 1 : index
    %c0_156 = arith.constant 0 : index
    %549 = vector.load %arg9[%c1_155, %c0_156] : memref<16x32xf32, #tpu.memory_space<vmem>>, vector<1x32xf32>
    tpu.vector_store %arg9[%c1_155, %c0_156], %548 {strides = array<i32>} : memref<16x32xf32, #tpu.memory_space<vmem>>, vector<1x32xf32>,
    %c2_157 = arith.constant 2 : index
    %c0_158 = arith.constant 0 : index
    %550 = vector.load %arg10[%c2_157, %c0_158] : memref<16x128xf32, #tpu.memory_space<vmem>>, vector<1x128xf32>
    %cst_159 = arith.constant dense<0.000000e+00> : vector<1x128xf32>
    %551 = tpu.matmul %548, %489, %cst_159 {dimension_numbers = #tpu.dot_dimension_numbers<[1], [0], [0], [1], [0, 0, 1, 1], [], []>} : vector<1x32xf32>, vector<32x128xf32>, vector<1x128xf32> -> vector<1x128xf32>
    %552 = arith.addf %550, %551 : vector<1x128xf32>
    %553 = vector.extract_strided_slice %552 {offsets = [0, 0], sizes = [1, 32], strides = [1, 1]} : vector<1x128xf32> to vector<1x32xf32>
    %554 = arith.negf %553 : vector<1x32xf32>
    %555 = math.exp %554 : vector<1x32xf32>
    %cst_160 = arith.constant 1.000000e+00 : f32
    %556 = vector.broadcast %cst_160 : f32 to vector<1x32xf32>
    %557 = arith.addf %556, %555 : vector<1x32xf32>
    %558 = arith.divf %556, %557 : vector<1x32xf32>
    %559 = vector.extract_strided_slice %552 {offsets = [0, 32], sizes = [1, 32], strides = [1, 1]} : vector<1x128xf32> to vector<1x32xf32>
    %560 = arith.negf %559 : vector<1x32xf32>
    %561 = math.exp %560 : vector<1x32xf32>
    %cst_161 = arith.constant 1.000000e+00 : f32
    %562 = vector.broadcast %cst_161 : f32 to vector<1x32xf32>
    %563 = arith.addf %562, %561 : vector<1x32xf32>
    %564 = arith.divf %562, %563 : vector<1x32xf32>
    %565 = vector.extract_strided_slice %552 {offsets = [0, 64], sizes = [1, 32], strides = [1, 1]} : vector<1x128xf32> to vector<1x32xf32>
    %566 = math.tanh %565 : vector<1x32xf32>
    %567 = vector.extract_strided_slice %552 {offsets = [0, 96], sizes = [1, 32], strides = [1, 1]} : vector<1x128xf32> to vector<1x32xf32>
    %568 = arith.negf %567 : vector<1x32xf32>
    %569 = math.exp %568 : vector<1x32xf32>
    %cst_162 = arith.constant 1.000000e+00 : f32
    %570 = vector.broadcast %cst_162 : f32 to vector<1x32xf32>
    %571 = arith.addf %570, %569 : vector<1x32xf32>
    %572 = arith.divf %570, %571 : vector<1x32xf32>
    %573 = arith.mulf %564, %546 : vector<1x32xf32>
    %574 = arith.mulf %558, %566 : vector<1x32xf32>
    %575 = arith.addf %573, %574 : vector<1x32xf32>
    %576 = math.tanh %575 : vector<1x32xf32>
    %577 = arith.mulf %572, %576 : vector<1x32xf32>
    %c2_163 = arith.constant 2 : index
    %c0_164 = arith.constant 0 : index
    %578 = vector.load %arg9[%c2_163, %c0_164] : memref<16x32xf32, #tpu.memory_space<vmem>>, vector<1x32xf32>
    tpu.vector_store %arg9[%c2_163, %c0_164], %577 {strides = array<i32>} : memref<16x32xf32, #tpu.memory_space<vmem>>, vector<1x32xf32>,
    %c3_165 = arith.constant 3 : index
    %c0_166 = arith.constant 0 : index
    %579 = vector.load %arg10[%c3_165, %c0_166] : memref<16x128xf32, #tpu.memory_space<vmem>>, vector<1x128xf32>
    %cst_167 = arith.constant dense<0.000000e+00> : vector<1x128xf32>
    %580 = tpu.matmul %577, %489, %cst_167 {dimension_numbers = #tpu.dot_dimension_numbers<[1], [0], [0], [1], [0, 0, 1, 1], [], []>} : vector<1x32xf32>, vector<32x128xf32>, vector<1x128xf32> -> vector<1x128xf32>
    %581 = arith.addf %579, %580 : vector<1x128xf32>
    %582 = vector.extract_strided_slice %581 {offsets = [0, 0], sizes = [1, 32], strides = [1, 1]} : vector<1x128xf32> to vector<1x32xf32>
    %583 = arith.negf %582 : vector<1x32xf32>
    %584 = math.exp %583 : vector<1x32xf32>
    %cst_168 = arith.constant 1.000000e+00 : f32
    %585 = vector.broadcast %cst_168 : f32 to vector<1x32xf32>
    %586 = arith.addf %585, %584 : vector<1x32xf32>
    %587 = arith.divf %585, %586 : vector<1x32xf32>
    %588 = vector.extract_strided_slice %581 {offsets = [0, 32], sizes = [1, 32], strides = [1, 1]} : vector<1x128xf32> to vector<1x32xf32>
    %589 = arith.negf %588 : vector<1x32xf32>
    %590 = math.exp %589 : vector<1x32xf32>
    %cst_169 = arith.constant 1.000000e+00 : f32
    %591 = vector.broadcast %cst_169 : f32 to vector<1x32xf32>
    %592 = arith.addf %591, %590 : vector<1x32xf32>
    %593 = arith.divf %591, %592 : vector<1x32xf32>
    %594 = vector.extract_strided_slice %581 {offsets = [0, 64], sizes = [1, 32], strides = [1, 1]} : vector<1x128xf32> to vector<1x32xf32>
    %595 = math.tanh %594 : vector<1x32xf32>
    %596 = vector.extract_strided_slice %581 {offsets = [0, 96], sizes = [1, 32], strides = [1, 1]} : vector<1x128xf32> to vector<1x32xf32>
    %597 = arith.negf %596 : vector<1x32xf32>
    %598 = math.exp %597 : vector<1x32xf32>
    %cst_170 = arith.constant 1.000000e+00 : f32
    %599 = vector.broadcast %cst_170 : f32 to vector<1x32xf32>
    %600 = arith.addf %599, %598 : vector<1x32xf32>
    %601 = arith.divf %599, %600 : vector<1x32xf32>
    %602 = arith.mulf %593, %575 : vector<1x32xf32>
    %603 = arith.mulf %587, %595 : vector<1x32xf32>
    %604 = arith.addf %602, %603 : vector<1x32xf32>
    %605 = math.tanh %604 : vector<1x32xf32>
    %606 = arith.mulf %601, %605 : vector<1x32xf32>
    %c3_171 = arith.constant 3 : index
    %c0_172 = arith.constant 0 : index
    %607 = vector.load %arg9[%c3_171, %c0_172] : memref<16x32xf32, #tpu.memory_space<vmem>>, vector<1x32xf32>
    tpu.vector_store %arg9[%c3_171, %c0_172], %606 {strides = array<i32>} : memref<16x32xf32, #tpu.memory_space<vmem>>, vector<1x32xf32>,
    %c4_173 = arith.constant 4 : index
    %c0_174 = arith.constant 0 : index
    %608 = vector.load %arg10[%c4_173, %c0_174] : memref<16x128xf32, #tpu.memory_space<vmem>>, vector<1x128xf32>
    %cst_175 = arith.constant dense<0.000000e+00> : vector<1x128xf32>
    %609 = tpu.matmul %606, %489, %cst_175 {dimension_numbers = #tpu.dot_dimension_numbers<[1], [0], [0], [1], [0, 0, 1, 1], [], []>} : vector<1x32xf32>, vector<32x128xf32>, vector<1x128xf32> -> vector<1x128xf32>
    %610 = arith.addf %608, %609 : vector<1x128xf32>
    %611 = vector.extract_strided_slice %610 {offsets = [0, 0], sizes = [1, 32], strides = [1, 1]} : vector<1x128xf32> to vector<1x32xf32>
    %612 = arith.negf %611 : vector<1x32xf32>
    %613 = math.exp %612 : vector<1x32xf32>
    %cst_176 = arith.constant 1.000000e+00 : f32
    %614 = vector.broadcast %cst_176 : f32 to vector<1x32xf32>
    %615 = arith.addf %614, %613 : vector<1x32xf32>
    %616 = arith.divf %614, %615 : vector<1x32xf32>
    %617 = vector.extract_strided_slice %610 {offsets = [0, 32], sizes = [1, 32], strides = [1, 1]} : vector<1x128xf32> to vector<1x32xf32>
    %618 = arith.negf %617 : vector<1x32xf32>
    %619 = math.exp %618 : vector<1x32xf32>
    %cst_177 = arith.constant 1.000000e+00 : f32
    %620 = vector.broadcast %cst_177 : f32 to vector<1x32xf32>
    %621 = arith.addf %620, %619 : vector<1x32xf32>
    %622 = arith.divf %620, %621 : vector<1x32xf32>
    %623 = vector.extract_strided_slice %610 {offsets = [0, 64], sizes = [1, 32], strides = [1, 1]} : vector<1x128xf32> to vector<1x32xf32>
    %624 = math.tanh %623 : vector<1x32xf32>
    %625 = vector.extract_strided_slice %610 {offsets = [0, 96], sizes = [1, 32], strides = [1, 1]} : vector<1x128xf32> to vector<1x32xf32>
    %626 = arith.negf %625 : vector<1x32xf32>
    %627 = math.exp %626 : vector<1x32xf32>
    %cst_178 = arith.constant 1.000000e+00 : f32
    %628 = vector.broadcast %cst_178 : f32 to vector<1x32xf32>
    %629 = arith.addf %628, %627 : vector<1x32xf32>
    %630 = arith.divf %628, %629 : vector<1x32xf32>
    %631 = arith.mulf %622, %604 : vector<1x32xf32>
    %632 = arith.mulf %616, %624 : vector<1x32xf32>
    %633 = arith.addf %631, %632 : vector<1x32xf32>
    %634 = math.tanh %633 : vector<1x32xf32>
    %635 = arith.mulf %630, %634 : vector<1x32xf32>
    %c4_179 = arith.constant 4 : index
    %c0_180 = arith.constant 0 : index
    %636 = vector.load %arg9[%c4_179, %c0_180] : memref<16x32xf32, #tpu.memory_space<vmem>>, vector<1x32xf32>
    tpu.vector_store %arg9[%c4_179, %c0_180], %635 {strides = array<i32>} : memref<16x32xf32, #tpu.memory_space<vmem>>, vector<1x32xf32>,
    %c5_181 = arith.constant 5 : index
    %c0_182 = arith.constant 0 : index
    %637 = vector.load %arg10[%c5_181, %c0_182] : memref<16x128xf32, #tpu.memory_space<vmem>>, vector<1x128xf32>
    %cst_183 = arith.constant dense<0.000000e+00> : vector<1x128xf32>
    %638 = tpu.matmul %635, %489, %cst_183 {dimension_numbers = #tpu.dot_dimension_numbers<[1], [0], [0], [1], [0, 0, 1, 1], [], []>} : vector<1x32xf32>, vector<32x128xf32>, vector<1x128xf32> -> vector<1x128xf32>
    %639 = arith.addf %637, %638 : vector<1x128xf32>
    %640 = vector.extract_strided_slice %639 {offsets = [0, 0], sizes = [1, 32], strides = [1, 1]} : vector<1x128xf32> to vector<1x32xf32>
    %641 = arith.negf %640 : vector<1x32xf32>
    %642 = math.exp %641 : vector<1x32xf32>
    %cst_184 = arith.constant 1.000000e+00 : f32
    %643 = vector.broadcast %cst_184 : f32 to vector<1x32xf32>
    %644 = arith.addf %643, %642 : vector<1x32xf32>
    %645 = arith.divf %643, %644 : vector<1x32xf32>
    %646 = vector.extract_strided_slice %639 {offsets = [0, 32], sizes = [1, 32], strides = [1, 1]} : vector<1x128xf32> to vector<1x32xf32>
    %647 = arith.negf %646 : vector<1x32xf32>
    %648 = math.exp %647 : vector<1x32xf32>
    %cst_185 = arith.constant 1.000000e+00 : f32
    %649 = vector.broadcast %cst_185 : f32 to vector<1x32xf32>
    %650 = arith.addf %649, %648 : vector<1x32xf32>
    %651 = arith.divf %649, %650 : vector<1x32xf32>
    %652 = vector.extract_strided_slice %639 {offsets = [0, 64], sizes = [1, 32], strides = [1, 1]} : vector<1x128xf32> to vector<1x32xf32>
    %653 = math.tanh %652 : vector<1x32xf32>
    %654 = vector.extract_strided_slice %639 {offsets = [0, 96], sizes = [1, 32], strides = [1, 1]} : vector<1x128xf32> to vector<1x32xf32>
    %655 = arith.negf %654 : vector<1x32xf32>
    %656 = math.exp %655 : vector<1x32xf32>
    %cst_186 = arith.constant 1.000000e+00 : f32
    %657 = vector.broadcast %cst_186 : f32 to vector<1x32xf32>
    %658 = arith.addf %657, %656 : vector<1x32xf32>
    %659 = arith.divf %657, %658 : vector<1x32xf32>
    %660 = arith.mulf %651, %633 : vector<1x32xf32>
    %661 = arith.mulf %645, %653 : vector<1x32xf32>
    %662 = arith.addf %660, %661 : vector<1x32xf32>
    %663 = math.tanh %662 : vector<1x32xf32>
    %664 = arith.mulf %659, %663 : vector<1x32xf32>
    %c5_187 = arith.constant 5 : index
    %c0_188 = arith.constant 0 : index
    %665 = vector.load %arg9[%c5_187, %c0_188] : memref<16x32xf32, #tpu.memory_space<vmem>>, vector<1x32xf32>
    tpu.vector_store %arg9[%c5_187, %c0_188], %664 {strides = array<i32>} : memref<16x32xf32, #tpu.memory_space<vmem>>, vector<1x32xf32>,
    %c6_189 = arith.constant 6 : index
    %c0_190 = arith.constant 0 : index
    %666 = vector.load %arg10[%c6_189, %c0_190] : memref<16x128xf32, #tpu.memory_space<vmem>>, vector<1x128xf32>
    %cst_191 = arith.constant dense<0.000000e+00> : vector<1x128xf32>
    %667 = tpu.matmul %664, %489, %cst_191 {dimension_numbers = #tpu.dot_dimension_numbers<[1], [0], [0], [1], [0, 0, 1, 1], [], []>} : vector<1x32xf32>, vector<32x128xf32>, vector<1x128xf32> -> vector<1x128xf32>
    %668 = arith.addf %666, %667 : vector<1x128xf32>
    %669 = vector.extract_strided_slice %668 {offsets = [0, 0], sizes = [1, 32], strides = [1, 1]} : vector<1x128xf32> to vector<1x32xf32>
    %670 = arith.negf %669 : vector<1x32xf32>
    %671 = math.exp %670 : vector<1x32xf32>
    %cst_192 = arith.constant 1.000000e+00 : f32
    %672 = vector.broadcast %cst_192 : f32 to vector<1x32xf32>
    %673 = arith.addf %672, %671 : vector<1x32xf32>
    %674 = arith.divf %672, %673 : vector<1x32xf32>
    %675 = vector.extract_strided_slice %668 {offsets = [0, 32], sizes = [1, 32], strides = [1, 1]} : vector<1x128xf32> to vector<1x32xf32>
    %676 = arith.negf %675 : vector<1x32xf32>
    %677 = math.exp %676 : vector<1x32xf32>
    %cst_193 = arith.constant 1.000000e+00 : f32
    %678 = vector.broadcast %cst_193 : f32 to vector<1x32xf32>
    %679 = arith.addf %678, %677 : vector<1x32xf32>
    %680 = arith.divf %678, %679 : vector<1x32xf32>
    %681 = vector.extract_strided_slice %668 {offsets = [0, 64], sizes = [1, 32], strides = [1, 1]} : vector<1x128xf32> to vector<1x32xf32>
    %682 = math.tanh %681 : vector<1x32xf32>
    %683 = vector.extract_strided_slice %668 {offsets = [0, 96], sizes = [1, 32], strides = [1, 1]} : vector<1x128xf32> to vector<1x32xf32>
    %684 = arith.negf %683 : vector<1x32xf32>
    %685 = math.exp %684 : vector<1x32xf32>
    %cst_194 = arith.constant 1.000000e+00 : f32
    %686 = vector.broadcast %cst_194 : f32 to vector<1x32xf32>
    %687 = arith.addf %686, %685 : vector<1x32xf32>
    %688 = arith.divf %686, %687 : vector<1x32xf32>
    %689 = arith.mulf %680, %662 : vector<1x32xf32>
    %690 = arith.mulf %674, %682 : vector<1x32xf32>
    %691 = arith.addf %689, %690 : vector<1x32xf32>
    %692 = math.tanh %691 : vector<1x32xf32>
    %693 = arith.mulf %688, %692 : vector<1x32xf32>
    %c6_195 = arith.constant 6 : index
    %c0_196 = arith.constant 0 : index
    %694 = vector.load %arg9[%c6_195, %c0_196] : memref<16x32xf32, #tpu.memory_space<vmem>>, vector<1x32xf32>
    tpu.vector_store %arg9[%c6_195, %c0_196], %693 {strides = array<i32>} : memref<16x32xf32, #tpu.memory_space<vmem>>, vector<1x32xf32>,
    %c7_197 = arith.constant 7 : index
    %c0_198 = arith.constant 0 : index
    %695 = vector.load %arg10[%c7_197, %c0_198] : memref<16x128xf32, #tpu.memory_space<vmem>>, vector<1x128xf32>
    %cst_199 = arith.constant dense<0.000000e+00> : vector<1x128xf32>
    %696 = tpu.matmul %693, %489, %cst_199 {dimension_numbers = #tpu.dot_dimension_numbers<[1], [0], [0], [1], [0, 0, 1, 1], [], []>} : vector<1x32xf32>, vector<32x128xf32>, vector<1x128xf32> -> vector<1x128xf32>
    %697 = arith.addf %695, %696 : vector<1x128xf32>
    %698 = vector.extract_strided_slice %697 {offsets = [0, 0], sizes = [1, 32], strides = [1, 1]} : vector<1x128xf32> to vector<1x32xf32>
    %699 = arith.negf %698 : vector<1x32xf32>
    %700 = math.exp %699 : vector<1x32xf32>
    %cst_200 = arith.constant 1.000000e+00 : f32
    %701 = vector.broadcast %cst_200 : f32 to vector<1x32xf32>
    %702 = arith.addf %701, %700 : vector<1x32xf32>
    %703 = arith.divf %701, %702 : vector<1x32xf32>
    %704 = vector.extract_strided_slice %697 {offsets = [0, 32], sizes = [1, 32], strides = [1, 1]} : vector<1x128xf32> to vector<1x32xf32>
    %705 = arith.negf %704 : vector<1x32xf32>
    %706 = math.exp %705 : vector<1x32xf32>
    %cst_201 = arith.constant 1.000000e+00 : f32
    %707 = vector.broadcast %cst_201 : f32 to vector<1x32xf32>
    %708 = arith.addf %707, %706 : vector<1x32xf32>
    %709 = arith.divf %707, %708 : vector<1x32xf32>
    %710 = vector.extract_strided_slice %697 {offsets = [0, 64], sizes = [1, 32], strides = [1, 1]} : vector<1x128xf32> to vector<1x32xf32>
    %711 = math.tanh %710 : vector<1x32xf32>
    %712 = vector.extract_strided_slice %697 {offsets = [0, 96], sizes = [1, 32], strides = [1, 1]} : vector<1x128xf32> to vector<1x32xf32>
    %713 = arith.negf %712 : vector<1x32xf32>
    %714 = math.exp %713 : vector<1x32xf32>
    %cst_202 = arith.constant 1.000000e+00 : f32
    %715 = vector.broadcast %cst_202 : f32 to vector<1x32xf32>
    %716 = arith.addf %715, %714 : vector<1x32xf32>
    %717 = arith.divf %715, %716 : vector<1x32xf32>
    %718 = arith.mulf %709, %691 : vector<1x32xf32>
    %719 = arith.mulf %703, %711 : vector<1x32xf32>
    %720 = arith.addf %718, %719 : vector<1x32xf32>
    %721 = math.tanh %720 : vector<1x32xf32>
    %722 = arith.mulf %717, %721 : vector<1x32xf32>
    %c7_203 = arith.constant 7 : index
    %c0_204 = arith.constant 0 : index
    %723 = vector.load %arg9[%c7_203, %c0_204] : memref<16x32xf32, #tpu.memory_space<vmem>>, vector<1x32xf32>
    tpu.vector_store %arg9[%c7_203, %c0_204], %722 {strides = array<i32>} : memref<16x32xf32, #tpu.memory_space<vmem>>, vector<1x32xf32>,
    %c8_205 = arith.constant 8 : index
    %c0_206 = arith.constant 0 : index
    %724 = vector.load %arg10[%c8_205, %c0_206] : memref<16x128xf32, #tpu.memory_space<vmem>>, vector<1x128xf32>
    %cst_207 = arith.constant dense<0.000000e+00> : vector<1x128xf32>
    %725 = tpu.matmul %722, %489, %cst_207 {dimension_numbers = #tpu.dot_dimension_numbers<[1], [0], [0], [1], [0, 0, 1, 1], [], []>} : vector<1x32xf32>, vector<32x128xf32>, vector<1x128xf32> -> vector<1x128xf32>
    %726 = arith.addf %724, %725 : vector<1x128xf32>
    %727 = vector.extract_strided_slice %726 {offsets = [0, 0], sizes = [1, 32], strides = [1, 1]} : vector<1x128xf32> to vector<1x32xf32>
    %728 = arith.negf %727 : vector<1x32xf32>
    %729 = math.exp %728 : vector<1x32xf32>
    %cst_208 = arith.constant 1.000000e+00 : f32
    %730 = vector.broadcast %cst_208 : f32 to vector<1x32xf32>
    %731 = arith.addf %730, %729 : vector<1x32xf32>
    %732 = arith.divf %730, %731 : vector<1x32xf32>
    %733 = vector.extract_strided_slice %726 {offsets = [0, 32], sizes = [1, 32], strides = [1, 1]} : vector<1x128xf32> to vector<1x32xf32>
    %734 = arith.negf %733 : vector<1x32xf32>
    %735 = math.exp %734 : vector<1x32xf32>
    %cst_209 = arith.constant 1.000000e+00 : f32
    %736 = vector.broadcast %cst_209 : f32 to vector<1x32xf32>
    %737 = arith.addf %736, %735 : vector<1x32xf32>
    %738 = arith.divf %736, %737 : vector<1x32xf32>
    %739 = vector.extract_strided_slice %726 {offsets = [0, 64], sizes = [1, 32], strides = [1, 1]} : vector<1x128xf32> to vector<1x32xf32>
    %740 = math.tanh %739 : vector<1x32xf32>
    %741 = vector.extract_strided_slice %726 {offsets = [0, 96], sizes = [1, 32], strides = [1, 1]} : vector<1x128xf32> to vector<1x32xf32>
    %742 = arith.negf %741 : vector<1x32xf32>
    %743 = math.exp %742 : vector<1x32xf32>
    %cst_210 = arith.constant 1.000000e+00 : f32
    %744 = vector.broadcast %cst_210 : f32 to vector<1x32xf32>
    %745 = arith.addf %744, %743 : vector<1x32xf32>
    %746 = arith.divf %744, %745 : vector<1x32xf32>
    %747 = arith.mulf %738, %720 : vector<1x32xf32>
    %748 = arith.mulf %732, %740 : vector<1x32xf32>
    %749 = arith.addf %747, %748 : vector<1x32xf32>
    %750 = math.tanh %749 : vector<1x32xf32>
    %751 = arith.mulf %746, %750 : vector<1x32xf32>
    %c8_211 = arith.constant 8 : index
    %c0_212 = arith.constant 0 : index
    %752 = vector.load %arg9[%c8_211, %c0_212] : memref<16x32xf32, #tpu.memory_space<vmem>>, vector<1x32xf32>
    tpu.vector_store %arg9[%c8_211, %c0_212], %751 {strides = array<i32>} : memref<16x32xf32, #tpu.memory_space<vmem>>, vector<1x32xf32>,
    %c9_213 = arith.constant 9 : index
    %c0_214 = arith.constant 0 : index
    %753 = vector.load %arg10[%c9_213, %c0_214] : memref<16x128xf32, #tpu.memory_space<vmem>>, vector<1x128xf32>
    %cst_215 = arith.constant dense<0.000000e+00> : vector<1x128xf32>
    %754 = tpu.matmul %751, %489, %cst_215 {dimension_numbers = #tpu.dot_dimension_numbers<[1], [0], [0], [1], [0, 0, 1, 1], [], []>} : vector<1x32xf32>, vector<32x128xf32>, vector<1x128xf32> -> vector<1x128xf32>
    %755 = arith.addf %753, %754 : vector<1x128xf32>
    %756 = vector.extract_strided_slice %755 {offsets = [0, 0], sizes = [1, 32], strides = [1, 1]} : vector<1x128xf32> to vector<1x32xf32>
    %757 = arith.negf %756 : vector<1x32xf32>
    %758 = math.exp %757 : vector<1x32xf32>
    %cst_216 = arith.constant 1.000000e+00 : f32
    %759 = vector.broadcast %cst_216 : f32 to vector<1x32xf32>
    %760 = arith.addf %759, %758 : vector<1x32xf32>
    %761 = arith.divf %759, %760 : vector<1x32xf32>
    %762 = vector.extract_strided_slice %755 {offsets = [0, 32], sizes = [1, 32], strides = [1, 1]} : vector<1x128xf32> to vector<1x32xf32>
    %763 = arith.negf %762 : vector<1x32xf32>
    %764 = math.exp %763 : vector<1x32xf32>
    %cst_217 = arith.constant 1.000000e+00 : f32
    %765 = vector.broadcast %cst_217 : f32 to vector<1x32xf32>
    %766 = arith.addf %765, %764 : vector<1x32xf32>
    %767 = arith.divf %765, %766 : vector<1x32xf32>
    %768 = vector.extract_strided_slice %755 {offsets = [0, 64], sizes = [1, 32], strides = [1, 1]} : vector<1x128xf32> to vector<1x32xf32>
    %769 = math.tanh %768 : vector<1x32xf32>
    %770 = vector.extract_strided_slice %755 {offsets = [0, 96], sizes = [1, 32], strides = [1, 1]} : vector<1x128xf32> to vector<1x32xf32>
    %771 = arith.negf %770 : vector<1x32xf32>
    %772 = math.exp %771 : vector<1x32xf32>
    %cst_218 = arith.constant 1.000000e+00 : f32
    %773 = vector.broadcast %cst_218 : f32 to vector<1x32xf32>
    %774 = arith.addf %773, %772 : vector<1x32xf32>
    %775 = arith.divf %773, %774 : vector<1x32xf32>
    %776 = arith.mulf %767, %749 : vector<1x32xf32>
    %777 = arith.mulf %761, %769 : vector<1x32xf32>
    %778 = arith.addf %776, %777 : vector<1x32xf32>
    %779 = math.tanh %778 : vector<1x32xf32>
    %780 = arith.mulf %775, %779 : vector<1x32xf32>
    %c9_219 = arith.constant 9 : index
    %c0_220 = arith.constant 0 : index
    %781 = vector.load %arg9[%c9_219, %c0_220] : memref<16x32xf32, #tpu.memory_space<vmem>>, vector<1x32xf32>
    tpu.vector_store %arg9[%c9_219, %c0_220], %780 {strides = array<i32>} : memref<16x32xf32, #tpu.memory_space<vmem>>, vector<1x32xf32>,
    %c10_221 = arith.constant 10 : index
    %c0_222 = arith.constant 0 : index
    %782 = vector.load %arg10[%c10_221, %c0_222] : memref<16x128xf32, #tpu.memory_space<vmem>>, vector<1x128xf32>
    %cst_223 = arith.constant dense<0.000000e+00> : vector<1x128xf32>
    %783 = tpu.matmul %780, %489, %cst_223 {dimension_numbers = #tpu.dot_dimension_numbers<[1], [0], [0], [1], [0, 0, 1, 1], [], []>} : vector<1x32xf32>, vector<32x128xf32>, vector<1x128xf32> -> vector<1x128xf32>
    %784 = arith.addf %782, %783 : vector<1x128xf32>
    %785 = vector.extract_strided_slice %784 {offsets = [0, 0], sizes = [1, 32], strides = [1, 1]} : vector<1x128xf32> to vector<1x32xf32>
    %786 = arith.negf %785 : vector<1x32xf32>
    %787 = math.exp %786 : vector<1x32xf32>
    %cst_224 = arith.constant 1.000000e+00 : f32
    %788 = vector.broadcast %cst_224 : f32 to vector<1x32xf32>
    %789 = arith.addf %788, %787 : vector<1x32xf32>
    %790 = arith.divf %788, %789 : vector<1x32xf32>
    %791 = vector.extract_strided_slice %784 {offsets = [0, 32], sizes = [1, 32], strides = [1, 1]} : vector<1x128xf32> to vector<1x32xf32>
    %792 = arith.negf %791 : vector<1x32xf32>
    %793 = math.exp %792 : vector<1x32xf32>
    %cst_225 = arith.constant 1.000000e+00 : f32
    %794 = vector.broadcast %cst_225 : f32 to vector<1x32xf32>
    %795 = arith.addf %794, %793 : vector<1x32xf32>
    %796 = arith.divf %794, %795 : vector<1x32xf32>
    %797 = vector.extract_strided_slice %784 {offsets = [0, 64], sizes = [1, 32], strides = [1, 1]} : vector<1x128xf32> to vector<1x32xf32>
    %798 = math.tanh %797 : vector<1x32xf32>
    %799 = vector.extract_strided_slice %784 {offsets = [0, 96], sizes = [1, 32], strides = [1, 1]} : vector<1x128xf32> to vector<1x32xf32>
    %800 = arith.negf %799 : vector<1x32xf32>
    %801 = math.exp %800 : vector<1x32xf32>
    %cst_226 = arith.constant 1.000000e+00 : f32
    %802 = vector.broadcast %cst_226 : f32 to vector<1x32xf32>
    %803 = arith.addf %802, %801 : vector<1x32xf32>
    %804 = arith.divf %802, %803 : vector<1x32xf32>
    %805 = arith.mulf %796, %778 : vector<1x32xf32>
    %806 = arith.mulf %790, %798 : vector<1x32xf32>
    %807 = arith.addf %805, %806 : vector<1x32xf32>
    %808 = math.tanh %807 : vector<1x32xf32>
    %809 = arith.mulf %804, %808 : vector<1x32xf32>
    %c10_227 = arith.constant 10 : index
    %c0_228 = arith.constant 0 : index
    %810 = vector.load %arg9[%c10_227, %c0_228] : memref<16x32xf32, #tpu.memory_space<vmem>>, vector<1x32xf32>
    tpu.vector_store %arg9[%c10_227, %c0_228], %809 {strides = array<i32>} : memref<16x32xf32, #tpu.memory_space<vmem>>, vector<1x32xf32>,
    %c11_229 = arith.constant 11 : index
    %c0_230 = arith.constant 0 : index
    %811 = vector.load %arg10[%c11_229, %c0_230] : memref<16x128xf32, #tpu.memory_space<vmem>>, vector<1x128xf32>
    %cst_231 = arith.constant dense<0.000000e+00> : vector<1x128xf32>
    %812 = tpu.matmul %809, %489, %cst_231 {dimension_numbers = #tpu.dot_dimension_numbers<[1], [0], [0], [1], [0, 0, 1, 1], [], []>} : vector<1x32xf32>, vector<32x128xf32>, vector<1x128xf32> -> vector<1x128xf32>
    %813 = arith.addf %811, %812 : vector<1x128xf32>
    %814 = vector.extract_strided_slice %813 {offsets = [0, 0], sizes = [1, 32], strides = [1, 1]} : vector<1x128xf32> to vector<1x32xf32>
    %815 = arith.negf %814 : vector<1x32xf32>
    %816 = math.exp %815 : vector<1x32xf32>
    %cst_232 = arith.constant 1.000000e+00 : f32
    %817 = vector.broadcast %cst_232 : f32 to vector<1x32xf32>
    %818 = arith.addf %817, %816 : vector<1x32xf32>
    %819 = arith.divf %817, %818 : vector<1x32xf32>
    %820 = vector.extract_strided_slice %813 {offsets = [0, 32], sizes = [1, 32], strides = [1, 1]} : vector<1x128xf32> to vector<1x32xf32>
    %821 = arith.negf %820 : vector<1x32xf32>
    %822 = math.exp %821 : vector<1x32xf32>
    %cst_233 = arith.constant 1.000000e+00 : f32
    %823 = vector.broadcast %cst_233 : f32 to vector<1x32xf32>
    %824 = arith.addf %823, %822 : vector<1x32xf32>
    %825 = arith.divf %823, %824 : vector<1x32xf32>
    %826 = vector.extract_strided_slice %813 {offsets = [0, 64], sizes = [1, 32], strides = [1, 1]} : vector<1x128xf32> to vector<1x32xf32>
    %827 = math.tanh %826 : vector<1x32xf32>
    %828 = vector.extract_strided_slice %813 {offsets = [0, 96], sizes = [1, 32], strides = [1, 1]} : vector<1x128xf32> to vector<1x32xf32>
    %829 = arith.negf %828 : vector<1x32xf32>
    %830 = math.exp %829 : vector<1x32xf32>
    %cst_234 = arith.constant 1.000000e+00 : f32
    %831 = vector.broadcast %cst_234 : f32 to vector<1x32xf32>
    %832 = arith.addf %831, %830 : vector<1x32xf32>
    %833 = arith.divf %831, %832 : vector<1x32xf32>
    %834 = arith.mulf %825, %807 : vector<1x32xf32>
    %835 = arith.mulf %819, %827 : vector<1x32xf32>
    %836 = arith.addf %834, %835 : vector<1x32xf32>
    %837 = math.tanh %836 : vector<1x32xf32>
    %838 = arith.mulf %833, %837 : vector<1x32xf32>
    %c11_235 = arith.constant 11 : index
    %c0_236 = arith.constant 0 : index
    %839 = vector.load %arg9[%c11_235, %c0_236] : memref<16x32xf32, #tpu.memory_space<vmem>>, vector<1x32xf32>
    tpu.vector_store %arg9[%c11_235, %c0_236], %838 {strides = array<i32>} : memref<16x32xf32, #tpu.memory_space<vmem>>, vector<1x32xf32>,
    %c12_237 = arith.constant 12 : index
    %c0_238 = arith.constant 0 : index
    %840 = vector.load %arg10[%c12_237, %c0_238] : memref<16x128xf32, #tpu.memory_space<vmem>>, vector<1x128xf32>
    %cst_239 = arith.constant dense<0.000000e+00> : vector<1x128xf32>
    %841 = tpu.matmul %838, %489, %cst_239 {dimension_numbers = #tpu.dot_dimension_numbers<[1], [0], [0], [1], [0, 0, 1, 1], [], []>} : vector<1x32xf32>, vector<32x128xf32>, vector<1x128xf32> -> vector<1x128xf32>
    %842 = arith.addf %840, %841 : vector<1x128xf32>
    %843 = vector.extract_strided_slice %842 {offsets = [0, 0], sizes = [1, 32], strides = [1, 1]} : vector<1x128xf32> to vector<1x32xf32>
    %844 = arith.negf %843 : vector<1x32xf32>
    %845 = math.exp %844 : vector<1x32xf32>
    %cst_240 = arith.constant 1.000000e+00 : f32
    %846 = vector.broadcast %cst_240 : f32 to vector<1x32xf32>
    %847 = arith.addf %846, %845 : vector<1x32xf32>
    %848 = arith.divf %846, %847 : vector<1x32xf32>
    %849 = vector.extract_strided_slice %842 {offsets = [0, 32], sizes = [1, 32], strides = [1, 1]} : vector<1x128xf32> to vector<1x32xf32>
    %850 = arith.negf %849 : vector<1x32xf32>
    %851 = math.exp %850 : vector<1x32xf32>
    %cst_241 = arith.constant 1.000000e+00 : f32
    %852 = vector.broadcast %cst_241 : f32 to vector<1x32xf32>
    %853 = arith.addf %852, %851 : vector<1x32xf32>
    %854 = arith.divf %852, %853 : vector<1x32xf32>
    %855 = vector.extract_strided_slice %842 {offsets = [0, 64], sizes = [1, 32], strides = [1, 1]} : vector<1x128xf32> to vector<1x32xf32>
    %856 = math.tanh %855 : vector<1x32xf32>
    %857 = vector.extract_strided_slice %842 {offsets = [0, 96], sizes = [1, 32], strides = [1, 1]} : vector<1x128xf32> to vector<1x32xf32>
    %858 = arith.negf %857 : vector<1x32xf32>
    %859 = math.exp %858 : vector<1x32xf32>
    %cst_242 = arith.constant 1.000000e+00 : f32
    %860 = vector.broadcast %cst_242 : f32 to vector<1x32xf32>
    %861 = arith.addf %860, %859 : vector<1x32xf32>
    %862 = arith.divf %860, %861 : vector<1x32xf32>
    %863 = arith.mulf %854, %836 : vector<1x32xf32>
    %864 = arith.mulf %848, %856 : vector<1x32xf32>
    %865 = arith.addf %863, %864 : vector<1x32xf32>
    %866 = math.tanh %865 : vector<1x32xf32>
    %867 = arith.mulf %862, %866 : vector<1x32xf32>
    %c12_243 = arith.constant 12 : index
    %c0_244 = arith.constant 0 : index
    %868 = vector.load %arg9[%c12_243, %c0_244] : memref<16x32xf32, #tpu.memory_space<vmem>>, vector<1x32xf32>
    tpu.vector_store %arg9[%c12_243, %c0_244], %867 {strides = array<i32>} : memref<16x32xf32, #tpu.memory_space<vmem>>, vector<1x32xf32>,
    %c13_245 = arith.constant 13 : index
    %c0_246 = arith.constant 0 : index
    %869 = vector.load %arg10[%c13_245, %c0_246] : memref<16x128xf32, #tpu.memory_space<vmem>>, vector<1x128xf32>
    %cst_247 = arith.constant dense<0.000000e+00> : vector<1x128xf32>
    %870 = tpu.matmul %867, %489, %cst_247 {dimension_numbers = #tpu.dot_dimension_numbers<[1], [0], [0], [1], [0, 0, 1, 1], [], []>} : vector<1x32xf32>, vector<32x128xf32>, vector<1x128xf32> -> vector<1x128xf32>
    %871 = arith.addf %869, %870 : vector<1x128xf32>
    %872 = vector.extract_strided_slice %871 {offsets = [0, 0], sizes = [1, 32], strides = [1, 1]} : vector<1x128xf32> to vector<1x32xf32>
    %873 = arith.negf %872 : vector<1x32xf32>
    %874 = math.exp %873 : vector<1x32xf32>
    %cst_248 = arith.constant 1.000000e+00 : f32
    %875 = vector.broadcast %cst_248 : f32 to vector<1x32xf32>
    %876 = arith.addf %875, %874 : vector<1x32xf32>
    %877 = arith.divf %875, %876 : vector<1x32xf32>
    %878 = vector.extract_strided_slice %871 {offsets = [0, 32], sizes = [1, 32], strides = [1, 1]} : vector<1x128xf32> to vector<1x32xf32>
    %879 = arith.negf %878 : vector<1x32xf32>
    %880 = math.exp %879 : vector<1x32xf32>
    %cst_249 = arith.constant 1.000000e+00 : f32
    %881 = vector.broadcast %cst_249 : f32 to vector<1x32xf32>
    %882 = arith.addf %881, %880 : vector<1x32xf32>
    %883 = arith.divf %881, %882 : vector<1x32xf32>
    %884 = vector.extract_strided_slice %871 {offsets = [0, 64], sizes = [1, 32], strides = [1, 1]} : vector<1x128xf32> to vector<1x32xf32>
    %885 = math.tanh %884 : vector<1x32xf32>
    %886 = vector.extract_strided_slice %871 {offsets = [0, 96], sizes = [1, 32], strides = [1, 1]} : vector<1x128xf32> to vector<1x32xf32>
    %887 = arith.negf %886 : vector<1x32xf32>
    %888 = math.exp %887 : vector<1x32xf32>
    %cst_250 = arith.constant 1.000000e+00 : f32
    %889 = vector.broadcast %cst_250 : f32 to vector<1x32xf32>
    %890 = arith.addf %889, %888 : vector<1x32xf32>
    %891 = arith.divf %889, %890 : vector<1x32xf32>
    %892 = arith.mulf %883, %865 : vector<1x32xf32>
    %893 = arith.mulf %877, %885 : vector<1x32xf32>
    %894 = arith.addf %892, %893 : vector<1x32xf32>
    %895 = math.tanh %894 : vector<1x32xf32>
    %896 = arith.mulf %891, %895 : vector<1x32xf32>
    %c13_251 = arith.constant 13 : index
    %c0_252 = arith.constant 0 : index
    %897 = vector.load %arg9[%c13_251, %c0_252] : memref<16x32xf32, #tpu.memory_space<vmem>>, vector<1x32xf32>
    tpu.vector_store %arg9[%c13_251, %c0_252], %896 {strides = array<i32>} : memref<16x32xf32, #tpu.memory_space<vmem>>, vector<1x32xf32>,
    %c14_253 = arith.constant 14 : index
    %c0_254 = arith.constant 0 : index
    %898 = vector.load %arg10[%c14_253, %c0_254] : memref<16x128xf32, #tpu.memory_space<vmem>>, vector<1x128xf32>
    %cst_255 = arith.constant dense<0.000000e+00> : vector<1x128xf32>
    %899 = tpu.matmul %896, %489, %cst_255 {dimension_numbers = #tpu.dot_dimension_numbers<[1], [0], [0], [1], [0, 0, 1, 1], [], []>} : vector<1x32xf32>, vector<32x128xf32>, vector<1x128xf32> -> vector<1x128xf32>
    %900 = arith.addf %898, %899 : vector<1x128xf32>
    %901 = vector.extract_strided_slice %900 {offsets = [0, 0], sizes = [1, 32], strides = [1, 1]} : vector<1x128xf32> to vector<1x32xf32>
    %902 = arith.negf %901 : vector<1x32xf32>
    %903 = math.exp %902 : vector<1x32xf32>
    %cst_256 = arith.constant 1.000000e+00 : f32
    %904 = vector.broadcast %cst_256 : f32 to vector<1x32xf32>
    %905 = arith.addf %904, %903 : vector<1x32xf32>
    %906 = arith.divf %904, %905 : vector<1x32xf32>
    %907 = vector.extract_strided_slice %900 {offsets = [0, 32], sizes = [1, 32], strides = [1, 1]} : vector<1x128xf32> to vector<1x32xf32>
    %908 = arith.negf %907 : vector<1x32xf32>
    %909 = math.exp %908 : vector<1x32xf32>
    %cst_257 = arith.constant 1.000000e+00 : f32
    %910 = vector.broadcast %cst_257 : f32 to vector<1x32xf32>
    %911 = arith.addf %910, %909 : vector<1x32xf32>
    %912 = arith.divf %910, %911 : vector<1x32xf32>
    %913 = vector.extract_strided_slice %900 {offsets = [0, 64], sizes = [1, 32], strides = [1, 1]} : vector<1x128xf32> to vector<1x32xf32>
    %914 = math.tanh %913 : vector<1x32xf32>
    %915 = vector.extract_strided_slice %900 {offsets = [0, 96], sizes = [1, 32], strides = [1, 1]} : vector<1x128xf32> to vector<1x32xf32>
    %916 = arith.negf %915 : vector<1x32xf32>
    %917 = math.exp %916 : vector<1x32xf32>
    %cst_258 = arith.constant 1.000000e+00 : f32
    %918 = vector.broadcast %cst_258 : f32 to vector<1x32xf32>
    %919 = arith.addf %918, %917 : vector<1x32xf32>
    %920 = arith.divf %918, %919 : vector<1x32xf32>
    %921 = arith.mulf %912, %894 : vector<1x32xf32>
    %922 = arith.mulf %906, %914 : vector<1x32xf32>
    %923 = arith.addf %921, %922 : vector<1x32xf32>
    %924 = math.tanh %923 : vector<1x32xf32>
    %925 = arith.mulf %920, %924 : vector<1x32xf32>
    %c14_259 = arith.constant 14 : index
    %c0_260 = arith.constant 0 : index
    %926 = vector.load %arg9[%c14_259, %c0_260] : memref<16x32xf32, #tpu.memory_space<vmem>>, vector<1x32xf32>
    tpu.vector_store %arg9[%c14_259, %c0_260], %925 {strides = array<i32>} : memref<16x32xf32, #tpu.memory_space<vmem>>, vector<1x32xf32>,
    %c15_261 = arith.constant 15 : index
    %c0_262 = arith.constant 0 : index
    %927 = vector.load %arg10[%c15_261, %c0_262] : memref<16x128xf32, #tpu.memory_space<vmem>>, vector<1x128xf32>
    %cst_263 = arith.constant dense<0.000000e+00> : vector<1x128xf32>
    %928 = tpu.matmul %925, %489, %cst_263 {dimension_numbers = #tpu.dot_dimension_numbers<[1], [0], [0], [1], [0, 0, 1, 1], [], []>} : vector<1x32xf32>, vector<32x128xf32>, vector<1x128xf32> -> vector<1x128xf32>
    %929 = arith.addf %927, %928 : vector<1x128xf32>
    %930 = vector.extract_strided_slice %929 {offsets = [0, 0], sizes = [1, 32], strides = [1, 1]} : vector<1x128xf32> to vector<1x32xf32>
    %931 = arith.negf %930 : vector<1x32xf32>
    %932 = math.exp %931 : vector<1x32xf32>
    %cst_264 = arith.constant 1.000000e+00 : f32
    %933 = vector.broadcast %cst_264 : f32 to vector<1x32xf32>
    %934 = arith.addf %933, %932 : vector<1x32xf32>
    %935 = arith.divf %933, %934 : vector<1x32xf32>
    %936 = vector.extract_strided_slice %929 {offsets = [0, 32], sizes = [1, 32], strides = [1, 1]} : vector<1x128xf32> to vector<1x32xf32>
    %937 = arith.negf %936 : vector<1x32xf32>
    %938 = math.exp %937 : vector<1x32xf32>
    %cst_265 = arith.constant 1.000000e+00 : f32
    %939 = vector.broadcast %cst_265 : f32 to vector<1x32xf32>
    %940 = arith.addf %939, %938 : vector<1x32xf32>
    %941 = arith.divf %939, %940 : vector<1x32xf32>
    %942 = vector.extract_strided_slice %929 {offsets = [0, 64], sizes = [1, 32], strides = [1, 1]} : vector<1x128xf32> to vector<1x32xf32>
    %943 = math.tanh %942 : vector<1x32xf32>
    %944 = vector.extract_strided_slice %929 {offsets = [0, 96], sizes = [1, 32], strides = [1, 1]} : vector<1x128xf32> to vector<1x32xf32>
    %945 = arith.negf %944 : vector<1x32xf32>
    %946 = math.exp %945 : vector<1x32xf32>
    %cst_266 = arith.constant 1.000000e+00 : f32
    %947 = vector.broadcast %cst_266 : f32 to vector<1x32xf32>
    %948 = arith.addf %947, %946 : vector<1x32xf32>
    %949 = arith.divf %947, %948 : vector<1x32xf32>
    %950 = arith.mulf %941, %923 : vector<1x32xf32>
    %951 = arith.mulf %935, %943 : vector<1x32xf32>
    %952 = arith.addf %950, %951 : vector<1x32xf32>
    %953 = math.tanh %952 : vector<1x32xf32>
    %954 = arith.mulf %949, %953 : vector<1x32xf32>
    %c15_267 = arith.constant 15 : index
    %c0_268 = arith.constant 0 : index
    %955 = vector.load %arg9[%c15_267, %c0_268] : memref<16x32xf32, #tpu.memory_space<vmem>>, vector<1x32xf32>
    tpu.vector_store %arg9[%c15_267, %c0_268], %954 {strides = array<i32>} : memref<16x32xf32, #tpu.memory_space<vmem>>, vector<1x32xf32>,
    %c0_269 = arith.constant 0 : index
    %c0_270 = arith.constant 0 : index
    %956 = vector.load %arg9[%c0_269, %c0_270] : memref<16x32xf32, #tpu.memory_space<vmem>>, vector<16x32xf32>
    %c0_271 = arith.constant 0 : index
    %c0_272 = arith.constant 0 : index
    %957 = vector.load %arg6[%c0_271, %c0_272] : memref<32x8xf32, #tpu.memory_space<vmem>>, vector<32x8xf32>
    %cst_273 = arith.constant dense<0.000000e+00> : vector<16x8xf32>
    %958 = tpu.matmul %956, %957, %cst_273 {dimension_numbers = #tpu.dot_dimension_numbers<[1], [0], [0], [1], [0, 0, 1, 1], [], []>} : vector<16x32xf32>, vector<32x8xf32>, vector<16x8xf32> -> vector<16x8xf32>
    %c0_274 = arith.constant 0 : index
    %c0_275 = arith.constant 0 : index
    %959 = vector.load %arg7[%c0_274, %c0_275] : memref<1x8xf32, #tpu.memory_space<vmem>>, vector<1x8xf32>
    %960 = vector.broadcast %959 : vector<1x8xf32> to vector<16x8xf32>
    %961 = arith.addf %958, %960 : vector<16x8xf32>
    %c0_276 = arith.constant 0 : index
    %c0_277 = arith.constant 0 : index
    %c0_278 = arith.constant 0 : index
    %962 = vector.load %arg8[%c0_276, %c0_277, %c0_278] : memref<1x16x8xf32, #tpu.memory_space<vmem>>, vector<1x16x8xf32>
    %963 = vector.shape_cast %962 : vector<1x16x8xf32> to vector<16x8xf32>
    %964 = vector.shape_cast %961 : vector<16x8xf32> to vector<1x16x8xf32>
    tpu.vector_store %arg8[%c0_276, %c0_277, %c0_278], %964 {strides = array<i32>} : memref<1x16x8xf32, #tpu.memory_space<vmem>>, vector<1x16x8xf32>,
    return
  }
  func.func @transform_0(%arg0: i32) -> (i32, i32, i32) {
    %c0_i32 = arith.constant 0 : i32
    %c0_i32_0 = arith.constant 0 : i32
    %c0_i32_1 = arith.constant 0 : i32
    return %arg0, %c0_i32, %c0_i32_0 : i32, i32, i32
  }
  func.func @transform_1(%arg0: i32) -> (i32, i32) {
    %c0_i32 = arith.constant 0 : i32
    %c0_i32_0 = arith.constant 0 : i32
    %c0_i32_1 = arith.constant 0 : i32
    return %c0_i32, %c0_i32_0 : i32, i32
  }
  func.func @transform_2(%arg0: i32) -> (i32, i32, i32) {
    %c0_i32 = arith.constant 0 : i32
    %c0_i32_0 = arith.constant 0 : i32
    %c0_i32_1 = arith.constant 0 : i32
    %c0_i32_2 = arith.constant 0 : i32
    return %c0_i32, %c0_i32_0, %c0_i32_1 : i32, i32, i32
  }
  func.func @transform_3(%arg0: i32) -> (i32, i32, i32) {
    %c0_i32 = arith.constant 0 : i32
    %c0_i32_0 = arith.constant 0 : i32
    %c0_i32_1 = arith.constant 0 : i32
    %c0_i32_2 = arith.constant 0 : i32
    return %c0_i32, %c0_i32_0, %c0_i32_1 : i32, i32, i32
  }
  func.func @transform_4(%arg0: i32) -> (i32, i32) {
    %c0_i32 = arith.constant 0 : i32
    %c0_i32_0 = arith.constant 0 : i32
    %c0_i32_1 = arith.constant 0 : i32
    return %c0_i32, %c0_i32_0 : i32, i32
  }
  func.func @transform_5(%arg0: i32) -> (i32, i32) {
    %c0_i32 = arith.constant 0 : i32
    %c0_i32_0 = arith.constant 0 : i32
    %c0_i32_1 = arith.constant 0 : i32
    return %c0_i32, %c0_i32_0 : i32, i32
  }
  func.func @transform_6(%arg0: i32) -> (i32, i32) {
    %c0_i32 = arith.constant 0 : i32
    %c0_i32_0 = arith.constant 0 : i32
    %c0_i32_1 = arith.constant 0 : i32
    return %c0_i32, %c0_i32_0 : i32, i32
  }
  func.func @transform_7(%arg0: i32) -> (i32, i32, i32) {
    %c0_i32 = arith.constant 0 : i32
    %c0_i32_0 = arith.constant 0 : i32
    %c0_i32_1 = arith.constant 0 : i32
    return %arg0, %c0_i32, %c0_i32_0 : i32, i32, i32
  }
}

</mosaic_0001>

<llo_original>
// kernel: tpu_custom_call.1
$region0: #{tpu_custom_call.1}
  #allocation0 [shape = 'u32[]', space=smem, size = 0x4, offset = 0x4, fixed_abs, tag = 'smem constant byte address 0x4 - core index']
  #allocation1 [shape = 'u32[144,128]{1,0:T(1,128)}', space=vmem, size = 0x12000, scoped, tag = 'internal scratch']
  #allocation2 [shape = 'f32[16,32]{1,0:T(8,128)}', space=vmem, size = 0x2000, scoped, tag = 'scratch operand']
  #allocation3 [shape = 'f32[16,128]{1,0:T(8,128)}', space=vmem, size = 0x2000, scoped, tag = 'scratch operand']
  %s0 = inlined_call_operand.vmem [shape: f32[2,16,16], index: 0, kind: input, shape index: {}]
  %s1 = inlined_call_operand.hbm [shape: f32[16,128], index: 1, kind: input, shape index: {}]
  %s2 = inlined_call_operand.hbm [shape: f32[1,32,128], index: 2, kind: input, shape index: {}]
  %s3 = inlined_call_operand.hbm [shape: f32[2,32,128], index: 3, kind: input, shape index: {}]
  %s4 = inlined_call_operand.vmem [shape: f32[2,128], index: 4, kind: input, shape index: {}]
  %s5 = inlined_call_operand.vmem [shape: f32[32,8], index: 5, kind: input, shape index: {}]
  %s6 = inlined_call_operand.vmem [shape: f32[1,8], index: 6, kind: input, shape index: {}]
  %s7 = inlined_call_operand.vmem [shape: f32[2,16,8], index: 7, kind: output, shape index: {}]
  %s8 = sld [smem:[#allocation0]]
  $region73: #{tpu_custom_call.1} parent=0
    _
  %s10 = ssub.s32 1, %s8
  %s11 = scalar_select 0, %s10, %s8
  $region1: #{tpu_custom_call.1} parent=0
    #allocation4 [shape = 'u8[8192]{0}', space=vmem, size = 0x2000, scoped, tag = 'input window, operand 1, single buffered']
    #allocation5 [shape = 's32[2]{0}', space=sflag, size = 0x8, scoped, tag = 'scoped memory for tpu_custom_call.1']
    #allocation6 [shape = 'u8[16384]{0}', space=vmem, size = 0x4000, scoped, tag = 'input window, operand 2, single buffered']
    #allocation7 [shape = 's32[1]{0}', space=sflag, size = 0x4, scoped, tag = 'scoped memory for tpu_custom_call.1']
    #allocation8 [shape = 'u8[32768]{0}', space=vmem, size = 0x8000, scoped, tag = 'input window, operand 3, single buffered']
    %12 = vsyncpa [#allocation5], 0
    %13 = vsyncpa [#allocation7], 0
    loop: start=0, step=1, limit=4
    $region2: #{tpu_custom_call.1} parent=1 // loop_pre_header
      _
    $region3: #{tpu_custom_call.1} parent=1 // loop_header
      %s15 = sphi 0, %s19
      %p16 = scmp.ge.s32.totalorder %s15, 4
      %s25 = sphi 0, %s27
      %s28 = sphi 0, %s25
      %s29 = sphi 0, %s28
      %s45 = sphi 0, %s29
      %s49 = sphi 0, %s49
      %s51 = sphi 0, %s49
      %s52 = sphi 0, %s51
      %s66 = sphi 0, %s52
      %s70 = sphi 0, %s70
      %s72 = sphi 0, %s70
      %s73 = sphi 0, %s72
      %s87 = sphi 0, %s73
      %s91 = sphi 0, %s91
      %s93 = sphi 0, %s91
      %s94 = sphi 0, %s93
      %s108 = sphi 0, %s94
      %s112 = sphi 0, %s112
      %s114 = sphi 0, %s112
      %s115 = sphi 0, %s114
      %s129 = sphi 0, %s115
      %s133 = sphi 0, %s133
      %s135 = sphi 0, %s133
      %s136 = sphi 0, %s135
      %s150 = sphi 0, %s136
      %s154 = sphi 0, %s154
      %s156 = sphi 0, %s154
      %s157 = sphi 0, %s156
      %s171 = sphi 0, %s157
      %s177 = sphi 0, %s179
      %s180 = sphi 0, %s177
      %s181 = sphi 0, %s180
      %s197 = sphi 0, %s181
    $region4: #{tpu_custom_call.1} parent=1 // loop_header_branch
      %18 = sbr.rel (%p16) target = $region8
    $region5: #{tpu_custom_call.1} parent=1 // loop_body
      %s20 = ssub.s32 %s15, 1
      %s21 = ssub.s32 %s15, 2
      %s22 = sadd.s32 %s15, 1
      %s23 = ssub.s32 %s15, %s22
      %p24 = scmp.eq.s32.totalorder %s23, 0
      %s26 = sadd.s32 %s25, 1
      %s27 = scalar_select %p24, %s25, %s26
      %p30 = pneg %p24
      %p31 = scmp.eq.s32.totalorder %s15, 1
      %p32 = por %p30, %p31
      %p33 = scmp.ne.s32.totalorder %s25, %s28
      %p34 = scmp.eq.s32.totalorder %s15, 0
      %p35 = por %p33, %p34
      %p36 = scmp.ne.s32.totalorder %s25, %s28
      %p37 = scmp.eq.s32.totalorder %s20, 1
      %p38 = por %p36, %p37
      %p39 = scmp.ne.s32.totalorder %s28, %s29
      %p40 = scmp.eq.s32.totalorder %s20, 0
      %p41 = por %p39, %p40
      %p42 = scmp.ne.s32.totalorder %s28, %s29
      %p43 = scmp.eq.s32.totalorder %s21, 1
      %p44 = por %p42, %p43
      %p46 = scmp.ne.s32.totalorder %s29, %s45
      %p47 = scmp.eq.s32.totalorder %s21, 0
      %p48 = por %p46, %p47
      %s50 = sadd.s32 %s49, 1
      %p53 = scmp.eq.s32.totalorder %s15, 1
      %p54 = scmp.ne.s32.totalorder %s49, %s51
      %p55 = scmp.eq.s32.totalorder %s15, 0
      %p56 = por %p54, %p55
      %p57 = scmp.ne.s32.totalorder %s49, %s51
      %p58 = scmp.eq.s32.totalorder %s20, 1
      %p59 = por %p57, %p58
      %p60 = scmp.ne.s32.totalorder %s51, %s52
      %p61 = scmp.eq.s32.totalorder %s20, 0
      %p62 = por %p60, %p61
      %p63 = scmp.ne.s32.totalorder %s51, %s52
      %p64 = scmp.eq.s32.totalorder %s21, 1
      %p65 = por %p63, %p64
      %p67 = scmp.ne.s32.totalorder %s52, %s66
      %p68 = scmp.eq.s32.totalorder %s21, 0
      %p69 = por %p67, %p68
      %s71 = sadd.s32 %s70, 1
      %p74 = scmp.eq.s32.totalorder %s15, 1
      %p75 = scmp.ne.s32.totalorder %s70, %s72
      %p76 = scmp.eq.s32.totalorder %s15, 0
      %p77 = por %p75, %p76
      %p78 = scmp.ne.s32.totalorder %s70, %s72
      %p79 = scmp.eq.s32.totalorder %s20, 1
      %p80 = por %p78, %p79
      %p81 = scmp.ne.s32.totalorder %s72, %s73
      %p82 = scmp.eq.s32.totalorder %s20, 0
      %p83 = por %p81, %p82
      %p84 = scmp.ne.s32.totalorder %s72, %s73
      %p85 = scmp.eq.s32.totalorder %s21, 1
      %p86 = por %p84, %p85
      %p88 = scmp.ne.s32.totalorder %s73, %s87
      %p89 = scmp.eq.s32.totalorder %s21, 0
      %p90 = por %p88, %p89
      %s92 = sadd.s32 %s91, 1
      %p95 = scmp.eq.s32.totalorder %s15, 1
      %p96 = scmp.ne.s32.totalorder %s91, %s93
      %p97 = scmp.eq.s32.totalorder %s15, 0
      %p98 = por %p96, %p97
      %p99 = scmp.ne.s32.totalorder %s91, %s93
      %p100 = scmp.eq.s32.totalorder %s20, 1
      %p101 = por %p99, %p100
      %p102 = scmp.ne.s32.totalorder %s93, %s94
      %p103 = scmp.eq.s32.totalorder %s20, 0
      %p104 = por %p102, %p103
      %p105 = scmp.ne.s32.totalorder %s93, %s94
      %p106 = scmp.eq.s32.totalorder %s21, 1
      %p107 = por %p105, %p106
      %p109 = scmp.ne.s32.totalorder %s94, %s108
      %p110 = scmp.eq.s32.totalorder %s21, 0
      %p111 = por %p109, %p110
      %s113 = sadd.s32 %s112, 1
      %p116 = scmp.eq.s32.totalorder %s15, 1
      %p117 = scmp.ne.s32.totalorder %s112, %s114
      %p118 = scmp.eq.s32.totalorder %s15, 0
      %p119 = por %p117, %p118
      %p120 = scmp.ne.s32.totalorder %s112, %s114
      %p121 = scmp.eq.s32.totalorder %s20, 1
      %p122 = por %p120, %p121
      %p123 = scmp.ne.s32.totalorder %s114, %s115
      %p124 = scmp.eq.s32.totalorder %s20, 0
      %p125 = por %p123, %p124
      %p126 = scmp.ne.s32.totalorder %s114, %s115
      %p127 = scmp.eq.s32.totalorder %s21, 1
      %p128 = por %p126, %p127
      %p130 = scmp.ne.s32.totalorder %s115, %s129
      %p131 = scmp.eq.s32.totalorder %s21, 0
      %p132 = por %p130, %p131
      %s134 = sadd.s32 %s133, 1
      %p137 = scmp.eq.s32.totalorder %s15, 1
      %p138 = scmp.ne.s32.totalorder %s133, %s135
      %p139 = scmp.eq.s32.totalorder %s15, 0
      %p140 = por %p138, %p139
      %p141 = scmp.ne.s32.totalorder %s133, %s135
      %p142 = scmp.eq.s32.totalorder %s20, 1
      %p143 = por %p141, %p142
      %p144 = scmp.ne.s32.totalorder %s135, %s136
      %p145 = scmp.eq.s32.totalorder %s20, 0
      %p146 = por %p144, %p145
      %p147 = scmp.ne.s32.totalorder %s135, %s136
      %p148 = scmp.eq.s32.totalorder %s21, 1
      %p149 = por %p147, %p148
      %p151 = scmp.ne.s32.totalorder %s136, %s150
      %p152 = scmp.eq.s32.totalorder %s21, 0
      %p153 = por %p151, %p152
      %s155 = sadd.s32 %s154, 1
      %p158 = scmp.eq.s32.totalorder %s15, 1
      %p159 = scmp.ne.s32.totalorder %s154, %s156
      %p160 = scmp.eq.s32.totalorder %s15, 0
      %p161 = por %p159, %p160
      %p162 = scmp.ne.s32.totalorder %s154, %s156
      %p163 = scmp.eq.s32.totalorder %s20, 1
      %p164 = por %p162, %p163
      %p165 = scmp.ne.s32.totalorder %s156, %s157
      %p166 = scmp.eq.s32.totalorder %s20, 0
      %p167 = por %p165, %p166
      %p168 = scmp.ne.s32.totalorder %s156, %s157
      %p169 = scmp.eq.s32.totalorder %s21, 1
      %p170 = por %p168, %p169
      %p172 = scmp.ne.s32.totalorder %s157, %s171
      %p173 = scmp.eq.s32.totalorder %s21, 0
      %p174 = por %p172, %p173
      %s175 = ssub.s32 %s15, %s22
      %p176 = scmp.eq.s32.totalorder %s175, 0
      %s178 = sadd.s32 %s177, 1
      %s179 = scalar_select %p176, %s177, %s178
      %p182 = pneg %p176
      %p183 = scmp.eq.s32.totalorder %s15, 1
      %p184 = por %p182, %p183
      %p185 = scmp.ne.s32.totalorder %s177, %s180
      %p186 = scmp.eq.s32.totalorder %s15, 0
      %p187 = por %p185, %p186
      %p188 = scmp.ne.s32.totalorder %s177, %s180
      %p189 = scmp.eq.s32.totalorder %s20, 1
      %p190 = por %p188, %p189
      %p191 = scmp.ne.s32.totalorder %s180, %s181
      %p192 = scmp.eq.s32.totalorder %s20, 0
      %p193 = por %p191, %p192
      %p194 = scmp.ne.s32.totalorder %s180, %s181
      %p195 = scmp.eq.s32.totalorder %s21, 1
      %p196 = por %p194, %p195
      %p198 = scmp.ne.s32.totalorder %s181, %s197
      %p199 = scmp.eq.s32.totalorder %s21, 0
      %p200 = por %p198, %p199
      %p201 = scmp.le.s32.totalorder 1, %s15
      %p202 = scmp.lt.s32.totalorder %s15, 3
      %p203 = pnand %p201, %p202
      %p204 = pneg %p203
      // Predicated region
      $region9: #{tpu_custom_call.1} parent=5 // pred_check
        _
      $region10: #{tpu_custom_call.1} parent=5 // pred_check_branch
        %206 = sbr.rel (%p203) target = $region12
      $region11: #{tpu_custom_call.1} parent=5 // pred_region
        %s207 = ssub.s32 %s15, 1
        // Predicated region
        $region13: #{tpu_custom_call.1} parent=11 // pred_check
          %p208 = pneg %p62
        $region14: #{tpu_custom_call.1} parent=11 // pred_check_branch
          %210 = sbr.rel (%p208) target = $region16
        $region15: #{tpu_custom_call.1} parent=11 // pred_region
          %s212 = ssub.s32 256, 256
          %213 = vsyncadd [#allocation5], %s212
          %s214 = sshll.u32 [#allocation4], 4
          %s215 = int_to_ptr.vmem [resolvable:$true] %s214
          %220 = dma.hbm_to_vmem [thread:$0]  %s1, 256, %s215, [#allocation5], 128, 128, 8
        $region16: #{tpu_custom_call.1} parent=11 // pred_fallthru
          _
        // Predicated region
        $region17: #{tpu_custom_call.1} parent=11 // pred_check
          %p221 = pneg %p83
        $region18: #{tpu_custom_call.1} parent=11 // pred_check_branch
          %223 = sbr.rel (%p221) target = $region20
        $region19: #{tpu_custom_call.1} parent=11 // pred_region
          %s225 = ssub.s32 512, 512
          %226 = vsyncadd [#allocation7], %s225
          %s227 = sshll.u32 [#allocation6], 4
          %s228 = int_to_ptr.vmem [resolvable:$true] %s227
          %233 = dma.hbm_to_vmem [thread:$0]  %s2, 512, %s228, [#allocation7], 128, 128, 8
        $region20: #{tpu_custom_call.1} parent=11 // pred_fallthru
          _
        // Predicated region
        $region21: #{tpu_custom_call.1} parent=11 // pred_check
          %p234 = pneg %p104
        $region22: #{tpu_custom_call.1} parent=11 // pred_check_branch
          %236 = sbr.rel (%p234) target = $region24
        $region23: #{tpu_custom_call.1} parent=11 // pred_region
          %s238 = ssub.s32 1024, 1024
          %239 = vsyncadd [#allocation7], %s238
          %s240 = sshll.u32 [#allocation8], 4
          %s241 = int_to_ptr.vmem [resolvable:$true] %s240
          %246 = dma.hbm_to_vmem [thread:$0]  %s3, 1024, %s241, [#allocation7], 128, 128, 8
        $region24: #{tpu_custom_call.1} parent=11 // pred_fallthru
          _
        // Predicated region
        $region25: #{tpu_custom_call.1} parent=11 // pred_check
          %p247 = pneg %p125
        $region26: #{tpu_custom_call.1} parent=11 // pred_check_branch
          %249 = sbr.rel (%p247) target = $region28
        $region27: #{tpu_custom_call.1} parent=11 // pred_region
          _
        $region28: #{tpu_custom_call.1} parent=11 // pred_fallthru
          _
        // Predicated region
        $region29: #{tpu_custom_call.1} parent=11 // pred_check
          %p250 = pneg %p146
        $region30: #{tpu_custom_call.1} parent=11 // pred_check_branch
          %252 = sbr.rel (%p250) target = $region32
        $region31: #{tpu_custom_call.1} parent=11 // pred_region
          _
        $region32: #{tpu_custom_call.1} parent=11 // pred_fallthru
          _
        // Predicated region
        $region33: #{tpu_custom_call.1} parent=11 // pred_check
          %p253 = pneg %p167
        $region34: #{tpu_custom_call.1} parent=11 // pred_check_branch
          %255 = sbr.rel (%p253) target = $region36
        $region35: #{tpu_custom_call.1} parent=11 // pred_region
          _
        $region36: #{tpu_custom_call.1} parent=11 // pred_fallthru
          _
      $region12: #{tpu_custom_call.1} parent=5 // pred_fallthru
        _
      %p256 = scmp.lt.s32.totalorder %s15, 2
      // Predicated region
      $region37: #{tpu_custom_call.1} parent=5 // pred_check
        %p257 = pneg %p256
      $region38: #{tpu_custom_call.1} parent=5 // pred_check_branch
        %259 = sbr.rel (%p257) target = $region40
      $region39: #{tpu_custom_call.1} parent=5 // pred_region
        // Predicated region
        $region41: #{tpu_custom_call.1} parent=39 // pred_check
          %p260 = pneg %p35
        $region42: #{tpu_custom_call.1} parent=39 // pred_check_branch
          %262 = sbr.rel (%p260) target = $region44
        $region43: #{tpu_custom_call.1} parent=39 // pred_region
          %p263 = scmp.lt.s32.totalorder %s15, 1
          %s264 = scalar_select %p263, %s15, 1
          %s265 = smul.addr %s264, 2
          %s266 = smul.addr %s265, 8
          %s267 = scalar_lea.vmem %s0, %s266
        $region44: #{tpu_custom_call.1} parent=39 // pred_fallthru
          _
      $region40: #{tpu_custom_call.1} parent=5 // pred_fallthru
        _
      %p268 = scmp.le.s32.totalorder 1, %s15
      %p269 = scmp.lt.s32.totalorder %s15, 3
      %p270 = pnand %p268, %p269
      %p271 = pneg %p270
      // Predicated region
      $region45: #{tpu_custom_call.1} parent=5 // pred_check
        _
      $region46: #{tpu_custom_call.1} parent=5 // pred_check_branch
        %273 = sbr.rel (%p270) target = $region48
      $region47: #{tpu_custom_call.1} parent=5 // pred_region
        %s274 = ssub.s32 %s15, 1
        // Predicated region
        $region49: #{tpu_custom_call.1} parent=47 // pred_check
          %p275 = pneg %p62
        $region50: #{tpu_custom_call.1} parent=47 // pred_check_branch
          %277 = sbr.rel (%p275) target = $region52
        $region51: #{tpu_custom_call.1} parent=47 // pred_region
          %278 = dma.done [#allocation5], 256
        $region52: #{tpu_custom_call.1} parent=47 // pred_fallthru
          _
        // Predicated region
        $region53: #{tpu_custom_call.1} parent=47 // pred_check
          %p279 = pneg %p83
        $region54: #{tpu_custom_call.1} parent=47 // pred_check_branch
          %281 = sbr.rel (%p279) target = $region56
        $region55: #{tpu_custom_call.1} parent=47 // pred_region
          %282 = dma.done [#allocation7], 512
        $region56: #{tpu_custom_call.1} parent=47 // pred_fallthru
          _
        // Predicated region
        $region57: #{tpu_custom_call.1} parent=47 // pred_check
          %p283 = pneg %p104
        $region58: #{tpu_custom_call.1} parent=47 // pred_check_branch
          %285 = sbr.rel (%p283) target = $region60
        $region59: #{tpu_custom_call.1} parent=47 // pred_region
          %286 = dma.done [#allocation7], 1024
        $region60: #{tpu_custom_call.1} parent=47 // pred_fallthru
          _
        %p287 = scmp.lt.s32.totalorder %s20, 1
        %s288 = scalar_select %p287, %s20, 1
        %s289 = smul.addr %s288, 2
        %s290 = smul.addr %s289, 8
        %s291 = scalar_lea.vmem %s0, %s290
        %p292 = pneg %p41
        %p293 = pneg %p38
        %p294 = pneg %p62
        %p295 = pneg %p59
        %p296 = pneg %p83
        %p297 = pneg %p80
        %p298 = pneg %p104
        %p299 = pneg %p101
        %p300 = pneg %p125
        %p301 = pneg %p122
        %p302 = pneg %p146
        %p303 = pneg %p143
        %p304 = pneg %p167
        %p305 = pneg %p164
        %p306 = pneg %p193
        %p307 = pneg %p190
        %p308 = scmp.lt.s32.totalorder %s20, 1
        %s309 = scalar_select %p308, %s20, 1
        %s310 = smul.addr %s309, 2
        %s311 = smul.addr %s310, 8
        %s312 = scalar_lea.vmem %s7, %s311
        %p313 = scmp.lt.s32.totalorder %s20, 1
        %s314 = scalar_select %p313, %s20, 1
        %s315 = smul.addr %s314, 2
        %s316 = smul.addr %s315, 8
        %s317 = scalar_lea.vmem %s0, %s316
        %p318 = scmp.lt.s32.totalorder %s20, 1
        %s319 = scalar_select %p318, %s20, 1
        %s320 = smul.addr %s319, 2
        %s321 = smul.addr %s320, 8
        %s322 = scalar_lea.vmem %s7, %s321
        %v323 = vld [vmem:[%s317] sm:$0xff]
        %v324 = vld [vmem:[%s317 + $0x8] sm:$0xff]
        %v325 = vld [vmem:[#allocation4] sm:$0xff]
        %v326 = vld [vmem:[#allocation4 + $0x8] sm:$0xff]
        %v327 = vld [vmem:[%s4] sm:$0x1]
        %v328 = vlaneseq
        %v329 = vshrl.u32 %v328, 7
        %v330 = vsub.s32 0, %v329
        %v331 = vrot.slane %v327, %v330
        %vm332 = vcmask 130048
        %v334 = vsel %vm332, %v323, 0
        %v337 = vsel %vm332, %v324, 0
        %339 = vmatprep.subr.mxu0 0.0
        %340 = vmatpush1.msra.mxu0 %v325
        %341 = vmatprep.subr.mxu0 0.0
        %342 = vmatpush1.msra.mxu0 %v326
        %343 = vmatprep.subr.mxu0 0.0
        %344 = vmatpush1.msra.mxu0 0.0
        %345 = vmatprep.subr.mxu0 0.0
        %346 = vmatpush1.msra.mxu0 0.0
        %347 = vmatprep.subr.mxu0 0.0
        %348 = vmatpush1.msra.mxu0 0.0
        %349 = vmatprep.subr.mxu0 0.0
        %350 = vmatpush1.msra.mxu0 0.0
        %351 = vmatprep.subr.mxu0 0.0
        %352 = vmatpush1.msra.mxu0 0.0
        %353 = vmatprep.subr.mxu0 0.0
        %354 = vmatpush1.msra.mxu0 0.0
        %355 = vmatprep.subr.mxu0 0.0
        %356 = vmatpush1.msra.mxu0 0.0
        %357 = vmatprep.subr.mxu0 0.0
        %358 = vmatpush1.msra.mxu0 0.0
        %359 = vmatprep.subr.mxu0 0.0
        %360 = vmatpush1.msra.mxu0 0.0
        %361 = vmatprep.subr.mxu0 0.0
        %362 = vmatpush1.msra.mxu0 0.0
        %363 = vmatprep.subr.mxu0 0.0
        %364 = vmatpush1.msra.mxu0 0.0
        %365 = vmatprep.subr.mxu0 0.0
        %366 = vmatpush1.msra.mxu0 0.0
        %367 = vmatprep.subr.mxu0 0.0
        %368 = vmatpush1.msra.mxu0 0.0
        %369 = vmatprep.subr.mxu0 0.0
        %370 = vmatpush1.msra.mxu0 0.0
        %371 = vmatprep.subr.mxu0 0.0
        %372 = vmatpush1.msra.mxu0 0.0
        %373 = vmatprep.subr.mxu0 0.0
        %374 = vmatpush1.msra.mxu0 0.0
        %375 = vmatprep.subr.mxu0 0.0
        %376 = vmatpush1.msra.mxu0 0.0
        %377 = vmatprep.subr.mxu0 0.0
        %378 = vmatpush1.msra.mxu0 0.0
        %379 = vmatprep.subr.mxu0 0.0
        %380 = vmatpush1.msra.mxu0 0.0
        %381 = vmatprep.subr.mxu0 0.0
        %382 = vmatpush1.msra.mxu0 0.0
        %383 = vmatprep.subr.mxu0 0.0
        %384 = vmatpush1.msra.mxu0 0.0
        %385 = vmatprep.subr.mxu0 0.0
        %386 = vmatpush1.msra.mxu0 0.0
        %387 = vmatprep.subr.mxu0 0.0
        %388 = vmatpush1.msra.mxu0 0.0
        %389 = vmatprep.subr.mxu0 0.0
        %390 = vmatpush1.msra.mxu0 0.0
        %391 = vmatprep.subr.mxu0 0.0
        %392 = vmatpush1.msra.mxu0 0.0
        %393 = vmatprep.subr.mxu0 0.0
        %394 = vmatpush1.msra.mxu0 0.0
        %395 = vmatprep.subr.mxu0 0.0
        %396 = vmatpush1.msra.mxu0 0.0
        %397 = vmatprep.subr.mxu0 0.0
        %398 = vmatpush1.msra.mxu0 0.0
        %399 = vmatprep.subr.mxu0 0.0
        %400 = vmatpush1.msra.mxu0 0.0
        %401 = vmatprep.subr.mxu0 0.0
        %402 = vmatpush1.msra.mxu0 0.0
        %403 = vmatprep.mubr.f32.mxu0 0.0
        %404 = vmatmul.mubr.f32.gmra.mrb[0].mxu0 %v334
        %v405 = vpop.f32.mrb[0].mxu0
        %v406 = vadd.f32 %v331, %v405
        %v407 = vpop.f32.mrb[0].mxu0
        %408 = vmatprep.mubr.f32.mxu0 0.0
        %409 = vmatmul.mubr.f32.gmra.mrb[0].mxu0 %v337
        %v410 = vpop.f32.mrb[0].mxu0
        %v411 = vadd.f32 %v331, %v410
        %v412 = vpop.f32.mrb[0].mxu0
        %413 = vdwg.mxu0
        %414 = vst [vmem:[#allocation3] sm:$0xff] %v406
        %415 = vst [vmem:[#allocation3 + $0x8] sm:$0xff] %v411
        %v416 = vld [vmem:[#allocation8] sm:$0xff]
        %v417 = vld [vmem:[#allocation8 + $0x8] sm:$0xff]
        %v418 = vld [vmem:[#allocation8 + $0x10] sm:$0xff]
        %v419 = vld [vmem:[#allocation8 + $0x18] sm:$0xff]
        %v420 = vld [vmem:[#allocation3] sm:$0x1]
        %vm421 = vcmask 261120
        %v423 = vsel %vm421, 0.0, 0
        %425 = vmatprep.subr.mxu0 0.0
        %426 = vmatpush1.msra.mxu0 %v416
        %427 = vmatprep.subr.mxu0 0.0
        %428 = vmatpush1.msra.mxu0 %v417
        %429 = vmatprep.subr.mxu0 0.0
        %430 = vmatpush1.msra.mxu0 %v418
        %431 = vmatprep.subr.mxu0 0.0
        %432 = vmatpush1.msra.mxu0 %v419
        %433 = vmatprep.subr.mxu0 0.0
        %434 = vmatpush1.msra.mxu0 0.0
        %435 = vmatprep.subr.mxu0 0.0
        %436 = vmatpush1.msra.mxu0 0.0
        %437 = vmatprep.subr.mxu0 0.0
        %438 = vmatpush1.msra.mxu0 0.0
        %439 = vmatprep.subr.mxu0 0.0
        %440 = vmatpush1.msra.mxu0 0.0
        %441 = vmatprep.subr.mxu0 0.0
        %442 = vmatpush1.msra.mxu0 0.0
        %443 = vmatprep.subr.mxu0 0.0
        %444 = vmatpush1.msra.mxu0 0.0
        %445 = vmatprep.subr.mxu0 0.0
        %446 = vmatpush1.msra.mxu0 0.0
        %447 = vmatprep.subr.mxu0 0.0
        %448 = vmatpush1.msra.mxu0 0.0
        %449 = vmatprep.subr.mxu0 0.0
        %450 = vmatpush1.msra.mxu0 0.0
        %451 = vmatprep.subr.mxu0 0.0
        %452 = vmatpush1.msra.mxu0 0.0
        %453 = vmatprep.subr.mxu0 0.0
        %454 = vmatpush1.msra.mxu0 0.0
        %455 = vmatprep.subr.mxu0 0.0
        %456 = vmatpush1.msra.mxu0 0.0
        %457 = vmatprep.subr.mxu0 0.0
        %458 = vmatpush1.msra.mxu0 0.0
        %459 = vmatprep.subr.mxu0 0.0
        %460 = vmatpush1.msra.mxu0 0.0
        %461 = vmatprep.subr.mxu0 0.0
        %462 = vmatpush1.msra.mxu0 0.0
        %463 = vmatprep.subr.mxu0 0.0
        %464 = vmatpush1.msra.mxu0 0.0
        %465 = vmatprep.subr.mxu0 0.0
        %466 = vmatpush1.msra.mxu0 0.0
        %467 = vmatprep.subr.mxu0 0.0
        %468 = vmatpush1.msra.mxu0 0.0
        %469 = vmatprep.subr.mxu0 0.0
        %470 = vmatpush1.msra.mxu0 0.0
        %471 = vmatprep.subr.mxu0 0.0
        %472 = vmatpush1.msra.mxu0 0.0
        %473 = vmatprep.subr.mxu0 0.0
        %474 = vmatpush1.msra.mxu0 0.0
        %475 = vmatprep.subr.mxu0 0.0
        %476 = vmatpush1.msra.mxu0 0.0
        %477 = vmatprep.subr.mxu0 0.0
        %478 = vmatpush1.msra.mxu0 0.0
        %479 = vmatprep.subr.mxu0 0.0
        %480 = vmatpush1.msra.mxu0 0.0
        %481 = vmatprep.subr.mxu0 0.0
        %482 = vmatpush1.msra.mxu0 0.0
        %483 = vmatprep.subr.mxu0 0.0
        %484 = vmatpush1.msra.mxu0 0.0
        %485 = vmatprep.subr.mxu0 0.0
        %486 = vmatpush1.msra.mxu0 0.0
        %487 = vmatprep.subr.mxu0 0.0
        %488 = vmatpush1.msra.mxu0 0.0
        %489 = vmatprep.mubr.f32.mxu0 0.0
        %490 = vmatmul.mubr.f32.gmra.mrb[0].mxu0 %v423
        %v491 = vpop.f32.mrb[0].mxu0
        %v492 = vadd.f32 0.0, %v491
        %v493 = vpop.f32.mrb[0].mxu0
        %494 = vdwg.mxu0
        %v495 = vadd.f32 %v420, %v492
        %v496 = vxor.u32 %v495, 2147483648
        %v497 = vmul.f32 %v496, 1.442695
        %v498 = vpow.pop %v497
        %v499 = vadd.f32 %v498, 1.0
        %v500 = vrcp.pop %v499
        %v501 = vmul.f32 1.0, %v500
        %v502 = vtanh.pop %v495
        %v503 = vmul.f32 %v501, 0.0
        %505 = vrot.lane.b32.xlu0 %v502, 64
        %v506 = vpop.permute.xlu0 %505
        %v508 = vmul.f32 %v501, %v506
        %510 = vrot.lane.b32.xlu0 %v508, 32
        %v511 = vpop.permute.xlu0 %510
        %v513 = vadd.f32 %v503, %v511
        %v514 = vtanh.pop %v513
        %516 = vrot.lane.b32.xlu0 %v514, 64
        %v517 = vpop.permute.xlu0 %516
        %v519 = vmul.f32 %v501, %v517
        %521 = vrot.lane.b32.xlu0 %v519, 32
        %v522 = vpop.permute.xlu0 %521
        %vm524 = vcmask 253952
        %525 = vst.msk [vmem:[#allocation2] sm:$0x1] %vm524, %v522
        %v526 = vld [vmem:[#allocation3 + $0x1] sm:$0x1]
        %v527 = vsel %vm421, %v522, 0
        %529 = vmatprep.subr.mxu0 0.0
        %530 = vmatpush1.msra.mxu0 %v416
        %531 = vmatprep.subr.mxu0 0.0
        %532 = vmatpush1.msra.mxu0 %v417
        %533 = vmatprep.subr.mxu0 0.0
        %534 = vmatpush1.msra.mxu0 %v418
        %535 = vmatprep.subr.mxu0 0.0
        %536 = vmatpush1.msra.mxu0 %v419
        %537 = vmatprep.subr.mxu0 0.0
        %538 = vmatpush1.msra.mxu0 0.0
        %539 = vmatprep.subr.mxu0 0.0
        %540 = vmatpush1.msra.mxu0 0.0
        %541 = vmatprep.subr.mxu0 0.0
        %542 = vmatpush1.msra.mxu0 0.0
        %543 = vmatprep.subr.mxu0 0.0
        %544 = vmatpush1.msra.mxu0 0.0
        %545 = vmatprep.subr.mxu0 0.0
        %546 = vmatpush1.msra.mxu0 0.0
        %547 = vmatprep.subr.mxu0 0.0
        %548 = vmatpush1.msra.mxu0 0.0
        %549 = vmatprep.subr.mxu0 0.0
        %550 = vmatpush1.msra.mxu0 0.0
        %551 = vmatprep.subr.mxu0 0.0
        %552 = vmatpush1.msra.mxu0 0.0
        %553 = vmatprep.subr.mxu0 0.0
        %554 = vmatpush1.msra.mxu0 0.0
        %555 = vmatprep.subr.mxu0 0.0
        %556 = vmatpush1.msra.mxu0 0.0
        %557 = vmatprep.subr.mxu0 0.0
        %558 = vmatpush1.msra.mxu0 0.0
        %559 = vmatprep.subr.mxu0 0.0
        %560 = vmatpush1.msra.mxu0 0.0
        %561 = vmatprep.subr.mxu0 0.0
        %562 = vmatpush1.msra.mxu0 0.0
        %563 = vmatprep.subr.mxu0 0.0
        %564 = vmatpush1.msra.mxu0 0.0
        %565 = vmatprep.subr.mxu0 0.0
        %566 = vmatpush1.msra.mxu0 0.0
        %567 = vmatprep.subr.mxu0 0.0
        %568 = vmatpush1.msra.mxu0 0.0
        %569 = vmatprep.subr.mxu0 0.0
        %570 = vmatpush1.msra.mxu0 0.0
        %571 = vmatprep.subr.mxu0 0.0
        %572 = vmatpush1.msra.mxu0 0.0
        %573 = vmatprep.subr.mxu0 0.0
        %574 = vmatpush1.msra.mxu0 0.0
        %575 = vmatprep.subr.mxu0 0.0
        %576 = vmatpush1.msra.mxu0 0.0
        %577 = vmatprep.subr.mxu0 0.0
        %578 = vmatpush1.msra.mxu0 0.0
        %579 = vmatprep.subr.mxu0 0.0
        %580 = vmatpush1.msra.mxu0 0.0
        %581 = vmatprep.subr.mxu0 0.0
        %582 = vmatpush1.msra.mxu0 0.0
        %583 = vmatprep.subr.mxu0 0.0
        %584 = vmatpush1.msra.mxu0 0.0
        %585 = vmatprep.subr.mxu0 0.0
        %586 = vmatpush1.msra.mxu0 0.0
        %587 = vmatprep.subr.mxu0 0.0
        %588 = vmatpush1.msra.mxu0 0.0
        %589 = vmatprep.subr.mxu0 0.0
        %590 = vmatpush1.msra.mxu0 0.0
        %591 = vmatprep.subr.mxu0 0.0
        %592 = vmatpush1.msra.mxu0 0.0
        %593 = vmatprep.mubr.f32.mxu0 0.0
        %594 = vmatmul.mubr.f32.gmra.mrb[0].mxu0 %v527
        %v595 = vpop.f32.mrb[0].mxu0
        %v596 = vadd.f32 0.0, %v595
        %v597 = vpop.f32.mrb[0].mxu0
        %598 = vdwg.mxu0
        %v599 = vadd.f32 %v526, %v596
        %v600 = vxor.u32 %v599, 2147483648
        %v601 = vmul.f32 %v600, 1.442695
        %v602 = vpow.pop %v601
        %v603 = vadd.f32 %v602, 1.0
        %v604 = vrcp.pop %v603
        %v605 = vmul.f32 1.0, %v604
        %v606 = vtanh.pop %v599
        %v607 = vmul.f32 %v605, %v513
        %609 = vrot.lane.b32.xlu0 %v606, 64
        %v610 = vpop.permute.xlu0 %609
        %v612 = vmul.f32 %v605, %v610
        %614 = vrot.lane.b32.xlu0 %v612, 32
        %v615 = vpop.permute.xlu0 %614
        %v617 = vadd.f32 %v607, %v615
        %v618 = vtanh.pop %v617
        %620 = vrot.lane.b32.xlu0 %v618, 64
        %v621 = vpop.permute.xlu0 %620
        %v623 = vmul.f32 %v605, %v621
        %625 = vrot.lane.b32.xlu0 %v623, 32
        %v626 = vpop.permute.xlu0 %625
        %628 = vst.msk [vmem:[#allocation2 + $0x1] sm:$0x1] %vm524, %v626
        %v629 = vld [vmem:[#allocation3 + $0x2] sm:$0x1]
        %v630 = vsel %vm421, %v626, 0
        %632 = vmatprep.subr.mxu0 0.0
        %633 = vmatpush1.msra.mxu0 %v416
        %634 = vmatprep.subr.mxu0 0.0
        %635 = vmatpush1.msra.mxu0 %v417
        %636 = vmatprep.subr.mxu0 0.0
        %637 = vmatpush1.msra.mxu0 %v418
        %638 = vmatprep.subr.mxu0 0.0
        %639 = vmatpush1.msra.mxu0 %v419
        %640 = vmatprep.subr.mxu0 0.0
        %641 = vmatpush1.msra.mxu0 0.0
        %642 = vmatprep.subr.mxu0 0.0
        %643 = vmatpush1.msra.mxu0 0.0
        %644 = vmatprep.subr.mxu0 0.0
        %645 = vmatpush1.msra.mxu0 0.0
        %646 = vmatprep.subr.mxu0 0.0
        %647 = vmatpush1.msra.mxu0 0.0
        %648 = vmatprep.subr.mxu0 0.0
        %649 = vmatpush1.msra.mxu0 0.0
        %650 = vmatprep.subr.mxu0 0.0
        %651 = vmatpush1.msra.mxu0 0.0
        %652 = vmatprep.subr.mxu0 0.0
        %653 = vmatpush1.msra.mxu0 0.0
        %654 = vmatprep.subr.mxu0 0.0
        %655 = vmatpush1.msra.mxu0 0.0
        %656 = vmatprep.subr.mxu0 0.0
        %657 = vmatpush1.msra.mxu0 0.0
        %658 = vmatprep.subr.mxu0 0.0
        %659 = vmatpush1.msra.mxu0 0.0
        %660 = vmatprep.subr.mxu0 0.0
        %661 = vmatpush1.msra.mxu0 0.0
        %662 = vmatprep.subr.mxu0 0.0
        %663 = vmatpush1.msra.mxu0 0.0
        %664 = vmatprep.subr.mxu0 0.0
        %665 = vmatpush1.msra.mxu0 0.0
        %666 = vmatprep.subr.mxu0 0.0
        %667 = vmatpush1.msra.mxu0 0.0
        %668 = vmatprep.subr.mxu0 0.0
        %669 = vmatpush1.msra.mxu0 0.0
        %670 = vmatprep.subr.mxu0 0.0
        %671 = vmatpush1.msra.mxu0 0.0
        %672 = vmatprep.subr.mxu0 0.0
        %673 = vmatpush1.msra.mxu0 0.0
        %674 = vmatprep.subr.mxu0 0.0
        %675 = vmatpush1.msra.mxu0 0.0
        %676 = vmatprep.subr.mxu0 0.0
        %677 = vmatpush1.msra.mxu0 0.0
        %678 = vmatprep.subr.mxu0 0.0
        %679 = vmatpush1.msra.mxu0 0.0
        %680 = vmatprep.subr.mxu0 0.0
        %681 = vmatpush1.msra.mxu0 0.0
        %682 = vmatprep.subr.mxu0 0.0
        %683 = vmatpush1.msra.mxu0 0.0
        %684 = vmatprep.subr.mxu0 0.0
        %685 = vmatpush1.msra.mxu0 0.0
        %686 = vmatprep.subr.mxu0 0.0
        %687 = vmatpush1.msra.mxu0 0.0
        %688 = vmatprep.subr.mxu0 0.0
        %689 = vmatpush1.msra.mxu0 0.0
        %690 = vmatprep.subr.mxu0 0.0
        %691 = vmatpush1.msra.mxu0 0.0
        %692 = vmatprep.subr.mxu0 0.0
        %693 = vmatpush1.msra.mxu0 0.0
        %694 = vmatprep.subr.mxu0 0.0
        %695 = vmatpush1.msra.mxu0 0.0
        %696 = vmatprep.mubr.f32.mxu0 0.0
        %697 = vmatmul.mubr.f32.gmra.mrb[0].mxu0 %v630
        %v698 = vpop.f32.mrb[0].mxu0
        %v699 = vadd.f32 0.0, %v698
        %v700 = vpop.f32.mrb[0].mxu0
        %701 = vdwg.mxu0
        %v702 = vadd.f32 %v629, %v699
        %v703 = vxor.u32 %v702, 2147483648
        %v704 = vmul.f32 %v703, 1.442695
        %v705 = vpow.pop %v704
        %v706 = vadd.f32 %v705, 1.0
        %v707 = vrcp.pop %v706
        %v708 = vmul.f32 1.0, %v707
        %v709 = vtanh.pop %v702
        %v710 = vmul.f32 %v708, %v617
        %712 = vrot.lane.b32.xlu0 %v709, 64
        %v713 = vpop.permute.xlu0 %712
        %v715 = vmul.f32 %v708, %v713
        %717 = vrot.lane.b32.xlu0 %v715, 32
        %v718 = vpop.permute.xlu0 %717
        %v720 = vadd.f32 %v710, %v718
        %v721 = vtanh.pop %v720
        %723 = vrot.lane.b32.xlu0 %v721, 64
        %v724 = vpop.permute.xlu0 %723
        %v726 = vmul.f32 %v708, %v724
        %728 = vrot.lane.b32.xlu0 %v726, 32
        %v729 = vpop.permute.xlu0 %728
        %731 = vst.msk [vmem:[#allocation2 + $0x2] sm:$0x1] %vm524, %v729
        %v732 = vld [vmem:[#allocation3 + $0x3] sm:$0x1]
        %v733 = vsel %vm421, %v729, 0
        %735 = vmatprep.subr.mxu0 0.0
        %736 = vmatpush1.msra.mxu0 %v416
        %737 = vmatprep.subr.mxu0 0.0
        %738 = vmatpush1.msra.mxu0 %v417
        %739 = vmatprep.subr.mxu0 0.0
        %740 = vmatpush1.msra.mxu0 %v418
        %741 = vmatprep.subr.mxu0 0.0
        %742 = vmatpush1.msra.mxu0 %v419
        %743 = vmatprep.subr.mxu0 0.0
        %744 = vmatpush1.msra.mxu0 0.0
        %745 = vmatprep.subr.mxu0 0.0
        %746 = vmatpush1.msra.mxu0 0.0
        %747 = vmatprep.subr.mxu0 0.0
        %748 = vmatpush1.msra.mxu0 0.0
        %749 = vmatprep.subr.mxu0 0.0
        %750 = vmatpush1.msra.mxu0 0.0
        %751 = vmatprep.subr.mxu0 0.0
        %752 = vmatpush1.msra.mxu0 0.0
        %753 = vmatprep.subr.mxu0 0.0
        %754 = vmatpush1.msra.mxu0 0.0
        %755 = vmatprep.subr.mxu0 0.0
        %756 = vmatpush1.msra.mxu0 0.0
        %757 = vmatprep.subr.mxu0 0.0
        %758 = vmatpush1.msra.mxu0 0.0
        %759 = vmatprep.subr.mxu0 0.0
        %760 = vmatpush1.msra.mxu0 0.0
        %761 = vmatprep.subr.mxu0 0.0
        %762 = vmatpush1.msra.mxu0 0.0
        %763 = vmatprep.subr.mxu0 0.0
        %764 = vmatpush1.msra.mxu0 0.0
        %765 = vmatprep.subr.mxu0 0.0
        %766 = vmatpush1.msra.mxu0 0.0
        %767 = vmatprep.subr.mxu0 0.0
        %768 = vmatpush1.msra.mxu0 0.0
        %769 = vmatprep.subr.mxu0 0.0
        %770 = vmatpush1.msra.mxu0 0.0
        %771 = vmatprep.subr.mxu0 0.0
        %772 = vmatpush1.msra.mxu0 0.0
        %773 = vmatprep.subr.mxu0 0.0
        %774 = vmatpush1.msra.mxu0 0.0
        %775 = vmatprep.subr.mxu0 0.0
        %776 = vmatpush1.msra.mxu0 0.0
        %777 = vmatprep.subr.mxu0 0.0
        %778 = vmatpush1.msra.mxu0 0.0
        %779 = vmatprep.subr.mxu0 0.0
        %780 = vmatpush1.msra.mxu0 0.0
        %781 = vmatprep.subr.mxu0 0.0
        %782 = vmatpush1.msra.mxu0 0.0
        %783 = vmatprep.subr.mxu0 0.0
        %784 = vmatpush1.msra.mxu0 0.0
        %785 = vmatprep.subr.mxu0 0.0
        %786 = vmatpush1.msra.mxu0 0.0
        %787 = vmatprep.subr.mxu0 0.0
        %788 = vmatpush1.msra.mxu0 0.0
        %789 = vmatprep.subr.mxu0 0.0
        %790 = vmatpush1.msra.mxu0 0.0
        %791 = vmatprep.subr.mxu0 0.0
        %792 = vmatpush1.msra.mxu0 0.0
        %793 = vmatprep.subr.mxu0 0.0
        %794 = vmatpush1.msra.mxu0 0.0
        %795 = vmatprep.subr.mxu0 0.0
        %796 = vmatpush1.msra.mxu0 0.0
        %797 = vmatprep.subr.mxu0 0.0
        %798 = vmatpush1.msra.mxu0 0.0
        %799 = vmatprep.mubr.f32.mxu0 0.0
        %800 = vmatmul.mubr.f32.gmra.mrb[0].mxu0 %v733
        %v801 = vpop.f32.mrb[0].mxu0
        %v802 = vadd.f32 0.0, %v801
        %v803 = vpop.f32.mrb[0].mxu0
        %804 = vdwg.mxu0
        %v805 = vadd.f32 %v732, %v802
        %v806 = vxor.u32 %v805, 2147483648
        %v807 = vmul.f32 %v806, 1.442695
        %v808 = vpow.pop %v807
        %v809 = vadd.f32 %v808, 1.0
        %v810 = vrcp.pop %v809
        %v811 = vmul.f32 1.0, %v810
        %v812 = vtanh.pop %v805
        %v813 = vmul.f32 %v811, %v720
        %815 = vrot.lane.b32.xlu0 %v812, 64
        %v816 = vpop.permute.xlu0 %815
        %v818 = vmul.f32 %v811, %v816
        %820 = vrot.lane.b32.xlu0 %v818, 32
        %v821 = vpop.permute.xlu0 %820
        %v823 = vadd.f32 %v813, %v821
        %v824 = vtanh.pop %v823
        %826 = vrot.lane.b32.xlu0 %v824, 64
        %v827 = vpop.permute.xlu0 %826
        %v829 = vmul.f32 %v811, %v827
        %831 = vrot.lane.b32.xlu0 %v829, 32
        %v832 = vpop.permute.xlu0 %831
        %834 = vst.msk [vmem:[#allocation2 + $0x3] sm:$0x1] %vm524, %v832
        %v835 = vld [vmem:[#allocation3 + $0x4] sm:$0x1]
        %v836 = vsel %vm421, %v832, 0
        %838 = vmatprep.subr.mxu0 0.0
        %839 = vmatpush1.msra.mxu0 %v416
        %840 = vmatprep.subr.mxu0 0.0
        %841 = vmatpush1.msra.mxu0 %v417
        %842 = vmatprep.subr.mxu0 0.0
        %843 = vmatpush1.msra.mxu0 %v418
        %844 = vmatprep.subr.mxu0 0.0
        %845 = vmatpush1.msra.mxu0 %v419
        %846 = vmatprep.subr.mxu0 0.0
        %847 = vmatpush1.msra.mxu0 0.0
        %848 = vmatprep.subr.mxu0 0.0
        %849 = vmatpush1.msra.mxu0 0.0
        %850 = vmatprep.subr.mxu0 0.0
        %851 = vmatpush1.msra.mxu0 0.0
        %852 = vmatprep.subr.mxu0 0.0
        %853 = vmatpush1.msra.mxu0 0.0
        %854 = vmatprep.subr.mxu0 0.0
        %855 = vmatpush1.msra.mxu0 0.0
        %856 = vmatprep.subr.mxu0 0.0
        %857 = vmatpush1.msra.mxu0 0.0
        %858 = vmatprep.subr.mxu0 0.0
        %859 = vmatpush1.msra.mxu0 0.0
        %860 = vmatprep.subr.mxu0 0.0
        %861 = vmatpush1.msra.mxu0 0.0
        %862 = vmatprep.subr.mxu0 0.0
        %863 = vmatpush1.msra.mxu0 0.0
        %864 = vmatprep.subr.mxu0 0.0
        %865 = vmatpush1.msra.mxu0 0.0
        %866 = vmatprep.subr.mxu0 0.0
        %867 = vmatpush1.msra.mxu0 0.0
        %868 = vmatprep.subr.mxu0 0.0
        %869 = vmatpush1.msra.mxu0 0.0
        %870 = vmatprep.subr.mxu0 0.0
        %871 = vmatpush1.msra.mxu0 0.0
        %872 = vmatprep.subr.mxu0 0.0
        %873 = vmatpush1.msra.mxu0 0.0
        %874 = vmatprep.subr.mxu0 0.0
        %875 = vmatpush1.msra.mxu0 0.0
        %876 = vmatprep.subr.mxu0 0.0
        %877 = vmatpush1.msra.mxu0 0.0
        %878 = vmatprep.subr.mxu0 0.0
        %879 = vmatpush1.msra.mxu0 0.0
        %880 = vmatprep.subr.mxu0 0.0
        %881 = vmatpush1.msra.mxu0 0.0
        %882 = vmatprep.subr.mxu0 0.0
        %883 = vmatpush1.msra.mxu0 0.0
        %884 = vmatprep.subr.mxu0 0.0
        %885 = vmatpush1.msra.mxu0 0.0
        %886 = vmatprep.subr.mxu0 0.0
        %887 = vmatpush1.msra.mxu0 0.0
        %888 = vmatprep.subr.mxu0 0.0
        %889 = vmatpush1.msra.mxu0 0.0
        %890 = vmatprep.subr.mxu0 0.0
        %891 = vmatpush1.msra.mxu0 0.0
        %892 = vmatprep.subr.mxu0 0.0
        %893 = vmatpush1.msra.mxu0 0.0
        %894 = vmatprep.subr.mxu0 0.0
        %895 = vmatpush1.msra.mxu0 0.0
        %896 = vmatprep.subr.mxu0 0.0
        %897 = vmatpush1.msra.mxu0 0.0
        %898 = vmatprep.subr.mxu0 0.0
        %899 = vmatpush1.msra.mxu0 0.0
        %900 = vmatprep.subr.mxu0 0.0
        %901 = vmatpush1.msra.mxu0 0.0
        %902 = vmatprep.mubr.f32.mxu0 0.0
        %903 = vmatmul.mubr.f32.gmra.mrb[0].mxu0 %v836
        %v904 = vpop.f32.mrb[0].mxu0
        %v905 = vadd.f32 0.0, %v904
        %v906 = vpop.f32.mrb[0].mxu0
        %907 = vdwg.mxu0
        %v908 = vadd.f32 %v835, %v905
        %v909 = vxor.u32 %v908, 2147483648
        %v910 = vmul.f32 %v909, 1.442695
        %v911 = vpow.pop %v910
        %v912 = vadd.f32 %v911, 1.0
        %v913 = vrcp.pop %v912
        %v914 = vmul.f32 1.0, %v913
        %v915 = vtanh.pop %v908
        %v916 = vmul.f32 %v914, %v823
        %918 = vrot.lane.b32.xlu0 %v915, 64
        %v919 = vpop.permute.xlu0 %918
        %v921 = vmul.f32 %v914, %v919
        %923 = vrot.lane.b32.xlu0 %v921, 32
        %v924 = vpop.permute.xlu0 %923
        %v926 = vadd.f32 %v916, %v924
        %v927 = vtanh.pop %v926
        %929 = vrot.lane.b32.xlu0 %v927, 64
        %v930 = vpop.permute.xlu0 %929
        %v932 = vmul.f32 %v914, %v930
        %934 = vrot.lane.b32.xlu0 %v932, 32
        %v935 = vpop.permute.xlu0 %934
        %937 = vst.msk [vmem:[#allocation2 + $0x4] sm:$0x1] %vm524, %v935
        %v938 = vld [vmem:[#allocation3 + $0x5] sm:$0x1]
        %v939 = vsel %vm421, %v935, 0
        %941 = vmatprep.subr.mxu0 0.0
        %942 = vmatpush1.msra.mxu0 %v416
        %943 = vmatprep.subr.mxu0 0.0
        %944 = vmatpush1.msra.mxu0 %v417
        %945 = vmatprep.subr.mxu0 0.0
        %946 = vmatpush1.msra.mxu0 %v418
        %947 = vmatprep.subr.mxu0 0.0
        %948 = vmatpush1.msra.mxu0 %v419
        %949 = vmatprep.subr.mxu0 0.0
        %950 = vmatpush1.msra.mxu0 0.0
        %951 = vmatprep.subr.mxu0 0.0
        %952 = vmatpush1.msra.mxu0 0.0
        %953 = vmatprep.subr.mxu0 0.0
        %954 = vmatpush1.msra.mxu0 0.0
        %955 = vmatprep.subr.mxu0 0.0
        %956 = vmatpush1.msra.mxu0 0.0
        %957 = vmatprep.subr.mxu0 0.0
        %958 = vmatpush1.msra.mxu0 0.0
        %959 = vmatprep.subr.mxu0 0.0
        %960 = vmatpush1.msra.mxu0 0.0
        %961 = vmatprep.subr.mxu0 0.0
        %962 = vmatpush1.msra.mxu0 0.0
        %963 = vmatprep.subr.mxu0 0.0
        %964 = vmatpush1.msra.mxu0 0.0
        %965 = vmatprep.subr.mxu0 0.0
        %966 = vmatpush1.msra.mxu0 0.0
        %967 = vmatprep.subr.mxu0 0.0
        %968 = vmatpush1.msra.mxu0 0.0
        %969 = vmatprep.subr.mxu0 0.0
        %970 = vmatpush1.msra.mxu0 0.0
        %971 = vmatprep.subr.mxu0 0.0
        %972 = vmatpush1.msra.mxu0 0.0
        %973 = vmatprep.subr.mxu0 0.0
        %974 = vmatpush1.msra.mxu0 0.0
        %975 = vmatprep.subr.mxu0 0.0
        %976 = vmatpush1.msra.mxu0 0.0
        %977 = vmatprep.subr.mxu0 0.0
        %978 = vmatpush1.msra.mxu0 0.0
        %979 = vmatprep.subr.mxu0 0.0
        %980 = vmatpush1.msra.mxu0 0.0
        %981 = vmatprep.subr.mxu0 0.0
        %982 = vmatpush1.msra.mxu0 0.0
        %983 = vmatprep.subr.mxu0 0.0
        %984 = vmatpush1.msra.mxu0 0.0
        %985 = vmatprep.subr.mxu0 0.0
        %986 = vmatpush1.msra.mxu0 0.0
        %987 = vmatprep.subr.mxu0 0.0
        %988 = vmatpush1.msra.mxu0 0.0
        %989 = vmatprep.subr.mxu0 0.0
        %990 = vmatpush1.msra.mxu0 0.0
        %991 = vmatprep.subr.mxu0 0.0
        %992 = vmatpush1.msra.mxu0 0.0
        %993 = vmatprep.subr.mxu0 0.0
        %994 = vmatpush1.msra.mxu0 0.0
        %995 = vmatprep.subr.mxu0 0.0
        %996 = vmatpush1.msra.mxu0 0.0
        %997 = vmatprep.subr.mxu0 0.0
        %998 = vmatpush1.msra.mxu0 0.0
        %999 = vmatprep.subr.mxu0 0.0
        %1000 = vmatpush1.msra.mxu0 0.0
        %1001 = vmatprep.subr.mxu0 0.0
        %1002 = vmatpush1.msra.mxu0 0.0
        %1003 = vmatprep.subr.mxu0 0.0
        %1004 = vmatpush1.msra.mxu0 0.0
        %1005 = vmatprep.mubr.f32.mxu0 0.0
        %1006 = vmatmul.mubr.f32.gmra.mrb[0].mxu0 %v939
        %v1007 = vpop.f32.mrb[0].mxu0
        %v1008 = vadd.f32 0.0, %v1007
        %v1009 = vpop.f32.mrb[0].mxu0
        %1010 = vdwg.mxu0
        %v1011 = vadd.f32 %v938, %v1008
        %v1012 = vxor.u32 %v1011, 2147483648
        %v1013 = vmul.f32 %v1012, 1.442695
        %v1014 = vpow.pop %v1013
        %v1015 = vadd.f32 %v1014, 1.0
        %v1016 = vrcp.pop %v1015
        %v1017 = vmul.f32 1.0, %v1016
        %v1018 = vtanh.pop %v1011
        %v1019 = vmul.f32 %v1017, %v926
        %1021 = vrot.lane.b32.xlu0 %v1018, 64
        %v1022 = vpop.permute.xlu0 %1021
        %v1024 = vmul.f32 %v1017, %v1022
        %1026 = vrot.lane.b32.xlu0 %v1024, 32
        %v1027 = vpop.permute.xlu0 %1026
        %v1029 = vadd.f32 %v1019, %v1027
        %v1030 = vtanh.pop %v1029
        %1032 = vrot.lane.b32.xlu0 %v1030, 64
        %v1033 = vpop.permute.xlu0 %1032
        %v1035 = vmul.f32 %v1017, %v1033
        %1037 = vrot.lane.b32.xlu0 %v1035, 32
        %v1038 = vpop.permute.xlu0 %1037
        %1040 = vst.msk [vmem:[#allocation2 + $0x5] sm:$0x1] %vm524, %v1038
        %v1041 = vld [vmem:[#allocation3 + $0x6] sm:$0x1]
        %v1042 = vsel %vm421, %v1038, 0
        %1044 = vmatprep.subr.mxu0 0.0
        %1045 = vmatpush1.msra.mxu0 %v416
        %1046 = vmatprep.subr.mxu0 0.0
        %1047 = vmatpush1.msra.mxu0 %v417
        %1048 = vmatprep.subr.mxu0 0.0
        %1049 = vmatpush1.msra.mxu0 %v418
        %1050 = vmatprep.subr.mxu0 0.0
        %1051 = vmatpush1.msra.mxu0 %v419
        %1052 = vmatprep.subr.mxu0 0.0
        %1053 = vmatpush1.msra.mxu0 0.0
        %1054 = vmatprep.subr.mxu0 0.0
        %1055 = vmatpush1.msra.mxu0 0.0
        %1056 = vmatprep.subr.mxu0 0.0
        %1057 = vmatpush1.msra.mxu0 0.0
        %1058 = vmatprep.subr.mxu0 0.0
        %1059 = vmatpush1.msra.mxu0 0.0
        %1060 = vmatprep.subr.mxu0 0.0
        %1061 = vmatpush1.msra.mxu0 0.0
        %1062 = vmatprep.subr.mxu0 0.0
        %1063 = vmatpush1.msra.mxu0 0.0
        %1064 = vmatprep.subr.mxu0 0.0
        %1065 = vmatpush1.msra.mxu0 0.0
        %1066 = vmatprep.subr.mxu0 0.0
        %1067 = vmatpush1.msra.mxu0 0.0
        %1068 = vmatprep.subr.mxu0 0.0
        %1069 = vmatpush1.msra.mxu0 0.0
        %1070 = vmatprep.subr.mxu0 0.0
        %1071 = vmatpush1.msra.mxu0 0.0
        %1072 = vmatprep.subr.mxu0 0.0
        %1073 = vmatpush1.msra.mxu0 0.0
        %1074 = vmatprep.subr.mxu0 0.0
        %1075 = vmatpush1.msra.mxu0 0.0
        %1076 = vmatprep.subr.mxu0 0.0
        %1077 = vmatpush1.msra.mxu0 0.0
        %1078 = vmatprep.subr.mxu0 0.0
        %1079 = vmatpush1.msra.mxu0 0.0
        %1080 = vmatprep.subr.mxu0 0.0
        %1081 = vmatpush1.msra.mxu0 0.0
        %1082 = vmatprep.subr.mxu0 0.0
        %1083 = vmatpush1.msra.mxu0 0.0
        %1084 = vmatprep.subr.mxu0 0.0
        %1085 = vmatpush1.msra.mxu0 0.0
        %1086 = vmatprep.subr.mxu0 0.0
        %1087 = vmatpush1.msra.mxu0 0.0
        %1088 = vmatprep.subr.mxu0 0.0
        %1089 = vmatpush1.msra.mxu0 0.0
        %1090 = vmatprep.subr.mxu0 0.0
        %1091 = vmatpush1.msra.mxu0 0.0
        %1092 = vmatprep.subr.mxu0 0.0
        %1093 = vmatpush1.msra.mxu0 0.0
        %1094 = vmatprep.subr.mxu0 0.0
        %1095 = vmatpush1.msra.mxu0 0.0
        %1096 = vmatprep.subr.mxu0 0.0
        %1097 = vmatpush1.msra.mxu0 0.0
        %1098 = vmatprep.subr.mxu0 0.0
        %1099 = vmatpush1.msra.mxu0 0.0
        %1100 = vmatprep.subr.mxu0 0.0
        %1101 = vmatpush1.msra.mxu0 0.0
        %1102 = vmatprep.subr.mxu0 0.0
        %1103 = vmatpush1.msra.mxu0 0.0
        %1104 = vmatprep.subr.mxu0 0.0
        %1105 = vmatpush1.msra.mxu0 0.0
        %1106 = vmatprep.subr.mxu0 0.0
        %1107 = vmatpush1.msra.mxu0 0.0
        %1108 = vmatprep.mubr.f32.mxu0 0.0
        %1109 = vmatmul.mubr.f32.gmra.mrb[0].mxu0 %v1042
        %v1110 = vpop.f32.mrb[0].mxu0
        %v1111 = vadd.f32 0.0, %v1110
        %v1112 = vpop.f32.mrb[0].mxu0
        %1113 = vdwg.mxu0
        %v1114 = vadd.f32 %v1041, %v1111
        %v1115 = vxor.u32 %v1114, 2147483648
        %v1116 = vmul.f32 %v1115, 1.442695
        %v1117 = vpow.pop %v1116
        %v1118 = vadd.f32 %v1117, 1.0
        %v1119 = vrcp.pop %v1118
        %v1120 = vmul.f32 1.0, %v1119
        %v1121 = vtanh.pop %v1114
        %v1122 = vmul.f32 %v1120, %v1029
        %1124 = vrot.lane.b32.xlu0 %v1121, 64
        %v1125 = vpop.permute.xlu0 %1124
        %v1127 = vmul.f32 %v1120, %v1125
        %1129 = vrot.lane.b32.xlu0 %v1127, 32
        %v1130 = vpop.permute.xlu0 %1129
        %v1132 = vadd.f32 %v1122, %v1130
        %v1133 = vtanh.pop %v1132
        %1135 = vrot.lane.b32.xlu0 %v1133, 64
        %v1136 = vpop.permute.xlu0 %1135
        %v1138 = vmul.f32 %v1120, %v1136
        %1140 = vrot.lane.b32.xlu0 %v1138, 32
        %v1141 = vpop.permute.xlu0 %1140
        %1143 = vst.msk [vmem:[#allocation2 + $0x6] sm:$0x1] %vm524, %v1141
        %v1144 = vld [vmem:[#allocation3 + $0x7] sm:$0x1]
        %v1145 = vsel %vm421, %v1141, 0
        %1147 = vmatprep.subr.mxu0 0.0
        %1148 = vmatpush1.msra.mxu0 %v416
        %1149 = vmatprep.subr.mxu0 0.0
        %1150 = vmatpush1.msra.mxu0 %v417
        %1151 = vmatprep.subr.mxu0 0.0
        %1152 = vmatpush1.msra.mxu0 %v418
        %1153 = vmatprep.subr.mxu0 0.0
        %1154 = vmatpush1.msra.mxu0 %v419
        %1155 = vmatprep.subr.mxu0 0.0
        %1156 = vmatpush1.msra.mxu0 0.0
        %1157 = vmatprep.subr.mxu0 0.0
        %1158 = vmatpush1.msra.mxu0 0.0
        %1159 = vmatprep.subr.mxu0 0.0
        %1160 = vmatpush1.msra.mxu0 0.0
        %1161 = vmatprep.subr.mxu0 0.0
        %1162 = vmatpush1.msra.mxu0 0.0
        %1163 = vmatprep.subr.mxu0 0.0
        %1164 = vmatpush1.msra.mxu0 0.0
        %1165 = vmatprep.subr.mxu0 0.0
        %1166 = vmatpush1.msra.mxu0 0.0
        %1167 = vmatprep.subr.mxu0 0.0
        %1168 = vmatpush1.msra.mxu0 0.0
        %1169 = vmatprep.subr.mxu0 0.0
        %1170 = vmatpush1.msra.mxu0 0.0
        %1171 = vmatprep.subr.mxu0 0.0
        %1172 = vmatpush1.msra.mxu0 0.0
        %1173 = vmatprep.subr.mxu0 0.0
        %1174 = vmatpush1.msra.mxu0 0.0
        %1175 = vmatprep.subr.mxu0 0.0
        %1176 = vmatpush1.msra.mxu0 0.0
        %1177 = vmatprep.subr.mxu0 0.0
        %1178 = vmatpush1.msra.mxu0 0.0
        %1179 = vmatprep.subr.mxu0 0.0
        %1180 = vmatpush1.msra.mxu0 0.0
        %1181 = vmatprep.subr.mxu0 0.0
        %1182 = vmatpush1.msra.mxu0 0.0
        %1183 = vmatprep.subr.mxu0 0.0
        %1184 = vmatpush1.msra.mxu0 0.0
        %1185 = vmatprep.subr.mxu0 0.0
        %1186 = vmatpush1.msra.mxu0 0.0
        %1187 = vmatprep.subr.mxu0 0.0
        %1188 = vmatpush1.msra.mxu0 0.0
        %1189 = vmatprep.subr.mxu0 0.0
        %1190 = vmatpush1.msra.mxu0 0.0
        %1191 = vmatprep.subr.mxu0 0.0
        %1192 = vmatpush1.msra.mxu0 0.0
        %1193 = vmatprep.subr.mxu0 0.0
        %1194 = vmatpush1.msra.mxu0 0.0
        %1195 = vmatprep.subr.mxu0 0.0
        %1196 = vmatpush1.msra.mxu0 0.0
        %1197 = vmatprep.subr.mxu0 0.0
        %1198 = vmatpush1.msra.mxu0 0.0
        %1199 = vmatprep.subr.mxu0 0.0
        %1200 = vmatpush1.msra.mxu0 0.0
        %1201 = vmatprep.subr.mxu0 0.0
        %1202 = vmatpush1.msra.mxu0 0.0
        %1203 = vmatprep.subr.mxu0 0.0
        %1204 = vmatpush1.msra.mxu0 0.0
        %1205 = vmatprep.subr.mxu0 0.0
        %1206 = vmatpush1.msra.mxu0 0.0
        %1207 = vmatprep.subr.mxu0 0.0
        %1208 = vmatpush1.msra.mxu0 0.0
        %1209 = vmatprep.subr.mxu0 0.0
        %1210 = vmatpush1.msra.mxu0 0.0
        %1211 = vmatprep.mubr.f32.mxu0 0.0
        %1212 = vmatmul.mubr.f32.gmra.mrb[0].mxu0 %v1145
        %v1213 = vpop.f32.mrb[0].mxu0
        %v1214 = vadd.f32 0.0, %v1213
        %v1215 = vpop.f32.mrb[0].mxu0
        %1216 = vdwg.mxu0
        %v1217 = vadd.f32 %v1144, %v1214
        %v1218 = vxor.u32 %v1217, 2147483648
        %v1219 = vmul.f32 %v1218, 1.442695
        %v1220 = vpow.pop %v1219
        %v1221 = vadd.f32 %v1220, 1.0
        %v1222 = vrcp.pop %v1221
        %v1223 = vmul.f32 1.0, %v1222
        %v1224 = vtanh.pop %v1217
        %v1225 = vmul.f32 %v1223, %v1132
        %1227 = vrot.lane.b32.xlu0 %v1224, 64
        %v1228 = vpop.permute.xlu0 %1227
        %v1230 = vmul.f32 %v1223, %v1228
        %1232 = vrot.lane.b32.xlu0 %v1230, 32
        %v1233 = vpop.permute.xlu0 %1232
        %v1235 = vadd.f32 %v1225, %v1233
        %v1236 = vtanh.pop %v1235
        %1238 = vrot.lane.b32.xlu0 %v1236, 64
        %v1239 = vpop.permute.xlu0 %1238
        %v1241 = vmul.f32 %v1223, %v1239
        %1243 = vrot.lane.b32.xlu0 %v1241, 32
        %v1244 = vpop.permute.xlu0 %1243
        %1246 = vst.msk [vmem:[#allocation2 + $0x7] sm:$0x1] %vm524, %v1244
        %v1247 = vld [vmem:[#allocation3 + $0x8] sm:$0x1]
        %v1248 = vsel %vm421, %v1244, 0
        %1250 = vmatprep.subr.mxu0 0.0
        %1251 = vmatpush1.msra.mxu0 %v416
        %1252 = vmatprep.subr.mxu0 0.0
        %1253 = vmatpush1.msra.mxu0 %v417
        %1254 = vmatprep.subr.mxu0 0.0
        %1255 = vmatpush1.msra.mxu0 %v418
        %1256 = vmatprep.subr.mxu0 0.0
        %1257 = vmatpush1.msra.mxu0 %v419
        %1258 = vmatprep.subr.mxu0 0.0
        %1259 = vmatpush1.msra.mxu0 0.0
        %1260 = vmatprep.subr.mxu0 0.0
        %1261 = vmatpush1.msra.mxu0 0.0
        %1262 = vmatprep.subr.mxu0 0.0
        %1263 = vmatpush1.msra.mxu0 0.0
        %1264 = vmatprep.subr.mxu0 0.0
        %1265 = vmatpush1.msra.mxu0 0.0
        %1266 = vmatprep.subr.mxu0 0.0
        %1267 = vmatpush1.msra.mxu0 0.0
        %1268 = vmatprep.subr.mxu0 0.0
        %1269 = vmatpush1.msra.mxu0 0.0
        %1270 = vmatprep.subr.mxu0 0.0
        %1271 = vmatpush1.msra.mxu0 0.0
        %1272 = vmatprep.subr.mxu0 0.0
        %1273 = vmatpush1.msra.mxu0 0.0
        %1274 = vmatprep.subr.mxu0 0.0
        %1275 = vmatpush1.msra.mxu0 0.0
        %1276 = vmatprep.subr.mxu0 0.0
        %1277 = vmatpush1.msra.mxu0 0.0
        %1278 = vmatprep.subr.mxu0 0.0
        %1279 = vmatpush1.msra.mxu0 0.0
        %1280 = vmatprep.subr.mxu0 0.0
        %1281 = vmatpush1.msra.mxu0 0.0
        %1282 = vmatprep.subr.mxu0 0.0
        %1283 = vmatpush1.msra.mxu0 0.0
        %1284 = vmatprep.subr.mxu0 0.0
        %1285 = vmatpush1.msra.mxu0 0.0
        %1286 = vmatprep.subr.mxu0 0.0
        %1287 = vmatpush1.msra.mxu0 0.0
        %1288 = vmatprep.subr.mxu0 0.0
        %1289 = vmatpush1.msra.mxu0 0.0
        %1290 = vmatprep.subr.mxu0 0.0
        %1291 = vmatpush1.msra.mxu0 0.0
        %1292 = vmatprep.subr.mxu0 0.0
        %1293 = vmatpush1.msra.mxu0 0.0
        %1294 = vmatprep.subr.mxu0 0.0
        %1295 = vmatpush1.msra.mxu0 0.0
        %1296 = vmatprep.subr.mxu0 0.0
        %1297 = vmatpush1.msra.mxu0 0.0
        %1298 = vmatprep.subr.mxu0 0.0
        %1299 = vmatpush1.msra.mxu0 0.0
        %1300 = vmatprep.subr.mxu0 0.0
        %1301 = vmatpush1.msra.mxu0 0.0
        %1302 = vmatprep.subr.mxu0 0.0
        %1303 = vmatpush1.msra.mxu0 0.0
        %1304 = vmatprep.subr.mxu0 0.0
        %1305 = vmatpush1.msra.mxu0 0.0
        %1306 = vmatprep.subr.mxu0 0.0
        %1307 = vmatpush1.msra.mxu0 0.0
        %1308 = vmatprep.subr.mxu0 0.0
        %1309 = vmatpush1.msra.mxu0 0.0
        %1310 = vmatprep.subr.mxu0 0.0
        %1311 = vmatpush1.msra.mxu0 0.0
        %1312 = vmatprep.subr.mxu0 0.0
        %1313 = vmatpush1.msra.mxu0 0.0
        %1314 = vmatprep.mubr.f32.mxu0 0.0
        %1315 = vmatmul.mubr.f32.gmra.mrb[0].mxu0 %v1248
        %v1316 = vpop.f32.mrb[0].mxu0
        %v1317 = vadd.f32 0.0, %v1316
        %v1318 = vpop.f32.mrb[0].mxu0
        %1319 = vdwg.mxu0
        %v1320 = vadd.f32 %v1247, %v1317
        %v1321 = vxor.u32 %v1320, 2147483648
        %v1322 = vmul.f32 %v1321, 1.442695
        %v1323 = vpow.pop %v1322
        %v1324 = vadd.f32 %v1323, 1.0
        %v1325 = vrcp.pop %v1324
        %v1326 = vmul.f32 1.0, %v1325
        %v1327 = vtanh.pop %v1320
        %v1328 = vmul.f32 %v1326, %v1235
        %1330 = vrot.lane.b32.xlu0 %v1327, 64
        %v1331 = vpop.permute.xlu0 %1330
        %v1333 = vmul.f32 %v1326, %v1331
        %1335 = vrot.lane.b32.xlu0 %v1333, 32
        %v1336 = vpop.permute.xlu0 %1335
        %v1338 = vadd.f32 %v1328, %v1336
        %v1339 = vtanh.pop %v1338
        %1341 = vrot.lane.b32.xlu0 %v1339, 64
        %v1342 = vpop.permute.xlu0 %1341
        %v1344 = vmul.f32 %v1326, %v1342
        %1346 = vrot.lane.b32.xlu0 %v1344, 32
        %v1347 = vpop.permute.xlu0 %1346
        %1349 = vst.msk [vmem:[#allocation2 + $0x8] sm:$0x1] %vm524, %v1347
        %v1350 = vld [vmem:[#allocation3 + $0x9] sm:$0x1]
        %v1351 = vsel %vm421, %v1347, 0
        %1353 = vmatprep.subr.mxu0 0.0
        %1354 = vmatpush1.msra.mxu0 %v416
        %1355 = vmatprep.subr.mxu0 0.0
        %1356 = vmatpush1.msra.mxu0 %v417
        %1357 = vmatprep.subr.mxu0 0.0
        %1358 = vmatpush1.msra.mxu0 %v418
        %1359 = vmatprep.subr.mxu0 0.0
        %1360 = vmatpush1.msra.mxu0 %v419
        %1361 = vmatprep.subr.mxu0 0.0
        %1362 = vmatpush1.msra.mxu0 0.0
        %1363 = vmatprep.subr.mxu0 0.0
        %1364 = vmatpush1.msra.mxu0 0.0
        %1365 = vmatprep.subr.mxu0 0.0
        %1366 = vmatpush1.msra.mxu0 0.0
        %1367 = vmatprep.subr.mxu0 0.0
        %1368 = vmatpush1.msra.mxu0 0.0
        %1369 = vmatprep.subr.mxu0 0.0
        %1370 = vmatpush1.msra.mxu0 0.0
        %1371 = vmatprep.subr.mxu0 0.0
        %1372 = vmatpush1.msra.mxu0 0.0
        %1373 = vmatprep.subr.mxu0 0.0
        %1374 = vmatpush1.msra.mxu0 0.0
        %1375 = vmatprep.subr.mxu0 0.0
        %1376 = vmatpush1.msra.mxu0 0.0
        %1377 = vmatprep.subr.mxu0 0.0
        %1378 = vmatpush1.msra.mxu0 0.0
        %1379 = vmatprep.subr.mxu0 0.0
        %1380 = vmatpush1.msra.mxu0 0.0
        %1381 = vmatprep.subr.mxu0 0.0
        %1382 = vmatpush1.msra.mxu0 0.0
        %1383 = vmatprep.subr.mxu0 0.0
        %1384 = vmatpush1.msra.mxu0 0.0
        %1385 = vmatprep.subr.mxu0 0.0
        %1386 = vmatpush1.msra.mxu0 0.0
        %1387 = vmatprep.subr.mxu0 0.0
        %1388 = vmatpush1.msra.mxu0 0.0
        %1389 = vmatprep.subr.mxu0 0.0
        %1390 = vmatpush1.msra.mxu0 0.0
        %1391 = vmatprep.subr.mxu0 0.0
        %1392 = vmatpush1.msra.mxu0 0.0
        %1393 = vmatprep.subr.mxu0 0.0
        %1394 = vmatpush1.msra.mxu0 0.0
        %1395 = vmatprep.subr.mxu0 0.0
        %1396 = vmatpush1.msra.mxu0 0.0
        %1397 = vmatprep.subr.mxu0 0.0
        %1398 = vmatpush1.msra.mxu0 0.0
        %1399 = vmatprep.subr.mxu0 0.0
        %1400 = vmatpush1.msra.mxu0 0.0
        %1401 = vmatprep.subr.mxu0 0.0
        %1402 = vmatpush1.msra.mxu0 0.0
        %1403 = vmatprep.subr.mxu0 0.0
        %1404 = vmatpush1.msra.mxu0 0.0
        %1405 = vmatprep.subr.mxu0 0.0
        %1406 = vmatpush1.msra.mxu0 0.0
        %1407 = vmatprep.subr.mxu0 0.0
        %1408 = vmatpush1.msra.mxu0 0.0
        %1409 = vmatprep.subr.mxu0 0.0
        %1410 = vmatpush1.msra.mxu0 0.0
        %1411 = vmatprep.subr.mxu0 0.0
        %1412 = vmatpush1.msra.mxu0 0.0
        %1413 = vmatprep.subr.mxu0 0.0
        %1414 = vmatpush1.msra.mxu0 0.0
        %1415 = vmatprep.subr.mxu0 0.0
        %1416 = vmatpush1.msra.mxu0 0.0
        %1417 = vmatprep.mubr.f32.mxu0 0.0
        %1418 = vmatmul.mubr.f32.gmra.mrb[0].mxu0 %v1351
        %v1419 = vpop.f32.mrb[0].mxu0
        %v1420 = vadd.f32 0.0, %v1419
        %v1421 = vpop.f32.mrb[0].mxu0
        %1422 = vdwg.mxu0
        %v1423 = vadd.f32 %v1350, %v1420
        %v1424 = vxor.u32 %v1423, 2147483648
        %v1425 = vmul.f32 %v1424, 1.442695
        %v1426 = vpow.pop %v1425
        %v1427 = vadd.f32 %v1426, 1.0
        %v1428 = vrcp.pop %v1427
        %v1429 = vmul.f32 1.0, %v1428
        %v1430 = vtanh.pop %v1423
        %v1431 = vmul.f32 %v1429, %v1338
        %1433 = vrot.lane.b32.xlu0 %v1430, 64
        %v1434 = vpop.permute.xlu0 %1433
        %v1436 = vmul.f32 %v1429, %v1434
        %1438 = vrot.lane.b32.xlu0 %v1436, 32
        %v1439 = vpop.permute.xlu0 %1438
        %v1441 = vadd.f32 %v1431, %v1439
        %v1442 = vtanh.pop %v1441
        %1444 = vrot.lane.b32.xlu0 %v1442, 64
        %v1445 = vpop.permute.xlu0 %1444
        %v1447 = vmul.f32 %v1429, %v1445
        %1449 = vrot.lane.b32.xlu0 %v1447, 32
        %v1450 = vpop.permute.xlu0 %1449
        %1452 = vst.msk [vmem:[#allocation2 + $0x9] sm:$0x1] %vm524, %v1450
        %v1453 = vld [vmem:[#allocation3 + $0xa] sm:$0x1]
        %v1454 = vsel %vm421, %v1450, 0
        %1456 = vmatprep.subr.mxu0 0.0
        %1457 = vmatpush1.msra.mxu0 %v416
        %1458 = vmatprep.subr.mxu0 0.0
        %1459 = vmatpush1.msra.mxu0 %v417
        %1460 = vmatprep.subr.mxu0 0.0
        %1461 = vmatpush1.msra.mxu0 %v418
        %1462 = vmatprep.subr.mxu0 0.0
        %1463 = vmatpush1.msra.mxu0 %v419
        %1464 = vmatprep.subr.mxu0 0.0
        %1465 = vmatpush1.msra.mxu0 0.0
        %1466 = vmatprep.subr.mxu0 0.0
        %1467 = vmatpush1.msra.mxu0 0.0
        %1468 = vmatprep.subr.mxu0 0.0
        %1469 = vmatpush1.msra.mxu0 0.0
        %1470 = vmatprep.subr.mxu0 0.0
        %1471 = vmatpush1.msra.mxu0 0.0
        %1472 = vmatprep.subr.mxu0 0.0
        %1473 = vmatpush1.msra.mxu0 0.0
        %1474 = vmatprep.subr.mxu0 0.0
        %1475 = vmatpush1.msra.mxu0 0.0
        %1476 = vmatprep.subr.mxu0 0.0
        %1477 = vmatpush1.msra.mxu0 0.0
        %1478 = vmatprep.subr.mxu0 0.0
        %1479 = vmatpush1.msra.mxu0 0.0
        %1480 = vmatprep.subr.mxu0 0.0
        %1481 = vmatpush1.msra.mxu0 0.0
        %1482 = vmatprep.subr.mxu0 0.0
        %1483 = vmatpush1.msra.mxu0 0.0
        %1484 = vmatprep.subr.mxu0 0.0
        %1485 = vmatpush1.msra.mxu0 0.0
        %1486 = vmatprep.subr.mxu0 0.0
        %1487 = vmatpush1.msra.mxu0 0.0
        %1488 = vmatprep.subr.mxu0 0.0
        %1489 = vmatpush1.msra.mxu0 0.0
        %1490 = vmatprep.subr.mxu0 0.0
        %1491 = vmatpush1.msra.mxu0 0.0
        %1492 = vmatprep.subr.mxu0 0.0
        %1493 = vmatpush1.msra.mxu0 0.0
        %1494 = vmatprep.subr.mxu0 0.0
        %1495 = vmatpush1.msra.mxu0 0.0
        %1496 = vmatprep.subr.mxu0 0.0
        %1497 = vmatpush1.msra.mxu0 0.0
        %1498 = vmatprep.subr.mxu0 0.0
        %1499 = vmatpush1.msra.mxu0 0.0
        %1500 = vmatprep.subr.mxu0 0.0
        %1501 = vmatpush1.msra.mxu0 0.0
        %1502 = vmatprep.subr.mxu0 0.0
        %1503 = vmatpush1.msra.mxu0 0.0
        %1504 = vmatprep.subr.mxu0 0.0
        %1505 = vmatpush1.msra.mxu0 0.0
        %1506 = vmatprep.subr.mxu0 0.0
        %1507 = vmatpush1.msra.mxu0 0.0
        %1508 = vmatprep.subr.mxu0 0.0
        %1509 = vmatpush1.msra.mxu0 0.0
        %1510 = vmatprep.subr.mxu0 0.0
        %1511 = vmatpush1.msra.mxu0 0.0
        %1512 = vmatprep.subr.mxu0 0.0
        %1513 = vmatpush1.msra.mxu0 0.0
        %1514 = vmatprep.subr.mxu0 0.0
        %1515 = vmatpush1.msra.mxu0 0.0
        %1516 = vmatprep.subr.mxu0 0.0
        %1517 = vmatpush1.msra.mxu0 0.0
        %1518 = vmatprep.subr.mxu0 0.0
        %1519 = vmatpush1.msra.mxu0 0.0
        %1520 = vmatprep.mubr.f32.mxu0 0.0
        %1521 = vmatmul.mubr.f32.gmra.mrb[0].mxu0 %v1454
        %v1522 = vpop.f32.mrb[0].mxu0
        %v1523 = vadd.f32 0.0, %v1522
        %v1524 = vpop.f32.mrb[0].mxu0
        %1525 = vdwg.mxu0
        %v1526 = vadd.f32 %v1453, %v1523
        %v1527 = vxor.u32 %v1526, 2147483648
        %v1528 = vmul.f32 %v1527, 1.442695
        %v1529 = vpow.pop %v1528
        %v1530 = vadd.f32 %v1529, 1.0
        %v1531 = vrcp.pop %v1530
        %v1532 = vmul.f32 1.0, %v1531
        %v1533 = vtanh.pop %v1526
        %v1534 = vmul.f32 %v1532, %v1441
        %1536 = vrot.lane.b32.xlu0 %v1533, 64
        %v1537 = vpop.permute.xlu0 %1536
        %v1539 = vmul.f32 %v1532, %v1537
        %1541 = vrot.lane.b32.xlu0 %v1539, 32
        %v1542 = vpop.permute.xlu0 %1541
        %v1544 = vadd.f32 %v1534, %v1542
        %v1545 = vtanh.pop %v1544
        %1547 = vrot.lane.b32.xlu0 %v1545, 64
        %v1548 = vpop.permute.xlu0 %1547
        %v1550 = vmul.f32 %v1532, %v1548
        %1552 = vrot.lane.b32.xlu0 %v1550, 32
        %v1553 = vpop.permute.xlu0 %1552
        %1555 = vst.msk [vmem:[#allocation2 + $0xa] sm:$0x1] %vm524, %v1553
        %v1556 = vld [vmem:[#allocation3 + $0xb] sm:$0x1]
        %v1557 = vsel %vm421, %v1553, 0
        %1559 = vmatprep.subr.mxu0 0.0
        %1560 = vmatpush1.msra.mxu0 %v416
        %1561 = vmatprep.subr.mxu0 0.0
        %1562 = vmatpush1.msra.mxu0 %v417
        %1563 = vmatprep.subr.mxu0 0.0
        %1564 = vmatpush1.msra.mxu0 %v418
        %1565 = vmatprep.subr.mxu0 0.0
        %1566 = vmatpush1.msra.mxu0 %v419
        %1567 = vmatprep.subr.mxu0 0.0
        %1568 = vmatpush1.msra.mxu0 0.0
        %1569 = vmatprep.subr.mxu0 0.0
        %1570 = vmatpush1.msra.mxu0 0.0
        %1571 = vmatprep.subr.mxu0 0.0
        %1572 = vmatpush1.msra.mxu0 0.0
        %1573 = vmatprep.subr.mxu0 0.0
        %1574 = vmatpush1.msra.mxu0 0.0
        %1575 = vmatprep.subr.mxu0 0.0
        %1576 = vmatpush1.msra.mxu0 0.0
        %1577 = vmatprep.subr.mxu0 0.0
        %1578 = vmatpush1.msra.mxu0 0.0
        %1579 = vmatprep.subr.mxu0 0.0
        %1580 = vmatpush1.msra.mxu0 0.0
        %1581 = vmatprep.subr.mxu0 0.0
        %1582 = vmatpush1.msra.mxu0 0.0
        %1583 = vmatprep.subr.mxu0 0.0
        %1584 = vmatpush1.msra.mxu0 0.0
        %1585 = vmatprep.subr.mxu0 0.0
        %1586 = vmatpush1.msra.mxu0 0.0
        %1587 = vmatprep.subr.mxu0 0.0
        %1588 = vmatpush1.msra.mxu0 0.0
        %1589 = vmatprep.subr.mxu0 0.0
        %1590 = vmatpush1.msra.mxu0 0.0
        %1591 = vmatprep.subr.mxu0 0.0
        %1592 = vmatpush1.msra.mxu0 0.0
        %1593 = vmatprep.subr.mxu0 0.0
        %1594 = vmatpush1.msra.mxu0 0.0
        %1595 = vmatprep.subr.mxu0 0.0
        %1596 = vmatpush1.msra.mxu0 0.0
        %1597 = vmatprep.subr.mxu0 0.0
        %1598 = vmatpush1.msra.mxu0 0.0
        %1599 = vmatprep.subr.mxu0 0.0
        %1600 = vmatpush1.msra.mxu0 0.0
        %1601 = vmatprep.subr.mxu0 0.0
        %1602 = vmatpush1.msra.mxu0 0.0
        %1603 = vmatprep.subr.mxu0 0.0
        %1604 = vmatpush1.msra.mxu0 0.0
        %1605 = vmatprep.subr.mxu0 0.0
        %1606 = vmatpush1.msra.mxu0 0.0
        %1607 = vmatprep.subr.mxu0 0.0
        %1608 = vmatpush1.msra.mxu0 0.0
        %1609 = vmatprep.subr.mxu0 0.0
        %1610 = vmatpush1.msra.mxu0 0.0
        %1611 = vmatprep.subr.mxu0 0.0
        %1612 = vmatpush1.msra.mxu0 0.0
        %1613 = vmatprep.subr.mxu0 0.0
        %1614 = vmatpush1.msra.mxu0 0.0
        %1615 = vmatprep.subr.mxu0 0.0
        %1616 = vmatpush1.msra.mxu0 0.0
        %1617 = vmatprep.subr.mxu0 0.0
        %1618 = vmatpush1.msra.mxu0 0.0
        %1619 = vmatprep.subr.mxu0 0.0
        %1620 = vmatpush1.msra.mxu0 0.0
        %1621 = vmatprep.subr.mxu0 0.0
        %1622 = vmatpush1.msra.mxu0 0.0
        %1623 = vmatprep.mubr.f32.mxu0 0.0
        %1624 = vmatmul.mubr.f32.gmra.mrb[0].mxu0 %v1557
        %v1625 = vpop.f32.mrb[0].mxu0
        %v1626 = vadd.f32 0.0, %v1625
        %v1627 = vpop.f32.mrb[0].mxu0
        %1628 = vdwg.mxu0
        %v1629 = vadd.f32 %v1556, %v1626
        %v1630 = vxor.u32 %v1629, 2147483648
        %v1631 = vmul.f32 %v1630, 1.442695
        %v1632 = vpow.pop %v1631
        %v1633 = vadd.f32 %v1632, 1.0
        %v1634 = vrcp.pop %v1633
        %v1635 = vmul.f32 1.0, %v1634
        %v1636 = vtanh.pop %v1629
        %v1637 = vmul.f32 %v1635, %v1544
        %1639 = vrot.lane.b32.xlu0 %v1636, 64
        %v1640 = vpop.permute.xlu0 %1639
        %v1642 = vmul.f32 %v1635, %v1640
        %1644 = vrot.lane.b32.xlu0 %v1642, 32
        %v1645 = vpop.permute.xlu0 %1644
        %v1647 = vadd.f32 %v1637, %v1645
        %v1648 = vtanh.pop %v1647
        %1650 = vrot.lane.b32.xlu0 %v1648, 64
        %v1651 = vpop.permute.xlu0 %1650
        %v1653 = vmul.f32 %v1635, %v1651
        %1655 = vrot.lane.b32.xlu0 %v1653, 32
        %v1656 = vpop.permute.xlu0 %1655
        %1658 = vst.msk [vmem:[#allocation2 + $0xb] sm:$0x1] %vm524, %v1656
        %v1659 = vld [vmem:[#allocation3 + $0xc] sm:$0x1]
        %v1660 = vsel %vm421, %v1656, 0
        %1662 = vmatprep.subr.mxu0 0.0
        %1663 = vmatpush1.msra.mxu0 %v416
        %1664 = vmatprep.subr.mxu0 0.0
        %1665 = vmatpush1.msra.mxu0 %v417
        %1666 = vmatprep.subr.mxu0 0.0
        %1667 = vmatpush1.msra.mxu0 %v418
        %1668 = vmatprep.subr.mxu0 0.0
        %1669 = vmatpush1.msra.mxu0 %v419
        %1670 = vmatprep.subr.mxu0 0.0
        %1671 = vmatpush1.msra.mxu0 0.0
        %1672 = vmatprep.subr.mxu0 0.0
        %1673 = vmatpush1.msra.mxu0 0.0
        %1674 = vmatprep.subr.mxu0 0.0
        %1675 = vmatpush1.msra.mxu0 0.0
        %1676 = vmatprep.subr.mxu0 0.0
        %1677 = vmatpush1.msra.mxu0 0.0
        %1678 = vmatprep.subr.mxu0 0.0
        %1679 = vmatpush1.msra.mxu0 0.0
        %1680 = vmatprep.subr.mxu0 0.0
        %1681 = vmatpush1.msra.mxu0 0.0
        %1682 = vmatprep.subr.mxu0 0.0
        %1683 = vmatpush1.msra.mxu0 0.0
        %1684 = vmatprep.subr.mxu0 0.0
        %1685 = vmatpush1.msra.mxu0 0.0
        %1686 = vmatprep.subr.mxu0 0.0
        %1687 = vmatpush1.msra.mxu0 0.0
        %1688 = vmatprep.subr.mxu0 0.0
        %1689 = vmatpush1.msra.mxu0 0.0
        %1690 = vmatprep.subr.mxu0 0.0
        %1691 = vmatpush1.msra.mxu0 0.0
        %1692 = vmatprep.subr.mxu0 0.0
        %1693 = vmatpush1.msra.mxu0 0.0
        %1694 = vmatprep.subr.mxu0 0.0
        %1695 = vmatpush1.msra.mxu0 0.0
        %1696 = vmatprep.subr.mxu0 0.0
        %1697 = vmatpush1.msra.mxu0 0.0
        %1698 = vmatprep.subr.mxu0 0.0
        %1699 = vmatpush1.msra.mxu0 0.0
        %1700 = vmatprep.subr.mxu0 0.0
        %1701 = vmatpush1.msra.mxu0 0.0
        %1702 = vmatprep.subr.mxu0 0.0
        %1703 = vmatpush1.msra.mxu0 0.0
        %1704 = vmatprep.subr.mxu0 0.0
        %1705 = vmatpush1.msra.mxu0 0.0
        %1706 = vmatprep.subr.mxu0 0.0
        %1707 = vmatpush1.msra.mxu0 0.0
        %1708 = vmatprep.subr.mxu0 0.0
        %1709 = vmatpush1.msra.mxu0 0.0
        %1710 = vmatprep.subr.mxu0 0.0
        %1711 = vmatpush1.msra.mxu0 0.0
        %1712 = vmatprep.subr.mxu0 0.0
        %1713 = vmatpush1.msra.mxu0 0.0
        %1714 = vmatprep.subr.mxu0 0.0
        %1715 = vmatpush1.msra.mxu0 0.0
        %1716 = vmatprep.subr.mxu0 0.0
        %1717 = vmatpush1.msra.mxu0 0.0
        %1718 = vmatprep.subr.mxu0 0.0
        %1719 = vmatpush1.msra.mxu0 0.0
        %1720 = vmatprep.subr.mxu0 0.0
        %1721 = vmatpush1.msra.mxu0 0.0
        %1722 = vmatprep.subr.mxu0 0.0
        %1723 = vmatpush1.msra.mxu0 0.0
        %1724 = vmatprep.subr.mxu0 0.0
        %1725 = vmatpush1.msra.mxu0 0.0
        %1726 = vmatprep.mubr.f32.mxu0 0.0
        %1727 = vmatmul.mubr.f32.gmra.mrb[0].mxu0 %v1660
        %v1728 = vpop.f32.mrb[0].mxu0
        %v1729 = vadd.f32 0.0, %v1728
        %v1730 = vpop.f32.mrb[0].mxu0
        %1731 = vdwg.mxu0
        %v1732 = vadd.f32 %v1659, %v1729
        %v1733 = vxor.u32 %v1732, 2147483648
        %v1734 = vmul.f32 %v1733, 1.442695
        %v1735 = vpow.pop %v1734
        %v1736 = vadd.f32 %v1735, 1.0
        %v1737 = vrcp.pop %v1736
        %v1738 = vmul.f32 1.0, %v1737
        %v1739 = vtanh.pop %v1732
        %v1740 = vmul.f32 %v1738, %v1647
        %1742 = vrot.lane.b32.xlu0 %v1739, 64
        %v1743 = vpop.permute.xlu0 %1742
        %v1745 = vmul.f32 %v1738, %v1743
        %1747 = vrot.lane.b32.xlu0 %v1745, 32
        %v1748 = vpop.permute.xlu0 %1747
        %v1750 = vadd.f32 %v1740, %v1748
        %v1751 = vtanh.pop %v1750
        %1753 = vrot.lane.b32.xlu0 %v1751, 64
        %v1754 = vpop.permute.xlu0 %1753
        %v1756 = vmul.f32 %v1738, %v1754
        %1758 = vrot.lane.b32.xlu0 %v1756, 32
        %v1759 = vpop.permute.xlu0 %1758
        %1761 = vst.msk [vmem:[#allocation2 + $0xc] sm:$0x1] %vm524, %v1759
        %v1762 = vld [vmem:[#allocation3 + $0xd] sm:$0x1]
        %v1763 = vsel %vm421, %v1759, 0
        %1765 = vmatprep.subr.mxu0 0.0
        %1766 = vmatpush1.msra.mxu0 %v416
        %1767 = vmatprep.subr.mxu0 0.0
        %1768 = vmatpush1.msra.mxu0 %v417
        %1769 = vmatprep.subr.mxu0 0.0
        %1770 = vmatpush1.msra.mxu0 %v418
        %1771 = vmatprep.subr.mxu0 0.0
        %1772 = vmatpush1.msra.mxu0 %v419
        %1773 = vmatprep.subr.mxu0 0.0
        %1774 = vmatpush1.msra.mxu0 0.0
        %1775 = vmatprep.subr.mxu0 0.0
        %1776 = vmatpush1.msra.mxu0 0.0
        %1777 = vmatprep.subr.mxu0 0.0
        %1778 = vmatpush1.msra.mxu0 0.0
        %1779 = vmatprep.subr.mxu0 0.0
        %1780 = vmatpush1.msra.mxu0 0.0
        %1781 = vmatprep.subr.mxu0 0.0
        %1782 = vmatpush1.msra.mxu0 0.0
        %1783 = vmatprep.subr.mxu0 0.0
        %1784 = vmatpush1.msra.mxu0 0.0
        %1785 = vmatprep.subr.mxu0 0.0
        %1786 = vmatpush1.msra.mxu0 0.0
        %1787 = vmatprep.subr.mxu0 0.0
        %1788 = vmatpush1.msra.mxu0 0.0
        %1789 = vmatprep.subr.mxu0 0.0
        %1790 = vmatpush1.msra.mxu0 0.0
        %1791 = vmatprep.subr.mxu0 0.0
        %1792 = vmatpush1.msra.mxu0 0.0
        %1793 = vmatprep.subr.mxu0 0.0
        %1794 = vmatpush1.msra.mxu0 0.0
        %1795 = vmatprep.subr.mxu0 0.0
        %1796 = vmatpush1.msra.mxu0 0.0
        %1797 = vmatprep.subr.mxu0 0.0
        %1798 = vmatpush1.msra.mxu0 0.0
        %1799 = vmatprep.subr.mxu0 0.0
        %1800 = vmatpush1.msra.mxu0 0.0
        %1801 = vmatprep.subr.mxu0 0.0
        %1802 = vmatpush1.msra.mxu0 0.0
        %1803 = vmatprep.subr.mxu0 0.0
        %1804 = vmatpush1.msra.mxu0 0.0
        %1805 = vmatprep.subr.mxu0 0.0
        %1806 = vmatpush1.msra.mxu0 0.0
        %1807 = vmatprep.subr.mxu0 0.0
        %1808 = vmatpush1.msra.mxu0 0.0
        %1809 = vmatprep.subr.mxu0 0.0
        %1810 = vmatpush1.msra.mxu0 0.0
        %1811 = vmatprep.subr.mxu0 0.0
        %1812 = vmatpush1.msra.mxu0 0.0
        %1813 = vmatprep.subr.mxu0 0.0
        %1814 = vmatpush1.msra.mxu0 0.0
        %1815 = vmatprep.subr.mxu0 0.0
        %1816 = vmatpush1.msra.mxu0 0.0
        %1817 = vmatprep.subr.mxu0 0.0
        %1818 = vmatpush1.msra.mxu0 0.0
        %1819 = vmatprep.subr.mxu0 0.0
        %1820 = vmatpush1.msra.mxu0 0.0
        %1821 = vmatprep.subr.mxu0 0.0
        %1822 = vmatpush1.msra.mxu0 0.0
        %1823 = vmatprep.subr.mxu0 0.0
        %1824 = vmatpush1.msra.mxu0 0.0
        %1825 = vmatprep.subr.mxu0 0.0
        %1826 = vmatpush1.msra.mxu0 0.0
        %1827 = vmatprep.subr.mxu0 0.0
        %1828 = vmatpush1.msra.mxu0 0.0
        %1829 = vmatprep.mubr.f32.mxu0 0.0
        %1830 = vmatmul.mubr.f32.gmra.mrb[0].mxu0 %v1763
        %v1831 = vpop.f32.mrb[0].mxu0
        %v1832 = vadd.f32 0.0, %v1831
        %v1833 = vpop.f32.mrb[0].mxu0
        %1834 = vdwg.mxu0
        %v1835 = vadd.f32 %v1762, %v1832
        %v1836 = vxor.u32 %v1835, 2147483648
        %v1837 = vmul.f32 %v1836, 1.442695
        %v1838 = vpow.pop %v1837
        %v1839 = vadd.f32 %v1838, 1.0
        %v1840 = vrcp.pop %v1839
        %v1841 = vmul.f32 1.0, %v1840
        %v1842 = vtanh.pop %v1835
        %v1843 = vmul.f32 %v1841, %v1750
        %1845 = vrot.lane.b32.xlu0 %v1842, 64
        %v1846 = vpop.permute.xlu0 %1845
        %v1848 = vmul.f32 %v1841, %v1846
        %1850 = vrot.lane.b32.xlu0 %v1848, 32
        %v1851 = vpop.permute.xlu0 %1850
        %v1853 = vadd.f32 %v1843, %v1851
        %v1854 = vtanh.pop %v1853
        %1856 = vrot.lane.b32.xlu0 %v1854, 64
        %v1857 = vpop.permute.xlu0 %1856
        %v1859 = vmul.f32 %v1841, %v1857
        %1861 = vrot.lane.b32.xlu0 %v1859, 32
        %v1862 = vpop.permute.xlu0 %1861
        %1864 = vst.msk [vmem:[#allocation2 + $0xd] sm:$0x1] %vm524, %v1862
        %v1865 = vld [vmem:[#allocation3 + $0xe] sm:$0x1]
        %v1866 = vsel %vm421, %v1862, 0
        %1868 = vmatprep.subr.mxu0 0.0
        %1869 = vmatpush1.msra.mxu0 %v416
        %1870 = vmatprep.subr.mxu0 0.0
        %1871 = vmatpush1.msra.mxu0 %v417
        %1872 = vmatprep.subr.mxu0 0.0
        %1873 = vmatpush1.msra.mxu0 %v418
        %1874 = vmatprep.subr.mxu0 0.0
        %1875 = vmatpush1.msra.mxu0 %v419
        %1876 = vmatprep.subr.mxu0 0.0
        %1877 = vmatpush1.msra.mxu0 0.0
        %1878 = vmatprep.subr.mxu0 0.0
        %1879 = vmatpush1.msra.mxu0 0.0
        %1880 = vmatprep.subr.mxu0 0.0
        %1881 = vmatpush1.msra.mxu0 0.0
        %1882 = vmatprep.subr.mxu0 0.0
        %1883 = vmatpush1.msra.mxu0 0.0
        %1884 = vmatprep.subr.mxu0 0.0
        %1885 = vmatpush1.msra.mxu0 0.0
        %1886 = vmatprep.subr.mxu0 0.0
        %1887 = vmatpush1.msra.mxu0 0.0
        %1888 = vmatprep.subr.mxu0 0.0
        %1889 = vmatpush1.msra.mxu0 0.0
        %1890 = vmatprep.subr.mxu0 0.0
        %1891 = vmatpush1.msra.mxu0 0.0
        %1892 = vmatprep.subr.mxu0 0.0
        %1893 = vmatpush1.msra.mxu0 0.0
        %1894 = vmatprep.subr.mxu0 0.0
        %1895 = vmatpush1.msra.mxu0 0.0
        %1896 = vmatprep.subr.mxu0 0.0
        %1897 = vmatpush1.msra.mxu0 0.0
        %1898 = vmatprep.subr.mxu0 0.0
        %1899 = vmatpush1.msra.mxu0 0.0
        %1900 = vmatprep.subr.mxu0 0.0
        %1901 = vmatpush1.msra.mxu0 0.0
        %1902 = vmatprep.subr.mxu0 0.0
        %1903 = vmatpush1.msra.mxu0 0.0
        %1904 = vmatprep.subr.mxu0 0.0
        %1905 = vmatpush1.msra.mxu0 0.0
        %1906 = vmatprep.subr.mxu0 0.0
        %1907 = vmatpush1.msra.mxu0 0.0
        %1908 = vmatprep.subr.mxu0 0.0
        %1909 = vmatpush1.msra.mxu0 0.0
        %1910 = vmatprep.subr.mxu0 0.0
        %1911 = vmatpush1.msra.mxu0 0.0
        %1912 = vmatprep.subr.mxu0 0.0
        %1913 = vmatpush1.msra.mxu0 0.0
        %1914 = vmatprep.subr.mxu0 0.0
        %1915 = vmatpush1.msra.mxu0 0.0
        %1916 = vmatprep.subr.mxu0 0.0
        %1917 = vmatpush1.msra.mxu0 0.0
        %1918 = vmatprep.subr.mxu0 0.0
        %1919 = vmatpush1.msra.mxu0 0.0
        %1920 = vmatprep.subr.mxu0 0.0
        %1921 = vmatpush1.msra.mxu0 0.0
        %1922 = vmatprep.subr.mxu0 0.0
        %1923 = vmatpush1.msra.mxu0 0.0
        %1924 = vmatprep.subr.mxu0 0.0
        %1925 = vmatpush1.msra.mxu0 0.0
        %1926 = vmatprep.subr.mxu0 0.0
        %1927 = vmatpush1.msra.mxu0 0.0
        %1928 = vmatprep.subr.mxu0 0.0
        %1929 = vmatpush1.msra.mxu0 0.0
        %1930 = vmatprep.subr.mxu0 0.0
        %1931 = vmatpush1.msra.mxu0 0.0
        %1932 = vmatprep.mubr.f32.mxu0 0.0
        %1933 = vmatmul.mubr.f32.gmra.mrb[0].mxu0 %v1866
        %v1934 = vpop.f32.mrb[0].mxu0
        %v1935 = vadd.f32 0.0, %v1934
        %v1936 = vpop.f32.mrb[0].mxu0
        %1937 = vdwg.mxu0
        %v1938 = vadd.f32 %v1865, %v1935
        %v1939 = vxor.u32 %v1938, 2147483648
        %v1940 = vmul.f32 %v1939, 1.442695
        %v1941 = vpow.pop %v1940
        %v1942 = vadd.f32 %v1941, 1.0
        %v1943 = vrcp.pop %v1942
        %v1944 = vmul.f32 1.0, %v1943
        %v1945 = vtanh.pop %v1938
        %v1946 = vmul.f32 %v1944, %v1853
        %1948 = vrot.lane.b32.xlu0 %v1945, 64
        %v1949 = vpop.permute.xlu0 %1948
        %v1951 = vmul.f32 %v1944, %v1949
        %1953 = vrot.lane.b32.xlu0 %v1951, 32
        %v1954 = vpop.permute.xlu0 %1953
        %v1956 = vadd.f32 %v1946, %v1954
        %v1957 = vtanh.pop %v1956
        %1959 = vrot.lane.b32.xlu0 %v1957, 64
        %v1960 = vpop.permute.xlu0 %1959
        %v1962 = vmul.f32 %v1944, %v1960
        %1964 = vrot.lane.b32.xlu0 %v1962, 32
        %v1965 = vpop.permute.xlu0 %1964
        %1967 = vst.msk [vmem:[#allocation2 + $0xe] sm:$0x1] %vm524, %v1965
        %v1968 = vld [vmem:[#allocation3 + $0xf] sm:$0x1]
        %v1969 = vsel %vm421, %v1965, 0
        %1971 = vmatprep.subr.mxu0 0.0
        %1972 = vmatpush1.msra.mxu0 %v416
        %1973 = vmatprep.subr.mxu0 0.0
        %1974 = vmatpush1.msra.mxu0 %v417
        %1975 = vmatprep.subr.mxu0 0.0
        %1976 = vmatpush1.msra.mxu0 %v418
        %1977 = vmatprep.subr.mxu0 0.0
        %1978 = vmatpush1.msra.mxu0 %v419
        %1979 = vmatprep.subr.mxu0 0.0
        %1980 = vmatpush1.msra.mxu0 0.0
        %1981 = vmatprep.subr.mxu0 0.0
        %1982 = vmatpush1.msra.mxu0 0.0
        %1983 = vmatprep.subr.mxu0 0.0
        %1984 = vmatpush1.msra.mxu0 0.0
        %1985 = vmatprep.subr.mxu0 0.0
        %1986 = vmatpush1.msra.mxu0 0.0
        %1987 = vmatprep.subr.mxu0 0.0
        %1988 = vmatpush1.msra.mxu0 0.0
        %1989 = vmatprep.subr.mxu0 0.0
        %1990 = vmatpush1.msra.mxu0 0.0
        %1991 = vmatprep.subr.mxu0 0.0
        %1992 = vmatpush1.msra.mxu0 0.0
        %1993 = vmatprep.subr.mxu0 0.0
        %1994 = vmatpush1.msra.mxu0 0.0
        %1995 = vmatprep.subr.mxu0 0.0
        %1996 = vmatpush1.msra.mxu0 0.0
        %1997 = vmatprep.subr.mxu0 0.0
        %1998 = vmatpush1.msra.mxu0 0.0
        %1999 = vmatprep.subr.mxu0 0.0
        %2000 = vmatpush1.msra.mxu0 0.0
        %2001 = vmatprep.subr.mxu0 0.0
        %2002 = vmatpush1.msra.mxu0 0.0
        %2003 = vmatprep.subr.mxu0 0.0
        %2004 = vmatpush1.msra.mxu0 0.0
        %2005 = vmatprep.subr.mxu0 0.0
        %2006 = vmatpush1.msra.mxu0 0.0
        %2007 = vmatprep.subr.mxu0 0.0
        %2008 = vmatpush1.msra.mxu0 0.0
        %2009 = vmatprep.subr.mxu0 0.0
        %2010 = vmatpush1.msra.mxu0 0.0
        %2011 = vmatprep.subr.mxu0 0.0
        %2012 = vmatpush1.msra.mxu0 0.0
        %2013 = vmatprep.subr.mxu0 0.0
        %2014 = vmatpush1.msra.mxu0 0.0
        %2015 = vmatprep.subr.mxu0 0.0
        %2016 = vmatpush1.msra.mxu0 0.0
        %2017 = vmatprep.subr.mxu0 0.0
        %2018 = vmatpush1.msra.mxu0 0.0
        %2019 = vmatprep.subr.mxu0 0.0
        %2020 = vmatpush1.msra.mxu0 0.0
        %2021 = vmatprep.subr.mxu0 0.0
        %2022 = vmatpush1.msra.mxu0 0.0
        %2023 = vmatprep.subr.mxu0 0.0
        %2024 = vmatpush1.msra.mxu0 0.0
        %2025 = vmatprep.subr.mxu0 0.0
        %2026 = vmatpush1.msra.mxu0 0.0
        %2027 = vmatprep.subr.mxu0 0.0
        %2028 = vmatpush1.msra.mxu0 0.0
        %2029 = vmatprep.subr.mxu0 0.0
        %2030 = vmatpush1.msra.mxu0 0.0
        %2031 = vmatprep.subr.mxu0 0.0
        %2032 = vmatpush1.msra.mxu0 0.0
        %2033 = vmatprep.subr.mxu0 0.0
        %2034 = vmatpush1.msra.mxu0 0.0
        %2035 = vmatprep.mubr.f32.mxu0 0.0
        %2036 = vmatmul.mubr.f32.gmra.mrb[0].mxu0 %v1969
        %v2037 = vpop.f32.mrb[0].mxu0
        %v2038 = vadd.f32 0.0, %v2037
        %v2039 = vpop.f32.mrb[0].mxu0
        %2040 = vdwg.mxu0
        %v2041 = vadd.f32 %v1968, %v2038
        %v2042 = vxor.u32 %v2041, 2147483648
        %v2043 = vmul.f32 %v2042, 1.442695
        %v2044 = vpow.pop %v2043
        %v2045 = vadd.f32 %v2044, 1.0
        %v2046 = vrcp.pop %v2045
        %v2047 = vmul.f32 1.0, %v2046
        %v2048 = vtanh.pop %v2041
        %v2049 = vmul.f32 %v2047, %v1956
        %2051 = vrot.lane.b32.xlu0 %v2048, 64
        %v2052 = vpop.permute.xlu0 %2051
        %v2054 = vmul.f32 %v2047, %v2052
        %2056 = vrot.lane.b32.xlu0 %v2054, 32
        %v2057 = vpop.permute.xlu0 %2056
        %v2059 = vadd.f32 %v2049, %v2057
        %v2060 = vtanh.pop %v2059
        %2062 = vrot.lane.b32.xlu0 %v2060, 64
        %v2063 = vpop.permute.xlu0 %2062
        %v2065 = vmul.f32 %v2047, %v2063
        %2067 = vrot.lane.b32.xlu0 %v2065, 32
        %v2068 = vpop.permute.xlu0 %2067
        %2070 = vst.msk [vmem:[#allocation2 + $0xf] sm:$0x1] %vm524, %v2068
        %v2071 = vld [vmem:[#allocation2] sm:$0xff]
        %v2072 = vld [vmem:[#allocation2 + $0x8] sm:$0xff]
        %v2073 = vld [vmem:[#allocation6] sm:$0xff]
        %v2074 = vld [vmem:[#allocation6 + $0x8] sm:$0xff]
        %v2075 = vld [vmem:[#allocation6 + $0x10] sm:$0xff]
        %v2076 = vld [vmem:[#allocation6 + $0x18] sm:$0xff]
        %v2077 = vld [vmem:[%s4 + $0x1] sm:$0x1]
        %v2078 = vlaneseq
        %v2079 = vshrl.u32 %v2078, 7
        %v2080 = vsub.s32 0, %v2079
        %v2081 = vrot.slane %v2077, %v2080
        %v2083 = vsel %vm421, %v2071, 0
        %v2086 = vsel %vm421, %v2072, 0
        %2088 = vmatprep.subr.mxu0 0.0
        %2089 = vmatpush1.msra.mxu0 %v2073
        %2090 = vmatprep.subr.mxu0 0.0
        %2091 = vmatpush1.msra.mxu0 %v2074
        %2092 = vmatprep.subr.mxu0 0.0
        %2093 = vmatpush1.msra.mxu0 %v2075
        %2094 = vmatprep.subr.mxu0 0.0
        %2095 = vmatpush1.msra.mxu0 %v2076
        %2096 = vmatprep.subr.mxu0 0.0
        %2097 = vmatpush1.msra.mxu0 0.0
        %2098 = vmatprep.subr.mxu0 0.0
        %2099 = vmatpush1.msra.mxu0 0.0
        %2100 = vmatprep.subr.mxu0 0.0
        %2101 = vmatpush1.msra.mxu0 0.0
        %2102 = vmatprep.subr.mxu0 0.0
        %2103 = vmatpush1.msra.mxu0 0.0
        %2104 = vmatprep.subr.mxu0 0.0
        %2105 = vmatpush1.msra.mxu0 0.0
        %2106 = vmatprep.subr.mxu0 0.0
        %2107 = vmatpush1.msra.mxu0 0.0
        %2108 = vmatprep.subr.mxu0 0.0
        %2109 = vmatpush1.msra.mxu0 0.0
        %2110 = vmatprep.subr.mxu0 0.0
        %2111 = vmatpush1.msra.mxu0 0.0
        %2112 = vmatprep.subr.mxu0 0.0
        %2113 = vmatpush1.msra.mxu0 0.0
        %2114 = vmatprep.subr.mxu0 0.0
        %2115 = vmatpush1.msra.mxu0 0.0
        %2116 = vmatprep.subr.mxu0 0.0
        %2117 = vmatpush1.msra.mxu0 0.0
        %2118 = vmatprep.subr.mxu0 0.0
        %2119 = vmatpush1.msra.mxu0 0.0
        %2120 = vmatprep.subr.mxu0 0.0
        %2121 = vmatpush1.msra.mxu0 0.0
        %2122 = vmatprep.subr.mxu0 0.0
        %2123 = vmatpush1.msra.mxu0 0.0
        %2124 = vmatprep.subr.mxu0 0.0
        %2125 = vmatpush1.msra.mxu0 0.0
        %2126 = vmatprep.subr.mxu0 0.0
        %2127 = vmatpush1.msra.mxu0 0.0
        %2128 = vmatprep.subr.mxu0 0.0
        %2129 = vmatpush1.msra.mxu0 0.0
        %2130 = vmatprep.subr.mxu0 0.0
        %2131 = vmatpush1.msra.mxu0 0.0
        %2132 = vmatprep.subr.mxu0 0.0
        %2133 = vmatpush1.msra.mxu0 0.0
        %2134 = vmatprep.subr.mxu0 0.0
        %2135 = vmatpush1.msra.mxu0 0.0
        %2136 = vmatprep.subr.mxu0 0.0
        %2137 = vmatpush1.msra.mxu0 0.0
        %2138 = vmatprep.subr.mxu0 0.0
        %2139 = vmatpush1.msra.mxu0 0.0
        %2140 = vmatprep.subr.mxu0 0.0
        %2141 = vmatpush1.msra.mxu0 0.0
        %2142 = vmatprep.subr.mxu0 0.0
        %2143 = vmatpush1.msra.mxu0 0.0
        %2144 = vmatprep.subr.mxu0 0.0
        %2145 = vmatpush1.msra.mxu0 0.0
        %2146 = vmatprep.subr.mxu0 0.0
        %2147 = vmatpush1.msra.mxu0 0.0
        %2148 = vmatprep.subr.mxu0 0.0
        %2149 = vmatpush1.msra.mxu0 0.0
        %2150 = vmatprep.subr.mxu0 0.0
        %2151 = vmatpush1.msra.mxu0 0.0
        %2152 = vmatprep.mubr.f32.mxu0 0.0
        %2153 = vmatmul.mubr.f32.gmra.mrb[0].mxu0 %v2083
        %v2154 = vpop.f32.mrb[0].mxu0
        %v2155 = vadd.f32 %v2081, %v2154
        %v2156 = vpop.f32.mrb[0].mxu0
        %2157 = vmatprep.mubr.f32.mxu0 0.0
        %2158 = vmatmul.mubr.f32.gmra.mrb[0].mxu0 %v2086
        %v2159 = vpop.f32.mrb[0].mxu0
        %v2160 = vadd.f32 %v2081, %v2159
        %v2161 = vpop.f32.mrb[0].mxu0
        %2162 = vdwg.mxu0
        %2163 = vst [vmem:[#allocation3] sm:$0xff] %v2155
        %2164 = vst [vmem:[#allocation3 + $0x8] sm:$0xff] %v2160
        %s2165 = scalar_lea.vmem [#allocation8], 32
        %v2166 = vld [vmem:[%s2165] sm:$0xff]
        %v2167 = vld [vmem:[%s2165 + $0x8] sm:$0xff]
        %v2168 = vld [vmem:[%s2165 + $0x10] sm:$0xff]
        %v2169 = vld [vmem:[%s2165 + $0x18] sm:$0xff]
        %v2170 = vld [vmem:[#allocation3] sm:$0x1]
        %2171 = vmatprep.subr.mxu0 0.0
        %2172 = vmatpush1.msra.mxu0 %v2166
        %2173 = vmatprep.subr.mxu0 0.0
        %2174 = vmatpush1.msra.mxu0 %v2167
        %2175 = vmatprep.subr.mxu0 0.0
        %2176 = vmatpush1.msra.mxu0 %v2168
        %2177 = vmatprep.subr.mxu0 0.0
        %2178 = vmatpush1.msra.mxu0 %v2169
        %2179 = vmatprep.subr.mxu0 0.0
        %2180 = vmatpush1.msra.mxu0 0.0
        %2181 = vmatprep.subr.mxu0 0.0
        %2182 = vmatpush1.msra.mxu0 0.0
        %2183 = vmatprep.subr.mxu0 0.0
        %2184 = vmatpush1.msra.mxu0 0.0
        %2185 = vmatprep.subr.mxu0 0.0
        %2186 = vmatpush1.msra.mxu0 0.0
        %2187 = vmatprep.subr.mxu0 0.0
        %2188 = vmatpush1.msra.mxu0 0.0
        %2189 = vmatprep.subr.mxu0 0.0
        %2190 = vmatpush1.msra.mxu0 0.0
        %2191 = vmatprep.subr.mxu0 0.0
        %2192 = vmatpush1.msra.mxu0 0.0
        %2193 = vmatprep.subr.mxu0 0.0
        %2194 = vmatpush1.msra.mxu0 0.0
        %2195 = vmatprep.subr.mxu0 0.0
        %2196 = vmatpush1.msra.mxu0 0.0
        %2197 = vmatprep.subr.mxu0 0.0
        %2198 = vmatpush1.msra.mxu0 0.0
        %2199 = vmatprep.subr.mxu0 0.0
        %2200 = vmatpush1.msra.mxu0 0.0
        %2201 = vmatprep.subr.mxu0 0.0
        %2202 = vmatpush1.msra.mxu0 0.0
        %2203 = vmatprep.subr.mxu0 0.0
        %2204 = vmatpush1.msra.mxu0 0.0
        %2205 = vmatprep.subr.mxu0 0.0
        %2206 = vmatpush1.msra.mxu0 0.0
        %2207 = vmatprep.subr.mxu0 0.0
        %2208 = vmatpush1.msra.mxu0 0.0
        %2209 = vmatprep.subr.mxu0 0.0
        %2210 = vmatpush1.msra.mxu0 0.0
        %2211 = vmatprep.subr.mxu0 0.0
        %2212 = vmatpush1.msra.mxu0 0.0
        %2213 = vmatprep.subr.mxu0 0.0
        %2214 = vmatpush1.msra.mxu0 0.0
        %2215 = vmatprep.subr.mxu0 0.0
        %2216 = vmatpush1.msra.mxu0 0.0
        %2217 = vmatprep.subr.mxu0 0.0
        %2218 = vmatpush1.msra.mxu0 0.0
        %2219 = vmatprep.subr.mxu0 0.0
        %2220 = vmatpush1.msra.mxu0 0.0
        %2221 = vmatprep.subr.mxu0 0.0
        %2222 = vmatpush1.msra.mxu0 0.0
        %2223 = vmatprep.subr.mxu0 0.0
        %2224 = vmatpush1.msra.mxu0 0.0
        %2225 = vmatprep.subr.mxu0 0.0
        %2226 = vmatpush1.msra.mxu0 0.0
        %2227 = vmatprep.subr.mxu0 0.0
        %2228 = vmatpush1.msra.mxu0 0.0
        %2229 = vmatprep.subr.mxu0 0.0
        %2230 = vmatpush1.msra.mxu0 0.0
        %2231 = vmatprep.subr.mxu0 0.0
        %2232 = vmatpush1.msra.mxu0 0.0
        %2233 = vmatprep.subr.mxu0 0.0
        %2234 = vmatpush1.msra.mxu0 0.0
        %2235 = vmatprep.mubr.f32.mxu0 0.0
        %2236 = vmatmul.mubr.f32.gmra.mrb[0].mxu0 %v423
        %v2237 = vpop.f32.mrb[0].mxu0
        %v2238 = vadd.f32 0.0, %v2237
        %v2239 = vpop.f32.mrb[0].mxu0
        %2240 = vdwg.mxu0
        %v2241 = vadd.f32 %v2170, %v2238
        %v2242 = vxor.u32 %v2241, 2147483648
        %v2243 = vmul.f32 %v2242, 1.442695
        %v2244 = vpow.pop %v2243
        %v2245 = vadd.f32 %v2244, 1.0
        %v2246 = vrcp.pop %v2245
        %v2247 = vmul.f32 1.0, %v2246
        %v2248 = vtanh.pop %v2241
        %v2249 = vmul.f32 %v2247, 0.0
        %2251 = vrot.lane.b32.xlu0 %v2248, 64
        %v2252 = vpop.permute.xlu0 %2251
        %v2254 = vmul.f32 %v2247, %v2252
        %2256 = vrot.lane.b32.xlu0 %v2254, 32
        %v2257 = vpop.permute.xlu0 %2256
        %v2259 = vadd.f32 %v2249, %v2257
        %v2260 = vtanh.pop %v2259
        %2262 = vrot.lane.b32.xlu0 %v2260, 64
        %v2263 = vpop.permute.xlu0 %2262
        %v2265 = vmul.f32 %v2247, %v2263
        %2267 = vrot.lane.b32.xlu0 %v2265, 32
        %v2268 = vpop.permute.xlu0 %2267
        %2270 = vst.msk [vmem:[#allocation2] sm:$0x1] %vm524, %v2268
        %v2271 = vld [vmem:[#allocation3 + $0x1] sm:$0x1]
        %v2272 = vsel %vm421, %v2268, 0
        %2274 = vmatprep.subr.mxu0 0.0
        %2275 = vmatpush1.msra.mxu0 %v2166
        %2276 = vmatprep.subr.mxu0 0.0
        %2277 = vmatpush1.msra.mxu0 %v2167
        %2278 = vmatprep.subr.mxu0 0.0
        %2279 = vmatpush1.msra.mxu0 %v2168
        %2280 = vmatprep.subr.mxu0 0.0
        %2281 = vmatpush1.msra.mxu0 %v2169
        %2282 = vmatprep.subr.mxu0 0.0
        %2283 = vmatpush1.msra.mxu0 0.0
        %2284 = vmatprep.subr.mxu0 0.0
        %2285 = vmatpush1.msra.mxu0 0.0
        %2286 = vmatprep.subr.mxu0 0.0
        %2287 = vmatpush1.msra.mxu0 0.0
        %2288 = vmatprep.subr.mxu0 0.0
        %2289 = vmatpush1.msra.mxu0 0.0
        %2290 = vmatprep.subr.mxu0 0.0
        %2291 = vmatpush1.msra.mxu0 0.0
        %2292 = vmatprep.subr.mxu0 0.0
        %2293 = vmatpush1.msra.mxu0 0.0
        %2294 = vmatprep.subr.mxu0 0.0
        %2295 = vmatpush1.msra.mxu0 0.0
        %2296 = vmatprep.subr.mxu0 0.0
        %2297 = vmatpush1.msra.mxu0 0.0
        %2298 = vmatprep.subr.mxu0 0.0
        %2299 = vmatpush1.msra.mxu0 0.0
        %2300 = vmatprep.subr.mxu0 0.0
        %2301 = vmatpush1.msra.mxu0 0.0
        %2302 = vmatprep.subr.mxu0 0.0
        %2303 = vmatpush1.msra.mxu0 0.0
        %2304 = vmatprep.subr.mxu0 0.0
        %2305 = vmatpush1.msra.mxu0 0.0
        %2306 = vmatprep.subr.mxu0 0.0
        %2307 = vmatpush1.msra.mxu0 0.0
        %2308 = vmatprep.subr.mxu0 0.0
        %2309 = vmatpush1.msra.mxu0 0.0
        %2310 = vmatprep.subr.mxu0 0.0
        %2311 = vmatpush1.msra.mxu0 0.0
        %2312 = vmatprep.subr.mxu0 0.0
        %2313 = vmatpush1.msra.mxu0 0.0
        %2314 = vmatprep.subr.mxu0 0.0
        %2315 = vmatpush1.msra.mxu0 0.0
        %2316 = vmatprep.subr.mxu0 0.0
        %2317 = vmatpush1.msra.mxu0 0.0
        %2318 = vmatprep.subr.mxu0 0.0
        %2319 = vmatpush1.msra.mxu0 0.0
        %2320 = vmatprep.subr.mxu0 0.0
        %2321 = vmatpush1.msra.mxu0 0.0
        %2322 = vmatprep.subr.mxu0 0.0
        %2323 = vmatpush1.msra.mxu0 0.0
        %2324 = vmatprep.subr.mxu0 0.0
        %2325 = vmatpush1.msra.mxu0 0.0
        %2326 = vmatprep.subr.mxu0 0.0
        %2327 = vmatpush1.msra.mxu0 0.0
        %2328 = vmatprep.subr.mxu0 0.0
        %2329 = vmatpush1.msra.mxu0 0.0
        %2330 = vmatprep.subr.mxu0 0.0
        %2331 = vmatpush1.msra.mxu0 0.0
        %2332 = vmatprep.subr.mxu0 0.0
        %2333 = vmatpush1.msra.mxu0 0.0
        %2334 = vmatprep.subr.mxu0 0.0
        %2335 = vmatpush1.msra.mxu0 0.0
        %2336 = vmatprep.subr.mxu0 0.0
        %2337 = vmatpush1.msra.mxu0 0.0
        %2338 = vmatprep.mubr.f32.mxu0 0.0
        %2339 = vmatmul.mubr.f32.gmra.mrb[0].mxu0 %v2272
        %v2340 = vpop.f32.mrb[0].mxu0
        %v2341 = vadd.f32 0.0, %v2340
        %v2342 = vpop.f32.mrb[0].mxu0
        %2343 = vdwg.mxu0
        %v2344 = vadd.f32 %v2271, %v2341
        %v2345 = vxor.u32 %v2344, 2147483648
        %v2346 = vmul.f32 %v2345, 1.442695
        %v2347 = vpow.pop %v2346
        %v2348 = vadd.f32 %v2347, 1.0
        %v2349 = vrcp.pop %v2348
        %v2350 = vmul.f32 1.0, %v2349
        %v2351 = vtanh.pop %v2344
        %v2352 = vmul.f32 %v2350, %v2259
        %2354 = vrot.lane.b32.xlu0 %v2351, 64
        %v2355 = vpop.permute.xlu0 %2354
        %v2357 = vmul.f32 %v2350, %v2355
        %2359 = vrot.lane.b32.xlu0 %v2357, 32
        %v2360 = vpop.permute.xlu0 %2359
        %v2362 = vadd.f32 %v2352, %v2360
        %v2363 = vtanh.pop %v2362
        %2365 = vrot.lane.b32.xlu0 %v2363, 64
        %v2366 = vpop.permute.xlu0 %2365
        %v2368 = vmul.f32 %v2350, %v2366
        %2370 = vrot.lane.b32.xlu0 %v2368, 32
        %v2371 = vpop.permute.xlu0 %2370
        %2373 = vst.msk [vmem:[#allocation2 + $0x1] sm:$0x1] %vm524, %v2371
        %v2374 = vld [vmem:[#allocation3 + $0x2] sm:$0x1]
        %v2375 = vsel %vm421, %v2371, 0
        %2377 = vmatprep.subr.mxu0 0.0
        %2378 = vmatpush1.msra.mxu0 %v2166
        %2379 = vmatprep.subr.mxu0 0.0
        %2380 = vmatpush1.msra.mxu0 %v2167
        %2381 = vmatprep.subr.mxu0 0.0
        %2382 = vmatpush1.msra.mxu0 %v2168
        %2383 = vmatprep.subr.mxu0 0.0
        %2384 = vmatpush1.msra.mxu0 %v2169
        %2385 = vmatprep.subr.mxu0 0.0
        %2386 = vmatpush1.msra.mxu0 0.0
        %2387 = vmatprep.subr.mxu0 0.0
        %2388 = vmatpush1.msra.mxu0 0.0
        %2389 = vmatprep.subr.mxu0 0.0
        %2390 = vmatpush1.msra.mxu0 0.0
        %2391 = vmatprep.subr.mxu0 0.0
        %2392 = vmatpush1.msra.mxu0 0.0
        %2393 = vmatprep.subr.mxu0 0.0
        %2394 = vmatpush1.msra.mxu0 0.0
        %2395 = vmatprep.subr.mxu0 0.0
        %2396 = vmatpush1.msra.mxu0 0.0
        %2397 = vmatprep.subr.mxu0 0.0
        %2398 = vmatpush1.msra.mxu0 0.0
        %2399 = vmatprep.subr.mxu0 0.0
        %2400 = vmatpush1.msra.mxu0 0.0
        %2401 = vmatprep.subr.mxu0 0.0
        %2402 = vmatpush1.msra.mxu0 0.0
        %2403 = vmatprep.subr.mxu0 0.0
        %2404 = vmatpush1.msra.mxu0 0.0
        %2405 = vmatprep.subr.mxu0 0.0
        %2406 = vmatpush1.msra.mxu0 0.0
        %2407 = vmatprep.subr.mxu0 0.0
        %2408 = vmatpush1.msra.mxu0 0.0
        %2409 = vmatprep.subr.mxu0 0.0
        %2410 = vmatpush1.msra.mxu0 0.0
        %2411 = vmatprep.subr.mxu0 0.0
        %2412 = vmatpush1.msra.mxu0 0.0
        %2413 = vmatprep.subr.mxu0 0.0
        %2414 = vmatpush1.msra.mxu0 0.0
        %2415 = vmatprep.subr.mxu0 0.0
        %2416 = vmatpush1.msra.mxu0 0.0
        %2417 = vmatprep.subr.mxu0 0.0
        %2418 = vmatpush1.msra.mxu0 0.0
        %2419 = vmatprep.subr.mxu0 0.0
        %2420 = vmatpush1.msra.mxu0 0.0
        %2421 = vmatprep.subr.mxu0 0.0
        %2422 = vmatpush1.msra.mxu0 0.0
        %2423 = vmatprep.subr.mxu0 0.0
        %2424 = vmatpush1.msra.mxu0 0.0
        %2425 = vmatprep.subr.mxu0 0.0
        %2426 = vmatpush1.msra.mxu0 0.0
        %2427 = vmatprep.subr.mxu0 0.0
        %2428 = vmatpush1.msra.mxu0 0.0
        %2429 = vmatprep.subr.mxu0 0.0
        %2430 = vmatpush1.msra.mxu0 0.0
        %2431 = vmatprep.subr.mxu0 0.0
        %2432 = vmatpush1.msra.mxu0 0.0
        %2433 = vmatprep.subr.mxu0 0.0
        %2434 = vmatpush1.msra.mxu0 0.0
        %2435 = vmatprep.subr.mxu0 0.0
        %2436 = vmatpush1.msra.mxu0 0.0
        %2437 = vmatprep.subr.mxu0 0.0
        %2438 = vmatpush1.msra.mxu0 0.0
        %2439 = vmatprep.subr.mxu0 0.0
        %2440 = vmatpush1.msra.mxu0 0.0
        %2441 = vmatprep.mubr.f32.mxu0 0.0
        %2442 = vmatmul.mubr.f32.gmra.mrb[0].mxu0 %v2375
        %v2443 = vpop.f32.mrb[0].mxu0
        %v2444 = vadd.f32 0.0, %v2443
        %v2445 = vpop.f32.mrb[0].mxu0
        %2446 = vdwg.mxu0
        %v2447 = vadd.f32 %v2374, %v2444
        %v2448 = vxor.u32 %v2447, 2147483648
        %v2449 = vmul.f32 %v2448, 1.442695
        %v2450 = vpow.pop %v2449
        %v2451 = vadd.f32 %v2450, 1.0
        %v2452 = vrcp.pop %v2451
        %v2453 = vmul.f32 1.0, %v2452
        %v2454 = vtanh.pop %v2447
        %v2455 = vmul.f32 %v2453, %v2362
        %2457 = vrot.lane.b32.xlu0 %v2454, 64
        %v2458 = vpop.permute.xlu0 %2457
        %v2460 = vmul.f32 %v2453, %v2458
        %2462 = vrot.lane.b32.xlu0 %v2460, 32
        %v2463 = vpop.permute.xlu0 %2462
        %v2465 = vadd.f32 %v2455, %v2463
        %v2466 = vtanh.pop %v2465
        %2468 = vrot.lane.b32.xlu0 %v2466, 64
        %v2469 = vpop.permute.xlu0 %2468
        %v2471 = vmul.f32 %v2453, %v2469
        %2473 = vrot.lane.b32.xlu0 %v2471, 32
        %v2474 = vpop.permute.xlu0 %2473
        %2476 = vst.msk [vmem:[#allocation2 + $0x2] sm:$0x1] %vm524, %v2474
        %v2477 = vld [vmem:[#allocation3 + $0x3] sm:$0x1]
        %v2478 = vsel %vm421, %v2474, 0
        %2480 = vmatprep.subr.mxu0 0.0
        %2481 = vmatpush1.msra.mxu0 %v2166
        %2482 = vmatprep.subr.mxu0 0.0
        %2483 = vmatpush1.msra.mxu0 %v2167
        %2484 = vmatprep.subr.mxu0 0.0
        %2485 = vmatpush1.msra.mxu0 %v2168
        %2486 = vmatprep.subr.mxu0 0.0
        %2487 = vmatpush1.msra.mxu0 %v2169
        %2488 = vmatprep.subr.mxu0 0.0
        %2489 = vmatpush1.msra.mxu0 0.0
        %2490 = vmatprep.subr.mxu0 0.0
        %2491 = vmatpush1.msra.mxu0 0.0
        %2492 = vmatprep.subr.mxu0 0.0
        %2493 = vmatpush1.msra.mxu0 0.0
        %2494 = vmatprep.subr.mxu0 0.0
        %2495 = vmatpush1.msra.mxu0 0.0
        %2496 = vmatprep.subr.mxu0 0.0
        %2497 = vmatpush1.msra.mxu0 0.0
        %2498 = vmatprep.subr.mxu0 0.0
        %2499 = vmatpush1.msra.mxu0 0.0
        %2500 = vmatprep.subr.mxu0 0.0
        %2501 = vmatpush1.msra.mxu0 0.0
        %2502 = vmatprep.subr.mxu0 0.0
        %2503 = vmatpush1.msra.mxu0 0.0
        %2504 = vmatprep.subr.mxu0 0.0
        %2505 = vmatpush1.msra.mxu0 0.0
        %2506 = vmatprep.subr.mxu0 0.0
        %2507 = vmatpush1.msra.mxu0 0.0
        %2508 = vmatprep.subr.mxu0 0.0
        %2509 = vmatpush1.msra.mxu0 0.0
        %2510 = vmatprep.subr.mxu0 0.0
        %2511 = vmatpush1.msra.mxu0 0.0
        %2512 = vmatprep.subr.mxu0 0.0
        %2513 = vmatpush1.msra.mxu0 0.0
        %2514 = vmatprep.subr.mxu0 0.0
        %2515 = vmatpush1.msra.mxu0 0.0
        %2516 = vmatprep.subr.mxu0 0.0
        %2517 = vmatpush1.msra.mxu0 0.0
        %2518 = vmatprep.subr.mxu0 0.0
        %2519 = vmatpush1.msra.mxu0 0.0
        %2520 = vmatprep.subr.mxu0 0.0
        %2521 = vmatpush1.msra.mxu0 0.0
        %2522 = vmatprep.subr.mxu0 0.0
        %2523 = vmatpush1.msra.mxu0 0.0
        %2524 = vmatprep.subr.mxu0 0.0
        %2525 = vmatpush1.msra.mxu0 0.0
        %2526 = vmatprep.subr.mxu0 0.0
        %2527 = vmatpush1.msra.mxu0 0.0
        %2528 = vmatprep.subr.mxu0 0.0
        %2529 = vmatpush1.msra.mxu0 0.0
        %2530 = vmatprep.subr.mxu0 0.0
        %2531 = vmatpush1.msra.mxu0 0.0
        %2532 = vmatprep.subr.mxu0 0.0
        %2533 = vmatpush1.msra.mxu0 0.0
        %2534 = vmatprep.subr.mxu0 0.0
        %2535 = vmatpush1.msra.mxu0 0.0
        %2536 = vmatprep.subr.mxu0 0.0
        %2537 = vmatpush1.msra.mxu0 0.0
        %2538 = vmatprep.subr.mxu0 0.0
        %2539 = vmatpush1.msra.mxu0 0.0
        %2540 = vmatprep.subr.mxu0 0.0
        %2541 = vmatpush1.msra.mxu0 0.0
        %2542 = vmatprep.subr.mxu0 0.0
        %2543 = vmatpush1.msra.mxu0 0.0
        %2544 = vmatprep.mubr.f32.mxu0 0.0
        %2545 = vmatmul.mubr.f32.gmra.mrb[0].mxu0 %v2478
        %v2546 = vpop.f32.mrb[0].mxu0
        %v2547 = vadd.f32 0.0, %v2546
        %v2548 = vpop.f32.mrb[0].mxu0
        %2549 = vdwg.mxu0
        %v2550 = vadd.f32 %v2477, %v2547
        %v2551 = vxor.u32 %v2550, 2147483648
        %v2552 = vmul.f32 %v2551, 1.442695
        %v2553 = vpow.pop %v2552
        %v2554 = vadd.f32 %v2553, 1.0
        %v2555 = vrcp.pop %v2554
        %v2556 = vmul.f32 1.0, %v2555
        %v2557 = vtanh.pop %v2550
        %v2558 = vmul.f32 %v2556, %v2465
        %2560 = vrot.lane.b32.xlu0 %v2557, 64
        %v2561 = vpop.permute.xlu0 %2560
        %v2563 = vmul.f32 %v2556, %v2561
        %2565 = vrot.lane.b32.xlu0 %v2563, 32
        %v2566 = vpop.permute.xlu0 %2565
        %v2568 = vadd.f32 %v2558, %v2566
        %v2569 = vtanh.pop %v2568
        %2571 = vrot.lane.b32.xlu0 %v2569, 64
        %v2572 = vpop.permute.xlu0 %2571
        %v2574 = vmul.f32 %v2556, %v2572
        %2576 = vrot.lane.b32.xlu0 %v2574, 32
        %v2577 = vpop.permute.xlu0 %2576
        %2579 = vst.msk [vmem:[#allocation2 + $0x3] sm:$0x1] %vm524, %v2577
        %v2580 = vld [vmem:[#allocation3 + $0x4] sm:$0x1]
        %v2581 = vsel %vm421, %v2577, 0
        %2583 = vmatprep.subr.mxu0 0.0
        %2584 = vmatpush1.msra.mxu0 %v2166
        %2585 = vmatprep.subr.mxu0 0.0
        %2586 = vmatpush1.msra.mxu0 %v2167
        %2587 = vmatprep.subr.mxu0 0.0
        %2588 = vmatpush1.msra.mxu0 %v2168
        %2589 = vmatprep.subr.mxu0 0.0
        %2590 = vmatpush1.msra.mxu0 %v2169
        %2591 = vmatprep.subr.mxu0 0.0
        %2592 = vmatpush1.msra.mxu0 0.0
        %2593 = vmatprep.subr.mxu0 0.0
        %2594 = vmatpush1.msra.mxu0 0.0
        %2595 = vmatprep.subr.mxu0 0.0
        %2596 = vmatpush1.msra.mxu0 0.0
        %2597 = vmatprep.subr.mxu0 0.0
        %2598 = vmatpush1.msra.mxu0 0.0
        %2599 = vmatprep.subr.mxu0 0.0
        %2600 = vmatpush1.msra.mxu0 0.0
        %2601 = vmatprep.subr.mxu0 0.0
        %2602 = vmatpush1.msra.mxu0 0.0
        %2603 = vmatprep.subr.mxu0 0.0
        %2604 = vmatpush1.msra.mxu0 0.0
        %2605 = vmatprep.subr.mxu0 0.0
        %2606 = vmatpush1.msra.mxu0 0.0
        %2607 = vmatprep.subr.mxu0 0.0
        %2608 = vmatpush1.msra.mxu0 0.0
        %2609 = vmatprep.subr.mxu0 0.0
        %2610 = vmatpush1.msra.mxu0 0.0
        %2611 = vmatprep.subr.mxu0 0.0
        %2612 = vmatpush1.msra.mxu0 0.0
        %2613 = vmatprep.subr.mxu0 0.0
        %2614 = vmatpush1.msra.mxu0 0.0
        %2615 = vmatprep.subr.mxu0 0.0
        %2616 = vmatpush1.msra.mxu0 0.0
        %2617 = vmatprep.subr.mxu0 0.0
        %2618 = vmatpush1.msra.mxu0 0.0
        %2619 = vmatprep.subr.mxu0 0.0
        %2620 = vmatpush1.msra.mxu0 0.0
        %2621 = vmatprep.subr.mxu0 0.0
        %2622 = vmatpush1.msra.mxu0 0.0
        %2623 = vmatprep.subr.mxu0 0.0
        %2624 = vmatpush1.msra.mxu0 0.0
        %2625 = vmatprep.subr.mxu0 0.0
        %2626 = vmatpush1.msra.mxu0 0.0
        %2627 = vmatprep.subr.mxu0 0.0
        %2628 = vmatpush1.msra.mxu0 0.0
        %2629 = vmatprep.subr.mxu0 0.0
        %2630 = vmatpush1.msra.mxu0 0.0
        %2631 = vmatprep.subr.mxu0 0.0
        %2632 = vmatpush1.msra.mxu0 0.0
        %2633 = vmatprep.subr.mxu0 0.0
        %2634 = vmatpush1.msra.mxu0 0.0
        %2635 = vmatprep.subr.mxu0 0.0
        %2636 = vmatpush1.msra.mxu0 0.0
        %2637 = vmatprep.subr.mxu0 0.0
        %2638 = vmatpush1.msra.mxu0 0.0
        %2639 = vmatprep.subr.mxu0 0.0
        %2640 = vmatpush1.msra.mxu0 0.0
        %2641 = vmatprep.subr.mxu0 0.0
        %2642 = vmatpush1.msra.mxu0 0.0
        %2643 = vmatprep.subr.mxu0 0.0
        %2644 = vmatpush1.msra.mxu0 0.0
        %2645 = vmatprep.subr.mxu0 0.0
        %2646 = vmatpush1.msra.mxu0 0.0
        %2647 = vmatprep.mubr.f32.mxu0 0.0
        %2648 = vmatmul.mubr.f32.gmra.mrb[0].mxu0 %v2581
        %v2649 = vpop.f32.mrb[0].mxu0
        %v2650 = vadd.f32 0.0, %v2649
        %v2651 = vpop.f32.mrb[0].mxu0
        %2652 = vdwg.mxu0
        %v2653 = vadd.f32 %v2580, %v2650
        %v2654 = vxor.u32 %v2653, 2147483648
        %v2655 = vmul.f32 %v2654, 1.442695
        %v2656 = vpow.pop %v2655
        %v2657 = vadd.f32 %v2656, 1.0
        %v2658 = vrcp.pop %v2657
        %v2659 = vmul.f32 1.0, %v2658
        %v2660 = vtanh.pop %v2653
        %v2661 = vmul.f32 %v2659, %v2568
        %2663 = vrot.lane.b32.xlu0 %v2660, 64
        %v2664 = vpop.permute.xlu0 %2663
        %v2666 = vmul.f32 %v2659, %v2664
        %2668 = vrot.lane.b32.xlu0 %v2666, 32
        %v2669 = vpop.permute.xlu0 %2668
        %v2671 = vadd.f32 %v2661, %v2669
        %v2672 = vtanh.pop %v2671
        %2674 = vrot.lane.b32.xlu0 %v2672, 64
        %v2675 = vpop.permute.xlu0 %2674
        %v2677 = vmul.f32 %v2659, %v2675
        %2679 = vrot.lane.b32.xlu0 %v2677, 32
        %v2680 = vpop.permute.xlu0 %2679
        %2682 = vst.msk [vmem:[#allocation2 + $0x4] sm:$0x1] %vm524, %v2680
        %v2683 = vld [vmem:[#allocation3 + $0x5] sm:$0x1]
        %v2684 = vsel %vm421, %v2680, 0
        %2686 = vmatprep.subr.mxu0 0.0
        %2687 = vmatpush1.msra.mxu0 %v2166
        %2688 = vmatprep.subr.mxu0 0.0
        %2689 = vmatpush1.msra.mxu0 %v2167
        %2690 = vmatprep.subr.mxu0 0.0
        %2691 = vmatpush1.msra.mxu0 %v2168
        %2692 = vmatprep.subr.mxu0 0.0
        %2693 = vmatpush1.msra.mxu0 %v2169
        %2694 = vmatprep.subr.mxu0 0.0
        %2695 = vmatpush1.msra.mxu0 0.0
        %2696 = vmatprep.subr.mxu0 0.0
        %2697 = vmatpush1.msra.mxu0 0.0
        %2698 = vmatprep.subr.mxu0 0.0
        %2699 = vmatpush1.msra.mxu0 0.0
        %2700 = vmatprep.subr.mxu0 0.0
        %2701 = vmatpush1.msra.mxu0 0.0
        %2702 = vmatprep.subr.mxu0 0.0
        %2703 = vmatpush1.msra.mxu0 0.0
        %2704 = vmatprep.subr.mxu0 0.0
        %2705 = vmatpush1.msra.mxu0 0.0
        %2706 = vmatprep.subr.mxu0 0.0
        %2707 = vmatpush1.msra.mxu0 0.0
        %2708 = vmatprep.subr.mxu0 0.0
        %2709 = vmatpush1.msra.mxu0 0.0
        %2710 = vmatprep.subr.mxu0 0.0
        %2711 = vmatpush1.msra.mxu0 0.0
        %2712 = vmatprep.subr.mxu0 0.0
        %2713 = vmatpush1.msra.mxu0 0.0
        %2714 = vmatprep.subr.mxu0 0.0
        %2715 = vmatpush1.msra.mxu0 0.0
        %2716 = vmatprep.subr.mxu0 0.0
        %2717 = vmatpush1.msra.mxu0 0.0
        %2718 = vmatprep.subr.mxu0 0.0
        %2719 = vmatpush1.msra.mxu0 0.0
        %2720 = vmatprep.subr.mxu0 0.0
        %2721 = vmatpush1.msra.mxu0 0.0
        %2722 = vmatprep.subr.mxu0 0.0
        %2723 = vmatpush1.msra.mxu0 0.0
        %2724 = vmatprep.subr.mxu0 0.0
        %2725 = vmatpush1.msra.mxu0 0.0
        %2726 = vmatprep.subr.mxu0 0.0
        %2727 = vmatpush1.msra.mxu0 0.0
        %2728 = vmatprep.subr.mxu0 0.0
        %2729 = vmatpush1.msra.mxu0 0.0
        %2730 = vmatprep.subr.mxu0 0.0
        %2731 = vmatpush1.msra.mxu0 0.0
        %2732 = vmatprep.subr.mxu0 0.0
        %2733 = vmatpush1.msra.mxu0 0.0
        %2734 = vmatprep.subr.mxu0 0.0
        %2735 = vmatpush1.msra.mxu0 0.0
        %2736 = vmatprep.subr.mxu0 0.0
        %2737 = vmatpush1.msra.mxu0 0.0
        %2738 = vmatprep.subr.mxu0 0.0
        %2739 = vmatpush1.msra.mxu0 0.0
        %2740 = vmatprep.subr.mxu0 0.0
        %2741 = vmatpush1.msra.mxu0 0.0
        %2742 = vmatprep.subr.mxu0 0.0
        %2743 = vmatpush1.msra.mxu0 0.0
        %2744 = vmatprep.subr.mxu0 0.0
        %2745 = vmatpush1.msra.mxu0 0.0
        %2746 = vmatprep.subr.mxu0 0.0
        %2747 = vmatpush1.msra.mxu0 0.0
        %2748 = vmatprep.subr.mxu0 0.0
        %2749 = vmatpush1.msra.mxu0 0.0
        %2750 = vmatprep.mubr.f32.mxu0 0.0
        %2751 = vmatmul.mubr.f32.gmra.mrb[0].mxu0 %v2684
        %v2752 = vpop.f32.mrb[0].mxu0
        %v2753 = vadd.f32 0.0, %v2752
        %v2754 = vpop.f32.mrb[0].mxu0
        %2755 = vdwg.mxu0
        %v2756 = vadd.f32 %v2683, %v2753
        %v2757 = vxor.u32 %v2756, 2147483648
        %v2758 = vmul.f32 %v2757, 1.442695
        %v2759 = vpow.pop %v2758
        %v2760 = vadd.f32 %v2759, 1.0
        %v2761 = vrcp.pop %v2760
        %v2762 = vmul.f32 1.0, %v2761
        %v2763 = vtanh.pop %v2756
        %v2764 = vmul.f32 %v2762, %v2671
        %2766 = vrot.lane.b32.xlu0 %v2763, 64
        %v2767 = vpop.permute.xlu0 %2766
        %v2769 = vmul.f32 %v2762, %v2767
        %2771 = vrot.lane.b32.xlu0 %v2769, 32
        %v2772 = vpop.permute.xlu0 %2771
        %v2774 = vadd.f32 %v2764, %v2772
        %v2775 = vtanh.pop %v2774
        %2777 = vrot.lane.b32.xlu0 %v2775, 64
        %v2778 = vpop.permute.xlu0 %2777
        %v2780 = vmul.f32 %v2762, %v2778
        %2782 = vrot.lane.b32.xlu0 %v2780, 32
        %v2783 = vpop.permute.xlu0 %2782
        %2785 = vst.msk [vmem:[#allocation2 + $0x5] sm:$0x1] %vm524, %v2783
        %v2786 = vld [vmem:[#allocation3 + $0x6] sm:$0x1]
        %v2787 = vsel %vm421, %v2783, 0
        %2789 = vmatprep.subr.mxu0 0.0
        %2790 = vmatpush1.msra.mxu0 %v2166
        %2791 = vmatprep.subr.mxu0 0.0
        %2792 = vmatpush1.msra.mxu0 %v2167
        %2793 = vmatprep.subr.mxu0 0.0
        %2794 = vmatpush1.msra.mxu0 %v2168
        %2795 = vmatprep.subr.mxu0 0.0
        %2796 = vmatpush1.msra.mxu0 %v2169
        %2797 = vmatprep.subr.mxu0 0.0
        %2798 = vmatpush1.msra.mxu0 0.0
        %2799 = vmatprep.subr.mxu0 0.0
        %2800 = vmatpush1.msra.mxu0 0.0
        %2801 = vmatprep.subr.mxu0 0.0
        %2802 = vmatpush1.msra.mxu0 0.0
        %2803 = vmatprep.subr.mxu0 0.0
        %2804 = vmatpush1.msra.mxu0 0.0
        %2805 = vmatprep.subr.mxu0 0.0
        %2806 = vmatpush1.msra.mxu0 0.0
        %2807 = vmatprep.subr.mxu0 0.0
        %2808 = vmatpush1.msra.mxu0 0.0
        %2809 = vmatprep.subr.mxu0 0.0
        %2810 = vmatpush1.msra.mxu0 0.0
        %2811 = vmatprep.subr.mxu0 0.0
        %2812 = vmatpush1.msra.mxu0 0.0
        %2813 = vmatprep.subr.mxu0 0.0
        %2814 = vmatpush1.msra.mxu0 0.0
        %2815 = vmatprep.subr.mxu0 0.0
        %2816 = vmatpush1.msra.mxu0 0.0
        %2817 = vmatprep.subr.mxu0 0.0
        %2818 = vmatpush1.msra.mxu0 0.0
        %2819 = vmatprep.subr.mxu0 0.0
        %2820 = vmatpush1.msra.mxu0 0.0
        %2821 = vmatprep.subr.mxu0 0.0
        %2822 = vmatpush1.msra.mxu0 0.0
        %2823 = vmatprep.subr.mxu0 0.0
        %2824 = vmatpush1.msra.mxu0 0.0
        %2825 = vmatprep.subr.mxu0 0.0
        %2826 = vmatpush1.msra.mxu0 0.0
        %2827 = vmatprep.subr.mxu0 0.0
        %2828 = vmatpush1.msra.mxu0 0.0
        %2829 = vmatprep.subr.mxu0 0.0
        %2830 = vmatpush1.msra.mxu0 0.0
        %2831 = vmatprep.subr.mxu0 0.0
        %2832 = vmatpush1.msra.mxu0 0.0
        %2833 = vmatprep.subr.mxu0 0.0
        %2834 = vmatpush1.msra.mxu0 0.0
        %2835 = vmatprep.subr.mxu0 0.0
        %2836 = vmatpush1.msra.mxu0 0.0
        %2837 = vmatprep.subr.mxu0 0.0
        %2838 = vmatpush1.msra.mxu0 0.0
        %2839 = vmatprep.subr.mxu0 0.0
        %2840 = vmatpush1.msra.mxu0 0.0
        %2841 = vmatprep.subr.mxu0 0.0
        %2842 = vmatpush1.msra.mxu0 0.0
        %2843 = vmatprep.subr.mxu0 0.0
        %2844 = vmatpush1.msra.mxu0 0.0
        %2845 = vmatprep.subr.mxu0 0.0
        %2846 = vmatpush1.msra.mxu0 0.0
        %2847 = vmatprep.subr.mxu0 0.0
        %2848 = vmatpush1.msra.mxu0 0.0
        %2849 = vmatprep.subr.mxu0 0.0
        %2850 = vmatpush1.msra.mxu0 0.0
        %2851 = vmatprep.subr.mxu0 0.0
        %2852 = vmatpush1.msra.mxu0 0.0
        %2853 = vmatprep.mubr.f32.mxu0 0.0
        %2854 = vmatmul.mubr.f32.gmra.mrb[0].mxu0 %v2787
        %v2855 = vpop.f32.mrb[0].mxu0
        %v2856 = vadd.f32 0.0, %v2855
        %v2857 = vpop.f32.mrb[0].mxu0
        %2858 = vdwg.mxu0
        %v2859 = vadd.f32 %v2786, %v2856
        %v2860 = vxor.u32 %v2859, 2147483648
        %v2861 = vmul.f32 %v2860, 1.442695
        %v2862 = vpow.pop %v2861
        %v2863 = vadd.f32 %v2862, 1.0
        %v2864 = vrcp.pop %v2863
        %v2865 = vmul.f32 1.0, %v2864
        %v2866 = vtanh.pop %v2859
        %v2867 = vmul.f32 %v2865, %v2774
        %2869 = vrot.lane.b32.xlu0 %v2866, 64
        %v2870 = vpop.permute.xlu0 %2869
        %v2872 = vmul.f32 %v2865, %v2870
        %2874 = vrot.lane.b32.xlu0 %v2872, 32
        %v2875 = vpop.permute.xlu0 %2874
        %v2877 = vadd.f32 %v2867, %v2875
        %v2878 = vtanh.pop %v2877
        %2880 = vrot.lane.b32.xlu0 %v2878, 64
        %v2881 = vpop.permute.xlu0 %2880
        %v2883 = vmul.f32 %v2865, %v2881
        %2885 = vrot.lane.b32.xlu0 %v2883, 32
        %v2886 = vpop.permute.xlu0 %2885
        %2888 = vst.msk [vmem:[#allocation2 + $0x6] sm:$0x1] %vm524, %v2886
        %v2889 = vld [vmem:[#allocation3 + $0x7] sm:$0x1]
        %v2890 = vsel %vm421, %v2886, 0
        %2892 = vmatprep.subr.mxu0 0.0
        %2893 = vmatpush1.msra.mxu0 %v2166
        %2894 = vmatprep.subr.mxu0 0.0
        %2895 = vmatpush1.msra.mxu0 %v2167
        %2896 = vmatprep.subr.mxu0 0.0
        %2897 = vmatpush1.msra.mxu0 %v2168
        %2898 = vmatprep.subr.mxu0 0.0
        %2899 = vmatpush1.msra.mxu0 %v2169
        %2900 = vmatprep.subr.mxu0 0.0
        %2901 = vmatpush1.msra.mxu0 0.0
        %2902 = vmatprep.subr.mxu0 0.0
        %2903 = vmatpush1.msra.mxu0 0.0
        %2904 = vmatprep.subr.mxu0 0.0
        %2905 = vmatpush1.msra.mxu0 0.0
        %2906 = vmatprep.subr.mxu0 0.0
        %2907 = vmatpush1.msra.mxu0 0.0
        %2908 = vmatprep.subr.mxu0 0.0
        %2909 = vmatpush1.msra.mxu0 0.0
        %2910 = vmatprep.subr.mxu0 0.0
        %2911 = vmatpush1.msra.mxu0 0.0
        %2912 = vmatprep.subr.mxu0 0.0
        %2913 = vmatpush1.msra.mxu0 0.0
        %2914 = vmatprep.subr.mxu0 0.0
        %2915 = vmatpush1.msra.mxu0 0.0
        %2916 = vmatprep.subr.mxu0 0.0
        %2917 = vmatpush1.msra.mxu0 0.0
        %2918 = vmatprep.subr.mxu0 0.0
        %2919 = vmatpush1.msra.mxu0 0.0
        %2920 = vmatprep.subr.mxu0 0.0
        %2921 = vmatpush1.msra.mxu0 0.0
        %2922 = vmatprep.subr.mxu0 0.0
        %2923 = vmatpush1.msra.mxu0 0.0
        %2924 = vmatprep.subr.mxu0 0.0
        %2925 = vmatpush1.msra.mxu0 0.0
        %2926 = vmatprep.subr.mxu0 0.0
        %2927 = vmatpush1.msra.mxu0 0.0
        %2928 = vmatprep.subr.mxu0 0.0
        %2929 = vmatpush1.msra.mxu0 0.0
        %2930 = vmatprep.subr.mxu0 0.0
        %2931 = vmatpush1.msra.mxu0 0.0
        %2932 = vmatprep.subr.mxu0 0.0
        %2933 = vmatpush1.msra.mxu0 0.0
        %2934 = vmatprep.subr.mxu0 0.0
        %2935 = vmatpush1.msra.mxu0 0.0
        %2936 = vmatprep.subr.mxu0 0.0
        %2937 = vmatpush1.msra.mxu0 0.0
        %2938 = vmatprep.subr.mxu0 0.0
        %2939 = vmatpush1.msra.mxu0 0.0
        %2940 = vmatprep.subr.mxu0 0.0
        %2941 = vmatpush1.msra.mxu0 0.0
        %2942 = vmatprep.subr.mxu0 0.0
        %2943 = vmatpush1.msra.mxu0 0.0
        %2944 = vmatprep.subr.mxu0 0.0
        %2945 = vmatpush1.msra.mxu0 0.0
        %2946 = vmatprep.subr.mxu0 0.0
        %2947 = vmatpush1.msra.mxu0 0.0
        %2948 = vmatprep.subr.mxu0 0.0
        %2949 = vmatpush1.msra.mxu0 0.0
        %2950 = vmatprep.subr.mxu0 0.0
        %2951 = vmatpush1.msra.mxu0 0.0
        %2952 = vmatprep.subr.mxu0 0.0
        %2953 = vmatpush1.msra.mxu0 0.0
        %2954 = vmatprep.subr.mxu0 0.0
        %2955 = vmatpush1.msra.mxu0 0.0
        %2956 = vmatprep.mubr.f32.mxu0 0.0
        %2957 = vmatmul.mubr.f32.gmra.mrb[0].mxu0 %v2890
        %v2958 = vpop.f32.mrb[0].mxu0
        %v2959 = vadd.f32 0.0, %v2958
        %v2960 = vpop.f32.mrb[0].mxu0
        %2961 = vdwg.mxu0
        %v2962 = vadd.f32 %v2889, %v2959
        %v2963 = vxor.u32 %v2962, 2147483648
        %v2964 = vmul.f32 %v2963, 1.442695
        %v2965 = vpow.pop %v2964
        %v2966 = vadd.f32 %v2965, 1.0
        %v2967 = vrcp.pop %v2966
        %v2968 = vmul.f32 1.0, %v2967
        %v2969 = vtanh.pop %v2962
        %v2970 = vmul.f32 %v2968, %v2877
        %2972 = vrot.lane.b32.xlu0 %v2969, 64
        %v2973 = vpop.permute.xlu0 %2972
        %v2975 = vmul.f32 %v2968, %v2973
        %2977 = vrot.lane.b32.xlu0 %v2975, 32
        %v2978 = vpop.permute.xlu0 %2977
        %v2980 = vadd.f32 %v2970, %v2978
        %v2981 = vtanh.pop %v2980
        %2983 = vrot.lane.b32.xlu0 %v2981, 64
        %v2984 = vpop.permute.xlu0 %2983
        %v2986 = vmul.f32 %v2968, %v2984
        %2988 = vrot.lane.b32.xlu0 %v2986, 32
        %v2989 = vpop.permute.xlu0 %2988
        %2991 = vst.msk [vmem:[#allocation2 + $0x7] sm:$0x1] %vm524, %v2989
        %v2992 = vld [vmem:[#allocation3 + $0x8] sm:$0x1]
        %v2993 = vsel %vm421, %v2989, 0
        %2995 = vmatprep.subr.mxu0 0.0
        %2996 = vmatpush1.msra.mxu0 %v2166
        %2997 = vmatprep.subr.mxu0 0.0
        %2998 = vmatpush1.msra.mxu0 %v2167
        %2999 = vmatprep.subr.mxu0 0.0
        %3000 = vmatpush1.msra.mxu0 %v2168
        %3001 = vmatprep.subr.mxu0 0.0
        %3002 = vmatpush1.msra.mxu0 %v2169
        %3003 = vmatprep.subr.mxu0 0.0
        %3004 = vmatpush1.msra.mxu0 0.0
        %3005 = vmatprep.subr.mxu0 0.0
        %3006 = vmatpush1.msra.mxu0 0.0
        %3007 = vmatprep.subr.mxu0 0.0
        %3008 = vmatpush1.msra.mxu0 0.0
        %3009 = vmatprep.subr.mxu0 0.0
        %3010 = vmatpush1.msra.mxu0 0.0
        %3011 = vmatprep.subr.mxu0 0.0
        %3012 = vmatpush1.msra.mxu0 0.0
        %3013 = vmatprep.subr.mxu0 0.0
        %3014 = vmatpush1.msra.mxu0 0.0
        %3015 = vmatprep.subr.mxu0 0.0
        %3016 = vmatpush1.msra.mxu0 0.0
        %3017 = vmatprep.subr.mxu0 0.0
        %3018 = vmatpush1.msra.mxu0 0.0
        %3019 = vmatprep.subr.mxu0 0.0
        %3020 = vmatpush1.msra.mxu0 0.0
        %3021 = vmatprep.subr.mxu0 0.0
        %3022 = vmatpush1.msra.mxu0 0.0
        %3023 = vmatprep.subr.mxu0 0.0
        %3024 = vmatpush1.msra.mxu0 0.0
        %3025 = vmatprep.subr.mxu0 0.0
        %3026 = vmatpush1.msra.mxu0 0.0
        %3027 = vmatprep.subr.mxu0 0.0
        %3028 = vmatpush1.msra.mxu0 0.0
        %3029 = vmatprep.subr.mxu0 0.0
        %3030 = vmatpush1.msra.mxu0 0.0
        %3031 = vmatprep.subr.mxu0 0.0
        %3032 = vmatpush1.msra.mxu0 0.0
        %3033 = vmatprep.subr.mxu0 0.0
        %3034 = vmatpush1.msra.mxu0 0.0
        %3035 = vmatprep.subr.mxu0 0.0
        %3036 = vmatpush1.msra.mxu0 0.0
        %3037 = vmatprep.subr.mxu0 0.0
        %3038 = vmatpush1.msra.mxu0 0.0
        %3039 = vmatprep.subr.mxu0 0.0
        %3040 = vmatpush1.msra.mxu0 0.0
        %3041 = vmatprep.subr.mxu0 0.0
        %3042 = vmatpush1.msra.mxu0 0.0
        %3043 = vmatprep.subr.mxu0 0.0
        %3044 = vmatpush1.msra.mxu0 0.0
        %3045 = vmatprep.subr.mxu0 0.0
        %3046 = vmatpush1.msra.mxu0 0.0
        %3047 = vmatprep.subr.mxu0 0.0
        %3048 = vmatpush1.msra.mxu0 0.0
        %3049 = vmatprep.subr.mxu0 0.0
        %3050 = vmatpush1.msra.mxu0 0.0
        %3051 = vmatprep.subr.mxu0 0.0
        %3052 = vmatpush1.msra.mxu0 0.0
        %3053 = vmatprep.subr.mxu0 0.0
        %3054 = vmatpush1.msra.mxu0 0.0
        %3055 = vmatprep.subr.mxu0 0.0
        %3056 = vmatpush1.msra.mxu0 0.0
        %3057 = vmatprep.subr.mxu0 0.0
        %3058 = vmatpush1.msra.mxu0 0.0
        %3059 = vmatprep.mubr.f32.mxu0 0.0
        %3060 = vmatmul.mubr.f32.gmra.mrb[0].mxu0 %v2993
        %v3061 = vpop.f32.mrb[0].mxu0
        %v3062 = vadd.f32 0.0, %v3061
        %v3063 = vpop.f32.mrb[0].mxu0
        %3064 = vdwg.mxu0
        %v3065 = vadd.f32 %v2992, %v3062
        %v3066 = vxor.u32 %v3065, 2147483648
        %v3067 = vmul.f32 %v3066, 1.442695
        %v3068 = vpow.pop %v3067
        %v3069 = vadd.f32 %v3068, 1.0
        %v3070 = vrcp.pop %v3069
        %v3071 = vmul.f32 1.0, %v3070
        %v3072 = vtanh.pop %v3065
        %v3073 = vmul.f32 %v3071, %v2980
        %3075 = vrot.lane.b32.xlu0 %v3072, 64
        %v3076 = vpop.permute.xlu0 %3075
        %v3078 = vmul.f32 %v3071, %v3076
        %3080 = vrot.lane.b32.xlu0 %v3078, 32
        %v3081 = vpop.permute.xlu0 %3080
        %v3083 = vadd.f32 %v3073, %v3081
        %v3084 = vtanh.pop %v3083
        %3086 = vrot.lane.b32.xlu0 %v3084, 64
        %v3087 = vpop.permute.xlu0 %3086
        %v3089 = vmul.f32 %v3071, %v3087
        %3091 = vrot.lane.b32.xlu0 %v3089, 32
        %v3092 = vpop.permute.xlu0 %3091
        %3094 = vst.msk [vmem:[#allocation2 + $0x8] sm:$0x1] %vm524, %v3092
        %v3095 = vld [vmem:[#allocation3 + $0x9] sm:$0x1]
        %v3096 = vsel %vm421, %v3092, 0
        %3098 = vmatprep.subr.mxu0 0.0
        %3099 = vmatpush1.msra.mxu0 %v2166
        %3100 = vmatprep.subr.mxu0 0.0
        %3101 = vmatpush1.msra.mxu0 %v2167
        %3102 = vmatprep.subr.mxu0 0.0
        %3103 = vmatpush1.msra.mxu0 %v2168
        %3104 = vmatprep.subr.mxu0 0.0
        %3105 = vmatpush1.msra.mxu0 %v2169
        %3106 = vmatprep.subr.mxu0 0.0
        %3107 = vmatpush1.msra.mxu0 0.0
        %3108 = vmatprep.subr.mxu0 0.0
        %3109 = vmatpush1.msra.mxu0 0.0
        %3110 = vmatprep.subr.mxu0 0.0
        %3111 = vmatpush1.msra.mxu0 0.0
        %3112 = vmatprep.subr.mxu0 0.0
        %3113 = vmatpush1.msra.mxu0 0.0
        %3114 = vmatprep.subr.mxu0 0.0
        %3115 = vmatpush1.msra.mxu0 0.0
        %3116 = vmatprep.subr.mxu0 0.0
        %3117 = vmatpush1.msra.mxu0 0.0
        %3118 = vmatprep.subr.mxu0 0.0
        %3119 = vmatpush1.msra.mxu0 0.0
        %3120 = vmatprep.subr.mxu0 0.0
        %3121 = vmatpush1.msra.mxu0 0.0
        %3122 = vmatprep.subr.mxu0 0.0
        %3123 = vmatpush1.msra.mxu0 0.0
        %3124 = vmatprep.subr.mxu0 0.0
        %3125 = vmatpush1.msra.mxu0 0.0
        %3126 = vmatprep.subr.mxu0 0.0
        %3127 = vmatpush1.msra.mxu0 0.0
        %3128 = vmatprep.subr.mxu0 0.0
        %3129 = vmatpush1.msra.mxu0 0.0
        %3130 = vmatprep.subr.mxu0 0.0
        %3131 = vmatpush1.msra.mxu0 0.0
        %3132 = vmatprep.subr.mxu0 0.0
        %3133 = vmatpush1.msra.mxu0 0.0
        %3134 = vmatprep.subr.mxu0 0.0
        %3135 = vmatpush1.msra.mxu0 0.0
        %3136 = vmatprep.subr.mxu0 0.0
        %3137 = vmatpush1.msra.mxu0 0.0
        %3138 = vmatprep.subr.mxu0 0.0
        %3139 = vmatpush1.msra.mxu0 0.0
        %3140 = vmatprep.subr.mxu0 0.0
        %3141 = vmatpush1.msra.mxu0 0.0
        %3142 = vmatprep.subr.mxu0 0.0
        %3143 = vmatpush1.msra.mxu0 0.0
        %3144 = vmatprep.subr.mxu0 0.0
        %3145 = vmatpush1.msra.mxu0 0.0
        %3146 = vmatprep.subr.mxu0 0.0
        %3147 = vmatpush1.msra.mxu0 0.0
        %3148 = vmatprep.subr.mxu0 0.0
        %3149 = vmatpush1.msra.mxu0 0.0
        %3150 = vmatprep.subr.mxu0 0.0
        %3151 = vmatpush1.msra.mxu0 0.0
        %3152 = vmatprep.subr.mxu0 0.0
        %3153 = vmatpush1.msra.mxu0 0.0
        %3154 = vmatprep.subr.mxu0 0.0
        %3155 = vmatpush1.msra.mxu0 0.0
        %3156 = vmatprep.subr.mxu0 0.0
        %3157 = vmatpush1.msra.mxu0 0.0
        %3158 = vmatprep.subr.mxu0 0.0
        %3159 = vmatpush1.msra.mxu0 0.0
        %3160 = vmatprep.subr.mxu0 0.0
        %3161 = vmatpush1.msra.mxu0 0.0
        %3162 = vmatprep.mubr.f32.mxu0 0.0
        %3163 = vmatmul.mubr.f32.gmra.mrb[0].mxu0 %v3096
        %v3164 = vpop.f32.mrb[0].mxu0
        %v3165 = vadd.f32 0.0, %v3164
        %v3166 = vpop.f32.mrb[0].mxu0
        %3167 = vdwg.mxu0
        %v3168 = vadd.f32 %v3095, %v3165
        %v3169 = vxor.u32 %v3168, 2147483648
        %v3170 = vmul.f32 %v3169, 1.442695
        %v3171 = vpow.pop %v3170
        %v3172 = vadd.f32 %v3171, 1.0
        %v3173 = vrcp.pop %v3172
        %v3174 = vmul.f32 1.0, %v3173
        %v3175 = vtanh.pop %v3168
        %v3176 = vmul.f32 %v3174, %v3083
        %3178 = vrot.lane.b32.xlu0 %v3175, 64
        %v3179 = vpop.permute.xlu0 %3178
        %v3181 = vmul.f32 %v3174, %v3179
        %3183 = vrot.lane.b32.xlu0 %v3181, 32
        %v3184 = vpop.permute.xlu0 %3183
        %v3186 = vadd.f32 %v3176, %v3184
        %v3187 = vtanh.pop %v3186
        %3189 = vrot.lane.b32.xlu0 %v3187, 64
        %v3190 = vpop.permute.xlu0 %3189
        %v3192 = vmul.f32 %v3174, %v3190
        %3194 = vrot.lane.b32.xlu0 %v3192, 32
        %v3195 = vpop.permute.xlu0 %3194
        %3197 = vst.msk [vmem:[#allocation2 + $0x9] sm:$0x1] %vm524, %v3195
        %v3198 = vld [vmem:[#allocation3 + $0xa] sm:$0x1]
        %v3199 = vsel %vm421, %v3195, 0
        %3201 = vmatprep.subr.mxu0 0.0
        %3202 = vmatpush1.msra.mxu0 %v2166
        %3203 = vmatprep.subr.mxu0 0.0
        %3204 = vmatpush1.msra.mxu0 %v2167
        %3205 = vmatprep.subr.mxu0 0.0
        %3206 = vmatpush1.msra.mxu0 %v2168
        %3207 = vmatprep.subr.mxu0 0.0
        %3208 = vmatpush1.msra.mxu0 %v2169
        %3209 = vmatprep.subr.mxu0 0.0
        %3210 = vmatpush1.msra.mxu0 0.0
        %3211 = vmatprep.subr.mxu0 0.0
        %3212 = vmatpush1.msra.mxu0 0.0
        %3213 = vmatprep.subr.mxu0 0.0
        %3214 = vmatpush1.msra.mxu0 0.0
        %3215 = vmatprep.subr.mxu0 0.0
        %3216 = vmatpush1.msra.mxu0 0.0
        %3217 = vmatprep.subr.mxu0 0.0
        %3218 = vmatpush1.msra.mxu0 0.0
        %3219 = vmatprep.subr.mxu0 0.0
        %3220 = vmatpush1.msra.mxu0 0.0
        %3221 = vmatprep.subr.mxu0 0.0
        %3222 = vmatpush1.msra.mxu0 0.0
        %3223 = vmatprep.subr.mxu0 0.0
        %3224 = vmatpush1.msra.mxu0 0.0
        %3225 = vmatprep.subr.mxu0 0.0
        %3226 = vmatpush1.msra.mxu0 0.0
        %3227 = vmatprep.subr.mxu0 0.0
        %3228 = vmatpush1.msra.mxu0 0.0
        %3229 = vmatprep.subr.mxu0 0.0
        %3230 = vmatpush1.msra.mxu0 0.0
        %3231 = vmatprep.subr.mxu0 0.0
        %3232 = vmatpush1.msra.mxu0 0.0
        %3233 = vmatprep.subr.mxu0 0.0
        %3234 = vmatpush1.msra.mxu0 0.0
        %3235 = vmatprep.subr.mxu0 0.0
        %3236 = vmatpush1.msra.mxu0 0.0
        %3237 = vmatprep.subr.mxu0 0.0
        %3238 = vmatpush1.msra.mxu0 0.0
        %3239 = vmatprep.subr.mxu0 0.0
        %3240 = vmatpush1.msra.mxu0 0.0
        %3241 = vmatprep.subr.mxu0 0.0
        %3242 = vmatpush1.msra.mxu0 0.0
        %3243 = vmatprep.subr.mxu0 0.0
        %3244 = vmatpush1.msra.mxu0 0.0
        %3245 = vmatprep.subr.mxu0 0.0
        %3246 = vmatpush1.msra.mxu0 0.0
        %3247 = vmatprep.subr.mxu0 0.0
        %3248 = vmatpush1.msra.mxu0 0.0
        %3249 = vmatprep.subr.mxu0 0.0
        %3250 = vmatpush1.msra.mxu0 0.0
        %3251 = vmatprep.subr.mxu0 0.0
        %3252 = vmatpush1.msra.mxu0 0.0
        %3253 = vmatprep.subr.mxu0 0.0
        %3254 = vmatpush1.msra.mxu0 0.0
        %3255 = vmatprep.subr.mxu0 0.0
        %3256 = vmatpush1.msra.mxu0 0.0
        %3257 = vmatprep.subr.mxu0 0.0
        %3258 = vmatpush1.msra.mxu0 0.0
        %3259 = vmatprep.subr.mxu0 0.0
        %3260 = vmatpush1.msra.mxu0 0.0
        %3261 = vmatprep.subr.mxu0 0.0
        %3262 = vmatpush1.msra.mxu0 0.0
        %3263 = vmatprep.subr.mxu0 0.0
        %3264 = vmatpush1.msra.mxu0 0.0
        %3265 = vmatprep.mubr.f32.mxu0 0.0
        %3266 = vmatmul.mubr.f32.gmra.mrb[0].mxu0 %v3199
        %v3267 = vpop.f32.mrb[0].mxu0
        %v3268 = vadd.f32 0.0, %v3267
        %v3269 = vpop.f32.mrb[0].mxu0
        %3270 = vdwg.mxu0
        %v3271 = vadd.f32 %v3198, %v3268
        %v3272 = vxor.u32 %v3271, 2147483648
        %v3273 = vmul.f32 %v3272, 1.442695
        %v3274 = vpow.pop %v3273
        %v3275 = vadd.f32 %v3274, 1.0
        %v3276 = vrcp.pop %v3275
        %v3277 = vmul.f32 1.0, %v3276
        %v3278 = vtanh.pop %v3271
        %v3279 = vmul.f32 %v3277, %v3186
        %3281 = vrot.lane.b32.xlu0 %v3278, 64
        %v3282 = vpop.permute.xlu0 %3281
        %v3284 = vmul.f32 %v3277, %v3282
        %3286 = vrot.lane.b32.xlu0 %v3284, 32
        %v3287 = vpop.permute.xlu0 %3286
        %v3289 = vadd.f32 %v3279, %v3287
        %v3290 = vtanh.pop %v3289
        %3292 = vrot.lane.b32.xlu0 %v3290, 64
        %v3293 = vpop.permute.xlu0 %3292
        %v3295 = vmul.f32 %v3277, %v3293
        %3297 = vrot.lane.b32.xlu0 %v3295, 32
        %v3298 = vpop.permute.xlu0 %3297
        %3300 = vst.msk [vmem:[#allocation2 + $0xa] sm:$0x1] %vm524, %v3298
        %v3301 = vld [vmem:[#allocation3 + $0xb] sm:$0x1]
        %v3302 = vsel %vm421, %v3298, 0
        %3304 = vmatprep.subr.mxu0 0.0
        %3305 = vmatpush1.msra.mxu0 %v2166
        %3306 = vmatprep.subr.mxu0 0.0
        %3307 = vmatpush1.msra.mxu0 %v2167
        %3308 = vmatprep.subr.mxu0 0.0
        %3309 = vmatpush1.msra.mxu0 %v2168
        %3310 = vmatprep.subr.mxu0 0.0
        %3311 = vmatpush1.msra.mxu0 %v2169
        %3312 = vmatprep.subr.mxu0 0.0
        %3313 = vmatpush1.msra.mxu0 0.0
        %3314 = vmatprep.subr.mxu0 0.0
        %3315 = vmatpush1.msra.mxu0 0.0
        %3316 = vmatprep.subr.mxu0 0.0
        %3317 = vmatpush1.msra.mxu0 0.0
        %3318 = vmatprep.subr.mxu0 0.0
        %3319 = vmatpush1.msra.mxu0 0.0
        %3320 = vmatprep.subr.mxu0 0.0
        %3321 = vmatpush1.msra.mxu0 0.0
        %3322 = vmatprep.subr.mxu0 0.0
        %3323 = vmatpush1.msra.mxu0 0.0
        %3324 = vmatprep.subr.mxu0 0.0
        %3325 = vmatpush1.msra.mxu0 0.0
        %3326 = vmatprep.subr.mxu0 0.0
        %3327 = vmatpush1.msra.mxu0 0.0
        %3328 = vmatprep.subr.mxu0 0.0
        %3329 = vmatpush1.msra.mxu0 0.0
        %3330 = vmatprep.subr.mxu0 0.0
        %3331 = vmatpush1.msra.mxu0 0.0
        %3332 = vmatprep.subr.mxu0 0.0
        %3333 = vmatpush1.msra.mxu0 0.0
        %3334 = vmatprep.subr.mxu0 0.0
        %3335 = vmatpush1.msra.mxu0 0.0
        %3336 = vmatprep.subr.mxu0 0.0
        %3337 = vmatpush1.msra.mxu0 0.0
        %3338 = vmatprep.subr.mxu0 0.0
        %3339 = vmatpush1.msra.mxu0 0.0
        %3340 = vmatprep.subr.mxu0 0.0
        %3341 = vmatpush1.msra.mxu0 0.0
        %3342 = vmatprep.subr.mxu0 0.0
        %3343 = vmatpush1.msra.mxu0 0.0
        %3344 = vmatprep.subr.mxu0 0.0
        %3345 = vmatpush1.msra.mxu0 0.0
        %3346 = vmatprep.subr.mxu0 0.0
        %3347 = vmatpush1.msra.mxu0 0.0
        %3348 = vmatprep.subr.mxu0 0.0
        %3349 = vmatpush1.msra.mxu0 0.0
        %3350 = vmatprep.subr.mxu0 0.0
        %3351 = vmatpush1.msra.mxu0 0.0
        %3352 = vmatprep.subr.mxu0 0.0
        %3353 = vmatpush1.msra.mxu0 0.0
        %3354 = vmatprep.subr.mxu0 0.0
        %3355 = vmatpush1.msra.mxu0 0.0
        %3356 = vmatprep.subr.mxu0 0.0
        %3357 = vmatpush1.msra.mxu0 0.0
        %3358 = vmatprep.subr.mxu0 0.0
        %3359 = vmatpush1.msra.mxu0 0.0
        %3360 = vmatprep.subr.mxu0 0.0
        %3361 = vmatpush1.msra.mxu0 0.0
        %3362 = vmatprep.subr.mxu0 0.0
        %3363 = vmatpush1.msra.mxu0 0.0
        %3364 = vmatprep.subr.mxu0 0.0
        %3365 = vmatpush1.msra.mxu0 0.0
        %3366 = vmatprep.subr.mxu0 0.0
        %3367 = vmatpush1.msra.mxu0 0.0
        %3368 = vmatprep.mubr.f32.mxu0 0.0
        %3369 = vmatmul.mubr.f32.gmra.mrb[0].mxu0 %v3302
        %v3370 = vpop.f32.mrb[0].mxu0
        %v3371 = vadd.f32 0.0, %v3370
        %v3372 = vpop.f32.mrb[0].mxu0
        %3373 = vdwg.mxu0
        %v3374 = vadd.f32 %v3301, %v3371
        %v3375 = vxor.u32 %v3374, 2147483648
        %v3376 = vmul.f32 %v3375, 1.442695
        %v3377 = vpow.pop %v3376
        %v3378 = vadd.f32 %v3377, 1.0
        %v3379 = vrcp.pop %v3378
        %v3380 = vmul.f32 1.0, %v3379
        %v3381 = vtanh.pop %v3374
        %v3382 = vmul.f32 %v3380, %v3289
        %3384 = vrot.lane.b32.xlu0 %v3381, 64
        %v3385 = vpop.permute.xlu0 %3384
        %v3387 = vmul.f32 %v3380, %v3385
        %3389 = vrot.lane.b32.xlu0 %v3387, 32
        %v3390 = vpop.permute.xlu0 %3389
        %v3392 = vadd.f32 %v3382, %v3390
        %v3393 = vtanh.pop %v3392
        %3395 = vrot.lane.b32.xlu0 %v3393, 64
        %v3396 = vpop.permute.xlu0 %3395
        %v3398 = vmul.f32 %v3380, %v3396
        %3400 = vrot.lane.b32.xlu0 %v3398, 32
        %v3401 = vpop.permute.xlu0 %3400
        %3403 = vst.msk [vmem:[#allocation2 + $0xb] sm:$0x1] %vm524, %v3401
        %v3404 = vld [vmem:[#allocation3 + $0xc] sm:$0x1]
        %v3405 = vsel %vm421, %v3401, 0
        %3407 = vmatprep.subr.mxu0 0.0
        %3408 = vmatpush1.msra.mxu0 %v2166
        %3409 = vmatprep.subr.mxu0 0.0
        %3410 = vmatpush1.msra.mxu0 %v2167
        %3411 = vmatprep.subr.mxu0 0.0
        %3412 = vmatpush1.msra.mxu0 %v2168
        %3413 = vmatprep.subr.mxu0 0.0
        %3414 = vmatpush1.msra.mxu0 %v2169
        %3415 = vmatprep.subr.mxu0 0.0
        %3416 = vmatpush1.msra.mxu0 0.0
        %3417 = vmatprep.subr.mxu0 0.0
        %3418 = vmatpush1.msra.mxu0 0.0
        %3419 = vmatprep.subr.mxu0 0.0
        %3420 = vmatpush1.msra.mxu0 0.0
        %3421 = vmatprep.subr.mxu0 0.0
        %3422 = vmatpush1.msra.mxu0 0.0
        %3423 = vmatprep.subr.mxu0 0.0
        %3424 = vmatpush1.msra.mxu0 0.0
        %3425 = vmatprep.subr.mxu0 0.0
        %3426 = vmatpush1.msra.mxu0 0.0
        %3427 = vmatprep.subr.mxu0 0.0
        %3428 = vmatpush1.msra.mxu0 0.0
        %3429 = vmatprep.subr.mxu0 0.0
        %3430 = vmatpush1.msra.mxu0 0.0
        %3431 = vmatprep.subr.mxu0 0.0
        %3432 = vmatpush1.msra.mxu0 0.0
        %3433 = vmatprep.subr.mxu0 0.0
        %3434 = vmatpush1.msra.mxu0 0.0
        %3435 = vmatprep.subr.mxu0 0.0
        %3436 = vmatpush1.msra.mxu0 0.0
        %3437 = vmatprep.subr.mxu0 0.0
        %3438 = vmatpush1.msra.mxu0 0.0
        %3439 = vmatprep.subr.mxu0 0.0
        %3440 = vmatpush1.msra.mxu0 0.0
        %3441 = vmatprep.subr.mxu0 0.0
        %3442 = vmatpush1.msra.mxu0 0.0
        %3443 = vmatprep.subr.mxu0 0.0
        %3444 = vmatpush1.msra.mxu0 0.0
        %3445 = vmatprep.subr.mxu0 0.0
        %3446 = vmatpush1.msra.mxu0 0.0
        %3447 = vmatprep.subr.mxu0 0.0
        %3448 = vmatpush1.msra.mxu0 0.0
        %3449 = vmatprep.subr.mxu0 0.0
        %3450 = vmatpush1.msra.mxu0 0.0
        %3451 = vmatprep.subr.mxu0 0.0
        %3452 = vmatpush1.msra.mxu0 0.0
        %3453 = vmatprep.subr.mxu0 0.0
        %3454 = vmatpush1.msra.mxu0 0.0
        %3455 = vmatprep.subr.mxu0 0.0
        %3456 = vmatpush1.msra.mxu0 0.0
        %3457 = vmatprep.subr.mxu0 0.0
        %3458 = vmatpush1.msra.mxu0 0.0
        %3459 = vmatprep.subr.mxu0 0.0
        %3460 = vmatpush1.msra.mxu0 0.0
        %3461 = vmatprep.subr.mxu0 0.0
        %3462 = vmatpush1.msra.mxu0 0.0
        %3463 = vmatprep.subr.mxu0 0.0
        %3464 = vmatpush1.msra.mxu0 0.0
        %3465 = vmatprep.subr.mxu0 0.0
        %3466 = vmatpush1.msra.mxu0 0.0
        %3467 = vmatprep.subr.mxu0 0.0
        %3468 = vmatpush1.msra.mxu0 0.0
        %3469 = vmatprep.subr.mxu0 0.0
        %3470 = vmatpush1.msra.mxu0 0.0
        %3471 = vmatprep.mubr.f32.mxu0 0.0
        %3472 = vmatmul.mubr.f32.gmra.mrb[0].mxu0 %v3405
        %v3473 = vpop.f32.mrb[0].mxu0
        %v3474 = vadd.f32 0.0, %v3473
        %v3475 = vpop.f32.mrb[0].mxu0
        %3476 = vdwg.mxu0
        %v3477 = vadd.f32 %v3404, %v3474
        %v3478 = vxor.u32 %v3477, 2147483648
        %v3479 = vmul.f32 %v3478, 1.442695
        %v3480 = vpow.pop %v3479
        %v3481 = vadd.f32 %v3480, 1.0
        %v3482 = vrcp.pop %v3481
        %v3483 = vmul.f32 1.0, %v3482
        %v3484 = vtanh.pop %v3477
        %v3485 = vmul.f32 %v3483, %v3392
        %3487 = vrot.lane.b32.xlu0 %v3484, 64
        %v3488 = vpop.permute.xlu0 %3487
        %v3490 = vmul.f32 %v3483, %v3488
        %3492 = vrot.lane.b32.xlu0 %v3490, 32
        %v3493 = vpop.permute.xlu0 %3492
        %v3495 = vadd.f32 %v3485, %v3493
        %v3496 = vtanh.pop %v3495
        %3498 = vrot.lane.b32.xlu0 %v3496, 64
        %v3499 = vpop.permute.xlu0 %3498
        %v3501 = vmul.f32 %v3483, %v3499
        %3503 = vrot.lane.b32.xlu0 %v3501, 32
        %v3504 = vpop.permute.xlu0 %3503
        %3506 = vst.msk [vmem:[#allocation2 + $0xc] sm:$0x1] %vm524, %v3504
        %v3507 = vld [vmem:[#allocation3 + $0xd] sm:$0x1]
        %v3508 = vsel %vm421, %v3504, 0
        %3510 = vmatprep.subr.mxu0 0.0
        %3511 = vmatpush1.msra.mxu0 %v2166
        %3512 = vmatprep.subr.mxu0 0.0
        %3513 = vmatpush1.msra.mxu0 %v2167
        %3514 = vmatprep.subr.mxu0 0.0
        %3515 = vmatpush1.msra.mxu0 %v2168
        %3516 = vmatprep.subr.mxu0 0.0
        %3517 = vmatpush1.msra.mxu0 %v2169
        %3518 = vmatprep.subr.mxu0 0.0
        %3519 = vmatpush1.msra.mxu0 0.0
        %3520 = vmatprep.subr.mxu0 0.0
        %3521 = vmatpush1.msra.mxu0 0.0
        %3522 = vmatprep.subr.mxu0 0.0
        %3523 = vmatpush1.msra.mxu0 0.0
        %3524 = vmatprep.subr.mxu0 0.0
        %3525 = vmatpush1.msra.mxu0 0.0
        %3526 = vmatprep.subr.mxu0 0.0
        %3527 = vmatpush1.msra.mxu0 0.0
        %3528 = vmatprep.subr.mxu0 0.0
        %3529 = vmatpush1.msra.mxu0 0.0
        %3530 = vmatprep.subr.mxu0 0.0
        %3531 = vmatpush1.msra.mxu0 0.0
        %3532 = vmatprep.subr.mxu0 0.0
        %3533 = vmatpush1.msra.mxu0 0.0
        %3534 = vmatprep.subr.mxu0 0.0
        %3535 = vmatpush1.msra.mxu0 0.0
        %3536 = vmatprep.subr.mxu0 0.0
        %3537 = vmatpush1.msra.mxu0 0.0
        %3538 = vmatprep.subr.mxu0 0.0
        %3539 = vmatpush1.msra.mxu0 0.0
        %3540 = vmatprep.subr.mxu0 0.0
        %3541 = vmatpush1.msra.mxu0 0.0
        %3542 = vmatprep.subr.mxu0 0.0
        %3543 = vmatpush1.msra.mxu0 0.0
        %3544 = vmatprep.subr.mxu0 0.0
        %3545 = vmatpush1.msra.mxu0 0.0
        %3546 = vmatprep.subr.mxu0 0.0
        %3547 = vmatpush1.msra.mxu0 0.0
        %3548 = vmatprep.subr.mxu0 0.0
        %3549 = vmatpush1.msra.mxu0 0.0
        %3550 = vmatprep.subr.mxu0 0.0
        %3551 = vmatpush1.msra.mxu0 0.0
        %3552 = vmatprep.subr.mxu0 0.0
        %3553 = vmatpush1.msra.mxu0 0.0
        %3554 = vmatprep.subr.mxu0 0.0
        %3555 = vmatpush1.msra.mxu0 0.0
        %3556 = vmatprep.subr.mxu0 0.0
        %3557 = vmatpush1.msra.mxu0 0.0
        %3558 = vmatprep.subr.mxu0 0.0
        %3559 = vmatpush1.msra.mxu0 0.0
        %3560 = vmatprep.subr.mxu0 0.0
        %3561 = vmatpush1.msra.mxu0 0.0
        %3562 = vmatprep.subr.mxu0 0.0
        %3563 = vmatpush1.msra.mxu0 0.0
        %3564 = vmatprep.subr.mxu0 0.0
        %3565 = vmatpush1.msra.mxu0 0.0
        %3566 = vmatprep.subr.mxu0 0.0
        %3567 = vmatpush1.msra.mxu0 0.0
        %3568 = vmatprep.subr.mxu0 0.0
        %3569 = vmatpush1.msra.mxu0 0.0
        %3570 = vmatprep.subr.mxu0 0.0
        %3571 = vmatpush1.msra.mxu0 0.0
        %3572 = vmatprep.subr.mxu0 0.0
        %3573 = vmatpush1.msra.mxu0 0.0
        %3574 = vmatprep.mubr.f32.mxu0 0.0
        %3575 = vmatmul.mubr.f32.gmra.mrb[0].mxu0 %v3508
        %v3576 = vpop.f32.mrb[0].mxu0
        %v3577 = vadd.f32 0.0, %v3576
        %v3578 = vpop.f32.mrb[0].mxu0
        %3579 = vdwg.mxu0
        %v3580 = vadd.f32 %v3507, %v3577
        %v3581 = vxor.u32 %v3580, 2147483648
        %v3582 = vmul.f32 %v3581, 1.442695
        %v3583 = vpow.pop %v3582
        %v3584 = vadd.f32 %v3583, 1.0
        %v3585 = vrcp.pop %v3584
        %v3586 = vmul.f32 1.0, %v3585
        %v3587 = vtanh.pop %v3580
        %v3588 = vmul.f32 %v3586, %v3495
        %3590 = vrot.lane.b32.xlu0 %v3587, 64
        %v3591 = vpop.permute.xlu0 %3590
        %v3593 = vmul.f32 %v3586, %v3591
        %3595 = vrot.lane.b32.xlu0 %v3593, 32
        %v3596 = vpop.permute.xlu0 %3595
        %v3598 = vadd.f32 %v3588, %v3596
        %v3599 = vtanh.pop %v3598
        %3601 = vrot.lane.b32.xlu0 %v3599, 64
        %v3602 = vpop.permute.xlu0 %3601
        %v3604 = vmul.f32 %v3586, %v3602
        %3606 = vrot.lane.b32.xlu0 %v3604, 32
        %v3607 = vpop.permute.xlu0 %3606
        %3609 = vst.msk [vmem:[#allocation2 + $0xd] sm:$0x1] %vm524, %v3607
        %v3610 = vld [vmem:[#allocation3 + $0xe] sm:$0x1]
        %v3611 = vsel %vm421, %v3607, 0
        %3613 = vmatprep.subr.mxu0 0.0
        %3614 = vmatpush1.msra.mxu0 %v2166
        %3615 = vmatprep.subr.mxu0 0.0
        %3616 = vmatpush1.msra.mxu0 %v2167
        %3617 = vmatprep.subr.mxu0 0.0
        %3618 = vmatpush1.msra.mxu0 %v2168
        %3619 = vmatprep.subr.mxu0 0.0
        %3620 = vmatpush1.msra.mxu0 %v2169
        %3621 = vmatprep.subr.mxu0 0.0
        %3622 = vmatpush1.msra.mxu0 0.0
        %3623 = vmatprep.subr.mxu0 0.0
        %3624 = vmatpush1.msra.mxu0 0.0
        %3625 = vmatprep.subr.mxu0 0.0
        %3626 = vmatpush1.msra.mxu0 0.0
        %3627 = vmatprep.subr.mxu0 0.0
        %3628 = vmatpush1.msra.mxu0 0.0
        %3629 = vmatprep.subr.mxu0 0.0
        %3630 = vmatpush1.msra.mxu0 0.0
        %3631 = vmatprep.subr.mxu0 0.0
        %3632 = vmatpush1.msra.mxu0 0.0
        %3633 = vmatprep.subr.mxu0 0.0
        %3634 = vmatpush1.msra.mxu0 0.0
        %3635 = vmatprep.subr.mxu0 0.0
        %3636 = vmatpush1.msra.mxu0 0.0
        %3637 = vmatprep.subr.mxu0 0.0
        %3638 = vmatpush1.msra.mxu0 0.0
        %3639 = vmatprep.subr.mxu0 0.0
        %3640 = vmatpush1.msra.mxu0 0.0
        %3641 = vmatprep.subr.mxu0 0.0
        %3642 = vmatpush1.msra.mxu0 0.0
        %3643 = vmatprep.subr.mxu0 0.0
        %3644 = vmatpush1.msra.mxu0 0.0
        %3645 = vmatprep.subr.mxu0 0.0
        %3646 = vmatpush1.msra.mxu0 0.0
        %3647 = vmatprep.subr.mxu0 0.0
        %3648 = vmatpush1.msra.mxu0 0.0
        %3649 = vmatprep.subr.mxu0 0.0
        %3650 = vmatpush1.msra.mxu0 0.0
        %3651 = vmatprep.subr.mxu0 0.0
        %3652 = vmatpush1.msra.mxu0 0.0
        %3653 = vmatprep.subr.mxu0 0.0
        %3654 = vmatpush1.msra.mxu0 0.0
        %3655 = vmatprep.subr.mxu0 0.0
        %3656 = vmatpush1.msra.mxu0 0.0
        %3657 = vmatprep.subr.mxu0 0.0
        %3658 = vmatpush1.msra.mxu0 0.0
        %3659 = vmatprep.subr.mxu0 0.0
        %3660 = vmatpush1.msra.mxu0 0.0
        %3661 = vmatprep.subr.mxu0 0.0
        %3662 = vmatpush1.msra.mxu0 0.0
        %3663 = vmatprep.subr.mxu0 0.0
        %3664 = vmatpush1.msra.mxu0 0.0
        %3665 = vmatprep.subr.mxu0 0.0
        %3666 = vmatpush1.msra.mxu0 0.0
        %3667 = vmatprep.subr.mxu0 0.0
        %3668 = vmatpush1.msra.mxu0 0.0
        %3669 = vmatprep.subr.mxu0 0.0
        %3670 = vmatpush1.msra.mxu0 0.0
        %3671 = vmatprep.subr.mxu0 0.0
        %3672 = vmatpush1.msra.mxu0 0.0
        %3673 = vmatprep.subr.mxu0 0.0
        %3674 = vmatpush1.msra.mxu0 0.0
        %3675 = vmatprep.subr.mxu0 0.0
        %3676 = vmatpush1.msra.mxu0 0.0
        %3677 = vmatprep.mubr.f32.mxu0 0.0
        %3678 = vmatmul.mubr.f32.gmra.mrb[0].mxu0 %v3611
        %v3679 = vpop.f32.mrb[0].mxu0
        %v3680 = vadd.f32 0.0, %v3679
        %v3681 = vpop.f32.mrb[0].mxu0
        %3682 = vdwg.mxu0
        %v3683 = vadd.f32 %v3610, %v3680
        %v3684 = vxor.u32 %v3683, 2147483648
        %v3685 = vmul.f32 %v3684, 1.442695
        %v3686 = vpow.pop %v3685
        %v3687 = vadd.f32 %v3686, 1.0
        %v3688 = vrcp.pop %v3687
        %v3689 = vmul.f32 1.0, %v3688
        %v3690 = vtanh.pop %v3683
        %v3691 = vmul.f32 %v3689, %v3598
        %3693 = vrot.lane.b32.xlu0 %v3690, 64
        %v3694 = vpop.permute.xlu0 %3693
        %v3696 = vmul.f32 %v3689, %v3694
        %3698 = vrot.lane.b32.xlu0 %v3696, 32
        %v3699 = vpop.permute.xlu0 %3698
        %v3701 = vadd.f32 %v3691, %v3699
        %v3702 = vtanh.pop %v3701
        %3704 = vrot.lane.b32.xlu0 %v3702, 64
        %v3705 = vpop.permute.xlu0 %3704
        %v3707 = vmul.f32 %v3689, %v3705
        %3709 = vrot.lane.b32.xlu0 %v3707, 32
        %v3710 = vpop.permute.xlu0 %3709
        %3712 = vst.msk [vmem:[#allocation2 + $0xe] sm:$0x1] %vm524, %v3710
        %v3713 = vld [vmem:[#allocation3 + $0xf] sm:$0x1]
        %v3714 = vsel %vm421, %v3710, 0
        %3716 = vmatprep.subr.mxu0 0.0
        %3717 = vmatpush1.msra.mxu0 %v2166
        %3718 = vmatprep.subr.mxu0 0.0
        %3719 = vmatpush1.msra.mxu0 %v2167
        %3720 = vmatprep.subr.mxu0 0.0
        %3721 = vmatpush1.msra.mxu0 %v2168
        %3722 = vmatprep.subr.mxu0 0.0
        %3723 = vmatpush1.msra.mxu0 %v2169
        %3724 = vmatprep.subr.mxu0 0.0
        %3725 = vmatpush1.msra.mxu0 0.0
        %3726 = vmatprep.subr.mxu0 0.0
        %3727 = vmatpush1.msra.mxu0 0.0
        %3728 = vmatprep.subr.mxu0 0.0
        %3729 = vmatpush1.msra.mxu0 0.0
        %3730 = vmatprep.subr.mxu0 0.0
        %3731 = vmatpush1.msra.mxu0 0.0
        %3732 = vmatprep.subr.mxu0 0.0
        %3733 = vmatpush1.msra.mxu0 0.0
        %3734 = vmatprep.subr.mxu0 0.0
        %3735 = vmatpush1.msra.mxu0 0.0
        %3736 = vmatprep.subr.mxu0 0.0
        %3737 = vmatpush1.msra.mxu0 0.0
        %3738 = vmatprep.subr.mxu0 0.0
        %3739 = vmatpush1.msra.mxu0 0.0
        %3740 = vmatprep.subr.mxu0 0.0
        %3741 = vmatpush1.msra.mxu0 0.0
        %3742 = vmatprep.subr.mxu0 0.0
        %3743 = vmatpush1.msra.mxu0 0.0
        %3744 = vmatprep.subr.mxu0 0.0
        %3745 = vmatpush1.msra.mxu0 0.0
        %3746 = vmatprep.subr.mxu0 0.0
        %3747 = vmatpush1.msra.mxu0 0.0
        %3748 = vmatprep.subr.mxu0 0.0
        %3749 = vmatpush1.msra.mxu0 0.0
        %3750 = vmatprep.subr.mxu0 0.0
        %3751 = vmatpush1.msra.mxu0 0.0
        %3752 = vmatprep.subr.mxu0 0.0
        %3753 = vmatpush1.msra.mxu0 0.0
        %3754 = vmatprep.subr.mxu0 0.0
        %3755 = vmatpush1.msra.mxu0 0.0
        %3756 = vmatprep.subr.mxu0 0.0
        %3757 = vmatpush1.msra.mxu0 0.0
        %3758 = vmatprep.subr.mxu0 0.0
        %3759 = vmatpush1.msra.mxu0 0.0
        %3760 = vmatprep.subr.mxu0 0.0
        %3761 = vmatpush1.msra.mxu0 0.0
        %3762 = vmatprep.subr.mxu0 0.0
        %3763 = vmatpush1.msra.mxu0 0.0
        %3764 = vmatprep.subr.mxu0 0.0
        %3765 = vmatpush1.msra.mxu0 0.0
        %3766 = vmatprep.subr.mxu0 0.0
        %3767 = vmatpush1.msra.mxu0 0.0
        %3768 = vmatprep.subr.mxu0 0.0
        %3769 = vmatpush1.msra.mxu0 0.0
        %3770 = vmatprep.subr.mxu0 0.0
        %3771 = vmatpush1.msra.mxu0 0.0
        %3772 = vmatprep.subr.mxu0 0.0
        %3773 = vmatpush1.msra.mxu0 0.0
        %3774 = vmatprep.subr.mxu0 0.0
        %3775 = vmatpush1.msra.mxu0 0.0
        %3776 = vmatprep.subr.mxu0 0.0
        %3777 = vmatpush1.msra.mxu0 0.0
        %3778 = vmatprep.subr.mxu0 0.0
        %3779 = vmatpush1.msra.mxu0 0.0
        %3780 = vmatprep.mubr.f32.mxu0 0.0
        %3781 = vmatmul.mubr.f32.gmra.mrb[0].mxu0 %v3714
        %v3782 = vpop.f32.mrb[0].mxu0
        %v3783 = vadd.f32 0.0, %v3782
        %v3784 = vpop.f32.mrb[0].mxu0
        %3785 = vdwg.mxu0
        %v3786 = vadd.f32 %v3713, %v3783
        %v3787 = vxor.u32 %v3786, 2147483648
        %v3788 = vmul.f32 %v3787, 1.442695
        %v3789 = vpow.pop %v3788
        %v3790 = vadd.f32 %v3789, 1.0
        %v3791 = vrcp.pop %v3790
        %v3792 = vmul.f32 1.0, %v3791
        %v3793 = vtanh.pop %v3786
        %v3794 = vmul.f32 %v3792, %v3701
        %3796 = vrot.lane.b32.xlu0 %v3793, 64
        %v3797 = vpop.permute.xlu0 %3796
        %v3799 = vmul.f32 %v3792, %v3797
        %3801 = vrot.lane.b32.xlu0 %v3799, 32
        %v3802 = vpop.permute.xlu0 %3801
        %v3804 = vadd.f32 %v3794, %v3802
        %v3805 = vtanh.pop %v3804
        %3807 = vrot.lane.b32.xlu0 %v3805, 64
        %v3808 = vpop.permute.xlu0 %3807
        %v3810 = vmul.f32 %v3792, %v3808
        %3812 = vrot.lane.b32.xlu0 %v3810, 32
        %v3813 = vpop.permute.xlu0 %3812
        %3815 = vst.msk [vmem:[#allocation2 + $0xf] sm:$0x1] %vm524, %v3813
        %v3816 = vld [vmem:[#allocation2] sm:$0xff]
        %v3817 = vld [vmem:[#allocation2 + $0x8] sm:$0xff]
        %v3818 = vld [vmem:[%s5] sm:$0xff]
        %v3819 = vld [vmem:[%s5 + $0x8] sm:$0xff]
        %v3820 = vld [vmem:[%s5 + $0x10] sm:$0xff]
        %v3821 = vld [vmem:[%s5 + $0x18] sm:$0xff]
        %v3822 = vld [vmem:[%s6] sm:$0x1]
        %v3824 = vlaneseq
        %v3825 = vshrl.u32 %v3824, 7
        %v3826 = vsub.s32 0, %v3825
        %v3827 = vrot.slane %v3822, %v3826
        %v3830 = vsel %vm421, %v3816, 0
        %v3833 = vsel %vm421, %v3817, 0
        %3835 = vmatprep.subr.mxu0 0.0
        %3836 = vmatpush1.msra.mxu0 %v3818
        %3837 = vmatprep.subr.mxu0 0.0
        %3838 = vmatpush1.msra.mxu0 %v3819
        %3839 = vmatprep.subr.mxu0 0.0
        %3840 = vmatpush1.msra.mxu0 %v3820
        %3841 = vmatprep.subr.mxu0 0.0
        %3842 = vmatpush1.msra.mxu0 %v3821
        %3843 = vmatprep.subr.mxu0 0.0
        %3844 = vmatpush1.msra.mxu0 0.0
        %3845 = vmatprep.subr.mxu0 0.0
        %3846 = vmatpush1.msra.mxu0 0.0
        %3847 = vmatprep.subr.mxu0 0.0
        %3848 = vmatpush1.msra.mxu0 0.0
        %3849 = vmatprep.subr.mxu0 0.0
        %3850 = vmatpush1.msra.mxu0 0.0
        %3851 = vmatprep.subr.mxu0 0.0
        %3852 = vmatpush1.msra.mxu0 0.0
        %3853 = vmatprep.subr.mxu0 0.0
        %3854 = vmatpush1.msra.mxu0 0.0
        %3855 = vmatprep.subr.mxu0 0.0
        %3856 = vmatpush1.msra.mxu0 0.0
        %3857 = vmatprep.subr.mxu0 0.0
        %3858 = vmatpush1.msra.mxu0 0.0
        %3859 = vmatprep.subr.mxu0 0.0
        %3860 = vmatpush1.msra.mxu0 0.0
        %3861 = vmatprep.subr.mxu0 0.0
        %3862 = vmatpush1.msra.mxu0 0.0
        %3863 = vmatprep.subr.mxu0 0.0
        %3864 = vmatpush1.msra.mxu0 0.0
        %3865 = vmatprep.subr.mxu0 0.0
        %3866 = vmatpush1.msra.mxu0 0.0
        %3867 = vmatprep.subr.mxu0 0.0
        %3868 = vmatpush1.msra.mxu0 0.0
        %3869 = vmatprep.subr.mxu0 0.0
        %3870 = vmatpush1.msra.mxu0 0.0
        %3871 = vmatprep.subr.mxu0 0.0
        %3872 = vmatpush1.msra.mxu0 0.0
        %3873 = vmatprep.subr.mxu0 0.0
        %3874 = vmatpush1.msra.mxu0 0.0
        %3875 = vmatprep.subr.mxu0 0.0
        %3876 = vmatpush1.msra.mxu0 0.0
        %3877 = vmatprep.subr.mxu0 0.0
        %3878 = vmatpush1.msra.mxu0 0.0
        %3879 = vmatprep.subr.mxu0 0.0
        %3880 = vmatpush1.msra.mxu0 0.0
        %3881 = vmatprep.subr.mxu0 0.0
        %3882 = vmatpush1.msra.mxu0 0.0
        %3883 = vmatprep.subr.mxu0 0.0
        %3884 = vmatpush1.msra.mxu0 0.0
        %3885 = vmatprep.subr.mxu0 0.0
        %3886 = vmatpush1.msra.mxu0 0.0
        %3887 = vmatprep.subr.mxu0 0.0
        %3888 = vmatpush1.msra.mxu0 0.0
        %3889 = vmatprep.subr.mxu0 0.0
        %3890 = vmatpush1.msra.mxu0 0.0
        %3891 = vmatprep.subr.mxu0 0.0
        %3892 = vmatpush1.msra.mxu0 0.0
        %3893 = vmatprep.subr.mxu0 0.0
        %3894 = vmatpush1.msra.mxu0 0.0
        %3895 = vmatprep.subr.mxu0 0.0
        %3896 = vmatpush1.msra.mxu0 0.0
        %3897 = vmatprep.subr.mxu0 0.0
        %3898 = vmatpush1.msra.mxu0 0.0
        %3899 = vmatprep.mubr.f32.mxu0 0.0
        %3900 = vmatmul.mubr.f32.gmra.mrb[0].mxu0 %v3830
        %v3901 = vpop.f32.mrb[0].mxu0
        %v3902 = vadd.f32 %v3827, %v3901
        %v3903 = vpop.f32.mrb[0].mxu0
        %3904 = vmatprep.mubr.f32.mxu0 0.0
        %3905 = vmatmul.mubr.f32.gmra.mrb[0].mxu0 %v3833
        %v3906 = vpop.f32.mrb[0].mxu0
        %v3907 = vadd.f32 %v3827, %v3906
        %v3908 = vpop.f32.mrb[0].mxu0
        %3909 = vdwg.mxu0
        %vm3910 = vcmask 64512
        %3911 = vst.msk [vmem:[%s322] sm:$0xff] %vm3910, %v3902
        %3912 = vst.msk [vmem:[%s322 + $0x8] sm:$0xff] %vm3910, %v3907
        %p3913 = scmp.lt.s32.totalorder %s20, 1
        %s3914 = scalar_select %p3913, %s20, 1
        %s3915 = smul.addr %s3914, 2
        %s3916 = smul.addr %s3915, 8
        %s3917 = scalar_lea.vmem %s7, %s3916
        // Predicated region
        $region61: #{tpu_custom_call.1} parent=47 // pred_check
          %p3918 = pneg %p190
        $region62: #{tpu_custom_call.1} parent=47 // pred_check_branch
          %3920 = sbr.rel (%p3918) target = $region64
        $region63: #{tpu_custom_call.1} parent=47 // pred_region
          _
        $region64: #{tpu_custom_call.1} parent=47 // pred_fallthru
          _
      $region48: #{tpu_custom_call.1} parent=5 // pred_fallthru
        _
      %p3921 = scmp.le.s32.totalorder 2, %s15
      // Predicated region
      $region65: #{tpu_custom_call.1} parent=5 // pred_check
        %p3922 = pneg %p3921
      $region66: #{tpu_custom_call.1} parent=5 // pred_check_branch
        %3924 = sbr.rel (%p3922) target = $region68
      $region67: #{tpu_custom_call.1} parent=5 // pred_region
        %s3925 = ssub.s32 %s15, 2
        // Predicated region
        $region69: #{tpu_custom_call.1} parent=67 // pred_check
          %p3926 = pneg %p196
        $region70: #{tpu_custom_call.1} parent=67 // pred_check_branch
          %3928 = sbr.rel (%p3926) target = $region72
        $region71: #{tpu_custom_call.1} parent=67 // pred_region
          %p3929 = scmp.lt.s32.totalorder %s21, 1
          %s3930 = scalar_select %p3929, %s21, 1
          %s3931 = smul.addr %s3930, 2
          %s3932 = smul.addr %s3931, 8
          %s3933 = scalar_lea.vmem %s7, %s3932
        $region72: #{tpu_custom_call.1} parent=67 // pred_fallthru
          _
      $region68: #{tpu_custom_call.1} parent=5 // pred_fallthru
        _
    $region6: #{tpu_custom_call.1} parent=1 // loop_footer
      %s19 = sadd.s32 1, %s15
    $region7: #{tpu_custom_call.1} parent=1 // loop_footer_branch
      %14 = sbr.rel target = $region3
    $region8: #{tpu_custom_call.1} parent=1 // loop_exit
      _
    %3934 = vsyncpa [#allocation5], 1
    %s3935 = scalar_lea.sflag [#allocation5], 1
    %3936 = vsyncpa %s3935, 1
    %3937 = vsyncpa [#allocation7], 1

</llo_original>
